<compile_context>
chip_gen: v7x
topology: tpu7x:2x2x1
jax: 0.10.0
libtpu: 0.0.40
codegen_flags: <defaults>
</compile_context>

<pallas_src>
import functools

import jax
import jax.numpy as jnp
from jax import lax
from jax.experimental import pallas as pl
from jax.experimental.pallas import tpu as pltpu

LIN1_K = 3136            # 64 * 7 * 7
LIN1_K_PAD = 3584        # 2 K-tiles of 1792 (lane aligned, zero padded)
LIN2_N_PAD = 128         # lane-dense final output (real N = 4)
CONV3_K = 576            # 64 * 3 * 3
CONV3_K_PAD = 640        # 5 * 128 lane-aligned conv3 patch width
VMEM_LIMIT = 32 * 1024 * 1024   # fits inside v7x's 64 MiB physical VMEM


# ----------------------------------------------------------------------------
# Kernel 1: out = act(x @ w + b)  -- used for the three conv (im2col) matmuls.
# bf16 operands, f32 accumulate, f32 epilogue, bf16 store.
# ----------------------------------------------------------------------------
def _mm_bias_act_kernel(x_ref, w_ref, b_ref, o_ref, *, act):
    acc = jnp.dot(x_ref[...], w_ref[...], preferred_element_type=jnp.float32)
    acc = acc + b_ref[...]                          # (tm, N) + (1, N)
    if act == "relu":
        acc = jnp.maximum(acc, 0.0)
    elif act == "leaky_relu":
        acc = jnp.where(acc >= 0.0, acc, 0.01 * acc)   # PyTorch default slope
    o_ref[...] = acc.astype(o_ref.dtype)


def matmul_bias_act(x, w, b, *, act="none", out_dtype=jnp.float32, tile_m=256):
    """(M,K)@(K,N)+b with activation. M tiled (parallel, >=2 blocks even at
    small batch so v7x's second TC gets work); K,N stay whole (conv K<=640,
    N<=64 -> tiny weights resident in VMEM)."""
    M, K = x.shape
    K2, N = w.shape
    assert K == K2, (K, K2)
    if M <= tile_m:
        tm, grid = M, (1,)                 # full-extent block (exempt from 8x128 rule)
    else:
        tm, grid = tile_m, (pl.cdiv(M, tile_m),)   # partial last block is masked on store
    return pl.pallas_call(
        functools.partial(_mm_bias_act_kernel, act=act),
        out_shape=jax.ShapeDtypeStruct((M, N), out_dtype),
        grid=grid,
        in_specs=[
            pl.BlockSpec((tm, K), lambda i: (i, 0)),
            pl.BlockSpec((K, N), lambda i: (0, 0)),
            pl.BlockSpec((1, N), lambda i: (0, 0)),
        ],
        out_specs=pl.BlockSpec((tm, N), lambda i: (i, 0)),
        compiler_params=pltpu.CompilerParams(
            dimension_semantics=("parallel",),
            vmem_limit_bytes=VMEM_LIMIT,
        ),
    )(x, w, b)


# ----------------------------------------------------------------------------
# Kernel 2: fused linear1(leaky_relu) + linear2, K-streamed with accumulator.
# grid = (M tiles [parallel], K tiles [arbitrary, innermost]).
# ----------------------------------------------------------------------------
def _fused_mlp_kernel(x_ref, w1_ref, b1_ref, w2_ref, b2_ref, o_ref, acc_ref):
    k = pl.program_id(1)

    @pl.when(k == 0)
    def _():
        acc_ref[...] = jnp.zeros_like(acc_ref)

    acc_ref[...] += jnp.dot(x_ref[...], w1_ref[...],
                            preferred_element_type=jnp.float32)

    @pl.when(k == pl.num_programs(1) - 1)
    def _():
        h = acc_ref[...] + b1_ref[...]
        h = jnp.where(h >= 0.0, h, 0.01 * h)          # leaky_relu, f32 epilogue
        q = jnp.dot(h.astype(w2_ref.dtype), w2_ref[...],
                    preferred_element_type=jnp.float32) + b2_ref[...]
        o_ref[...] = q.astype(o_ref.dtype)


def fused_mlp(x, w1, b1, w2, b2, *, tile_m=1024, tile_k=1792):
    M, KP = x.shape
    KP2, H = w1.shape
    H2, N = w2.shape
    assert KP == KP2 and H == H2 and KP % tile_k == 0
    tm = M if M <= tile_m else tile_m
    n_m = pl.cdiv(M, tm)
    grid = (n_m, KP // tile_k)

    # Advisory cost estimate: FLOPs of both matmuls; bytes dominated by the
    # lin1 weight stream (re-streamed once per M tile).
    flops = 2 * M * KP * H + 2 * M * H * N
    bytes_accessed = int(M * KP * 2 + n_m * (KP * H * 2 + H * N * 2) + M * N * 4)

    return pl.pallas_call(
        _fused_mlp_kernel,
        out_shape=jax.ShapeDtypeStruct((M, N), jnp.float32),
        grid=grid,
        in_specs=[
            pl.BlockSpec((tm, tile_k), lambda m, k: (m, k)),
            pl.BlockSpec((tile_k, H), lambda m, k: (k, 0)),
            pl.BlockSpec((1, H), lambda m, k: (0, 0)),
            pl.BlockSpec((H, N), lambda m, k: (0, 0)),
            pl.BlockSpec((1, N), lambda m, k: (0, 0)),
        ],
        out_specs=pl.BlockSpec((tm, N), lambda m, k: (m, 0)),
        scratch_shapes=[pltpu.VMEM((tm, H), jnp.float32)],
        compiler_params=pltpu.CompilerParams(
            dimension_semantics=("parallel", "arbitrary"),
            vmem_limit_bytes=VMEM_LIMIT,
        ),
        cost_estimate=pl.CostEstimate(flops=flops, transcendentals=0,
                                      bytes_accessed=bytes_accessed),
    )(x, w1, b1, w2, b2)


# ----------------------------------------------------------------------------
# Conv = single-op patch extraction (bf16) + fused Pallas matmul kernel.
# conv_general_dilated_patches emits features in (channel, kh, kw) order;
# weights are pre-reordered (and K-padded for conv3) in prepare_params().
# ----------------------------------------------------------------------------
def conv2d_relu(x_nhwc, w_mat, b_row, *, ksize, stride):
    B, H, W, C = x_nhwc.shape
    oh = (H - ksize) // stride + 1
    ow = (W - ksize) // stride + 1
    patches = lax.conv_general_dilated_patches(
        x_nhwc, (ksize, ksize), (stride, stride), "VALID",
        dimension_numbers=("NHWC", "HWIO", "NHWC"))
    patches = patches.reshape(B * oh * ow, C * ksize * ksize)
    k_pad = w_mat.shape[0] - patches.shape[1]       # lane-align K (conv3: 576->640)
    if k_pad:
        patches = jnp.pad(patches, ((0, 0), (0, k_pad)))
    oc = w_mat.shape[1]
    out = matmul_bias_act(patches, w_mat, b_row, act="relu",
                          out_dtype=jnp.bfloat16)
    return out.reshape(B, oh, ow, oc)


# ----------------------------------------------------------------------------
# Full DQN forward
# ----------------------------------------------------------------------------
def dqn_forward(x_nchw, params):
    x = jnp.transpose(x_nchw, (0, 2, 3, 1)).astype(jnp.bfloat16)        # NHWC bf16
    x = conv2d_relu(x, params["conv1_w"], params["conv1_b"], ksize=8, stride=4)  # 84->20
    x = conv2d_relu(x, params["conv2_w"], params["conv2_b"], ksize=4, stride=2)  # 20->9
    x = conv2d_relu(x, params["conv3_w"], params["conv3_b"], ksize=3, stride=1)  # 9->7
    B = x.shape[0]
    # NHWC flatten; the PyTorch NCHW view() permutation is folded into lin1_w.
    x = x.reshape(B, LIN1_K)
    x = jnp.pad(x, ((0, 0), (0, LIN1_K_PAD - LIN1_K)))                  # K pad (zeros)
    q = fused_mlp(x, params["lin1_w"], params["lin1_b"],
                  params["lin2_w"], params["lin2_b"])
    return q[:, :4]                                                      # drop lane padding


# ----------------------------------------------------------------------------
# Parameters: PyTorch-layout init, then one-time prep (reorder / pad / bf16).
# ----------------------------------------------------------------------------
def init_torch_params(key):
    ks = jax.random.split(key, 10)

    def u(k, shape, fan_in):
        bound = 1.0 / (fan_in ** 0.5)
        return jax.random.uniform(k, shape, jnp.float32, -bound, bound)

    return {
        "conv1_w": u(ks[0], (32, 4, 8, 8), 4 * 8 * 8),
        "conv1_b": u(ks[1], (32,), 4 * 8 * 8),
        "conv2_w": u(ks[2], (64, 32, 4, 4), 32 * 4 * 4),
        "conv2_b": u(ks[3], (64,), 32 * 4 * 4),
        "conv3_w": u(ks[4], (64, 64, 3, 3), 64 * 3 * 3),
        "conv3_b": u(ks[5], (64,), 64 * 3 * 3),
        # linear weights stored as (in, out); lin1 rows in torch NCHW-flatten order
        "lin1_w": u(ks[6], (3136, 512), 3136),
        "lin1_b": u(ks[7], (512,), 3136),
        "lin2_w": u(ks[8], (512, 4), 512),
        "lin2_b": u(ks[9], (4,), 512),
    }


def prepare_params(p):
    def conv_w(w, k_pad=0):   # (OC,IC,KH,KW) -> (IC*KH*KW [+pad], OC), channel-major
        oc, ic, kh, kw = w.shape
        m = jnp.transpose(w, (1, 2, 3, 0)).reshape(ic * kh * kw, oc)
        if k_pad:
            m = jnp.pad(m, ((0, k_pad), (0, 0)))
        return m.astype(jnp.bfloat16)

    # Fold PyTorch NCHW flatten (index c*49 + h*7 + w) into NHWC order (h*448 + w*64 + c).
    w1 = p["lin1_w"].reshape(64, 7, 7, 512)                 # (c, h, w, out)
    w1 = jnp.transpose(w1, (1, 2, 0, 3)).reshape(LIN1_K, 512)
    w1 = jnp.pad(w1, ((0, LIN1_K_PAD - LIN1_K), (0, 0))).astype(jnp.bfloat16)

    w2 = jnp.pad(p["lin2_w"], ((0, 0), (0, LIN2_N_PAD - 4))).astype(jnp.bfloat16)
    b2 = jnp.pad(p["lin2_b"], (0, LIN2_N_PAD - 4)).reshape(1, LIN2_N_PAD).astype(jnp.float32)

    return {
        "conv1_w": conv_w(p["conv1_w"]), "conv1_b": p["conv1_b"].reshape(1, -1),
        "conv2_w": conv_w(p["conv2_w"]), "conv2_b": p["conv2_b"].reshape(1, -1),
        "conv3_w": conv_w(p["conv3_w"], k_pad=CONV3_K_PAD - CONV3_K),
        "conv3_b": p["conv3_b"].reshape(1, -1),
        "lin1_w": w1, "lin1_b": p["lin1_b"].reshape(1, -1).astype(jnp.float32),
        "lin2_w": w2, "lin2_b": b2,
    }


# ----------------------------------------------------------------------------
# Pure-JAX f32 reference (mirrors the PyTorch forward) for a parity check.
# ----------------------------------------------------------------------------
def dqn_reference(x_nchw, p):
    hi = lax.Precision.HIGHEST

    def conv(x, w, b, stride):
        y = lax.conv_general_dilated(
            x, w, (stride, stride), "VALID",
            dimension_numbers=("NCHW", "OIHW", "NCHW"), precision=hi)
        return jnp.maximum(y + b.reshape(1, -1, 1, 1), 0.0)

    x = conv(x_nchw, p["conv1_w"], p["conv1_b"], 4)
    x = conv(x, p["conv2_w"], p["conv2_b"], 2)
    x = conv(x, p["conv3_w"], p["conv3_b"], 1)
    x = x.reshape(x.shape[0], -1)                      # NCHW flatten (torch order)
    h = jnp.dot(x, p["lin1_w"], precision=hi) + p["lin1_b"]
    h = jnp.where(h >= 0.0, h, 0.01 * h)
    return jnp.dot(h, p["lin2_w"], precision=hi) + p["lin2_b"]


if __name__ == "__main__":
    key = jax.random.PRNGKey(0)
    pkey, xkey = jax.random.split(key)
    torch_params = init_torch_params(pkey)
    params = prepare_params(torch_params)

    # 84x84 spatial is forced by linear1's 3136 (= 64*7*7) input width.
    x = jax.random.normal(xkey, (2, 4, 84, 84), jnp.float32)   # NCHW

    fwd = jax.jit(functools.partial(dqn_forward, params=params))
    out = fwd(x)
    jax.block_until_ready(out)
    assert out.shape == (2, 4) and out.dtype == jnp.float32

    # One-time parity check (bf16 MXU path vs f32 reference); guards the
    # im2col channel-major ordering and the lin1_w NCHW->NHWC fold.
    ref = dqn_reference(x, torch_params)
    err = float(jnp.linalg.norm(out - ref) / (jnp.linalg.norm(ref) + 1e-8))
    assert err < 0.1, f"normalized L2 error too large: {err}"

    print("KERNEL_OK")
</pallas_src>

<mosaic_0001>
module attributes {stable_mosaic.version = 11 : i64} {
  func.func @_mm_bias_act_kernel(%arg0: i32, %arg1: memref<256x256xbf16, #tpu.memory_space<vmem>>, %arg2: memref<256x32xbf16, #tpu.memory_space<vmem>>, %arg3: memref<1x32xf32, #tpu.memory_space<vmem>>, %arg4: memref<256x32xbf16, #tpu.memory_space<vmem>>) attributes {dimension_semantics = [#tpu.dimension_semantics<parallel>], iteration_bounds = array<i64: 4>, scalar_prefetch = 0 : i64, scratch_operands = 0 : i64, tpu.core_type = #tpu.core_type<tc>, window_params = [{transform_indices = @transform_0, window_bounds = array<i64: 256, 256>}, {pipeline_mode = #tpu.pipeline_mode<synchronous>, transform_indices = @transform_1, window_bounds = array<i64: 256, 32>}, {pipeline_mode = #tpu.pipeline_mode<synchronous>, transform_indices = @transform_2, window_bounds = array<i64: 1, 32>}, {transform_indices = @transform_3, window_bounds = array<i64: 256, 32>}]} {
    %c0 = arith.constant 0 : index
    %c0_0 = arith.constant 0 : index
    %0 = vector.load %arg1[%c0, %c0_0] : memref<256x256xbf16, #tpu.memory_space<vmem>>, vector<256x256xbf16>
    %c0_1 = arith.constant 0 : index
    %c0_2 = arith.constant 0 : index
    %1 = vector.load %arg2[%c0_1, %c0_2] : memref<256x32xbf16, #tpu.memory_space<vmem>>, vector<256x32xbf16>
    %cst = arith.constant dense<0.000000e+00> : vector<256x32xf32>
    %2 = tpu.matmul %0, %1, %cst {dimension_numbers = #tpu.dot_dimension_numbers<[1], [0], [0], [1], [0, 0, 1, 1], [], []>} : vector<256x256xbf16>, vector<256x32xbf16>, vector<256x32xf32> -> vector<256x32xf32>
    %c0_3 = arith.constant 0 : index
    %c0_4 = arith.constant 0 : index
    %3 = vector.load %arg3[%c0_3, %c0_4] : memref<1x32xf32, #tpu.memory_space<vmem>>, vector<1x32xf32>
    %4 = vector.broadcast %3 : vector<1x32xf32> to vector<256x32xf32>
    %5 = arith.addf %2, %4 : vector<256x32xf32>
    %cst_5 = arith.constant 0.000000e+00 : f32
    %6 = vector.broadcast %cst_5 : f32 to vector<256x32xf32>
    %7 = arith.maximumf %5, %6 : vector<256x32xf32>
    %8 = arith.truncf %7 : vector<256x32xf32> to vector<256x32xbf16>
    %c0_6 = arith.constant 0 : index
    %c0_7 = arith.constant 0 : index
    %9 = vector.load %arg4[%c0_6, %c0_7] : memref<256x32xbf16, #tpu.memory_space<vmem>>, vector<256x32xbf16>
    tpu.vector_store %arg4[%c0_6, %c0_7], %8 {strides = array<i32>} : memref<256x32xbf16, #tpu.memory_space<vmem>>, vector<256x32xbf16>,
    return
  }
  func.func @transform_0(%arg0: i32) -> (i32, i32) {
    %c0_i32 = arith.constant 0 : i32
    %c0_i32_0 = arith.constant 0 : i32
    return %arg0, %c0_i32 : i32, i32
  }
  func.func @transform_1(%arg0: i32) -> (i32, i32) {
    %c0_i32 = arith.constant 0 : i32
    %c0_i32_0 = arith.constant 0 : i32
    %c0_i32_1 = arith.constant 0 : i32
    return %c0_i32, %c0_i32_0 : i32, i32
  }
  func.func @transform_2(%arg0: i32) -> (i32, i32) {
    %c0_i32 = arith.constant 0 : i32
    %c0_i32_0 = arith.constant 0 : i32
    %c0_i32_1 = arith.constant 0 : i32
    return %c0_i32, %c0_i32_0 : i32, i32
  }
  func.func @transform_3(%arg0: i32) -> (i32, i32) {
    %c0_i32 = arith.constant 0 : i32
    %c0_i32_0 = arith.constant 0 : i32
    return %arg0, %c0_i32 : i32, i32
  }
}

module attributes {stable_mosaic.version = 11 : i64} {
  func.func @_mm_bias_act_kernel(%arg0: i32, %arg1: memref<162x512xbf16, #tpu.memory_space<vmem>>, %arg2: memref<512x64xbf16, #tpu.memory_space<vmem>>, %arg3: memref<1x64xf32, #tpu.memory_space<vmem>>, %arg4: memref<162x64xbf16, #tpu.memory_space<vmem>>) attributes {dimension_semantics = [#tpu.dimension_semantics<parallel>], iteration_bounds = array<i64: 1>, scalar_prefetch = 0 : i64, scratch_operands = 0 : i64, tpu.core_type = #tpu.core_type<tc>, window_params = [{transform_indices = @transform_0, window_bounds = array<i64: 162, 512>}, {pipeline_mode = #tpu.pipeline_mode<synchronous>, transform_indices = @transform_1, window_bounds = array<i64: 512, 64>}, {pipeline_mode = #tpu.pipeline_mode<synchronous>, transform_indices = @transform_2, window_bounds = array<i64: 1, 64>}, {transform_indices = @transform_3, window_bounds = array<i64: 162, 64>}]} {
    %c0 = arith.constant 0 : index
    %c0_0 = arith.constant 0 : index
    %0 = vector.load %arg1[%c0, %c0_0] : memref<162x512xbf16, #tpu.memory_space<vmem>>, vector<162x512xbf16>
    %c0_1 = arith.constant 0 : index
    %c0_2 = arith.constant 0 : index
    %1 = vector.load %arg2[%c0_1, %c0_2] : memref<512x64xbf16, #tpu.memory_space<vmem>>, vector<512x64xbf16>
    %cst = arith.constant dense<0.000000e+00> : vector<162x64xf32>
    %2 = tpu.matmul %0, %1, %cst {dimension_numbers = #tpu.dot_dimension_numbers<[1], [0], [0], [1], [0, 0, 1, 1], [], []>} : vector<162x512xbf16>, vector<512x64xbf16>, vector<162x64xf32> -> vector<162x64xf32>
    %c0_3 = arith.constant 0 : index
    %c0_4 = arith.constant 0 : index
    %3 = vector.load %arg3[%c0_3, %c0_4] : memref<1x64xf32, #tpu.memory_space<vmem>>, vector<1x64xf32>
    %4 = vector.broadcast %3 : vector<1x64xf32> to vector<162x64xf32>
    %5 = arith.addf %2, %4 : vector<162x64xf32>
    %cst_5 = arith.constant 0.000000e+00 : f32
    %6 = vector.broadcast %cst_5 : f32 to vector<162x64xf32>
    %7 = arith.maximumf %5, %6 : vector<162x64xf32>
    %8 = arith.truncf %7 : vector<162x64xf32> to vector<162x64xbf16>
    %c0_6 = arith.constant 0 : index
    %c0_7 = arith.constant 0 : index
    %9 = vector.load %arg4[%c0_6, %c0_7] : memref<162x64xbf16, #tpu.memory_space<vmem>>, vector<162x64xbf16>
    tpu.vector_store %arg4[%c0_6, %c0_7], %8 {strides = array<i32>} : memref<162x64xbf16, #tpu.memory_space<vmem>>, vector<162x64xbf16>,
    return
  }
  func.func @transform_0(%arg0: i32) -> (i32, i32) {
    %c0_i32 = arith.constant 0 : i32
    %c0_i32_0 = arith.constant 0 : i32
    return %arg0, %c0_i32 : i32, i32
  }
  func.func @transform_1(%arg0: i32) -> (i32, i32) {
    %c0_i32 = arith.constant 0 : i32
    %c0_i32_0 = arith.constant 0 : i32
    %c0_i32_1 = arith.constant 0 : i32
    return %c0_i32, %c0_i32_0 : i32, i32
  }
  func.func @transform_2(%arg0: i32) -> (i32, i32) {
    %c0_i32 = arith.constant 0 : i32
    %c0_i32_0 = arith.constant 0 : i32
    %c0_i32_1 = arith.constant 0 : i32
    return %c0_i32, %c0_i32_0 : i32, i32
  }
  func.func @transform_3(%arg0: i32) -> (i32, i32) {
    %c0_i32 = arith.constant 0 : i32
    %c0_i32_0 = arith.constant 0 : i32
    return %arg0, %c0_i32 : i32, i32
  }
}

module attributes {stable_mosaic.version = 11 : i64} {
  func.func @_mm_bias_act_kernel(%arg0: i32, %arg1: memref<98x640xbf16, #tpu.memory_space<vmem>>, %arg2: memref<640x64xbf16, #tpu.memory_space<vmem>>, %arg3: memref<1x64xf32, #tpu.memory_space<vmem>>, %arg4: memref<98x64xbf16, #tpu.memory_space<vmem>>) attributes {dimension_semantics = [#tpu.dimension_semantics<parallel>], iteration_bounds = array<i64: 1>, scalar_prefetch = 0 : i64, scratch_operands = 0 : i64, tpu.core_type = #tpu.core_type<tc>, window_params = [{transform_indices = @transform_0, window_bounds = array<i64: 98, 640>}, {pipeline_mode = #tpu.pipeline_mode<synchronous>, transform_indices = @transform_1, window_bounds = array<i64: 640, 64>}, {pipeline_mode = #tpu.pipeline_mode<synchronous>, transform_indices = @transform_2, window_bounds = array<i64: 1, 64>}, {transform_indices = @transform_3, window_bounds = array<i64: 98, 64>}]} {
    %c0 = arith.constant 0 : index
    %c0_0 = arith.constant 0 : index
    %0 = vector.load %arg1[%c0, %c0_0] : memref<98x640xbf16, #tpu.memory_space<vmem>>, vector<98x640xbf16>
    %c0_1 = arith.constant 0 : index
    %c0_2 = arith.constant 0 : index
    %1 = vector.load %arg2[%c0_1, %c0_2] : memref<640x64xbf16, #tpu.memory_space<vmem>>, vector<640x64xbf16>
    %cst = arith.constant dense<0.000000e+00> : vector<98x64xf32>
    %2 = tpu.matmul %0, %1, %cst {dimension_numbers = #tpu.dot_dimension_numbers<[1], [0], [0], [1], [0, 0, 1, 1], [], []>} : vector<98x640xbf16>, vector<640x64xbf16>, vector<98x64xf32> -> vector<98x64xf32>
    %c0_3 = arith.constant 0 : index
    %c0_4 = arith.constant 0 : index
    %3 = vector.load %arg3[%c0_3, %c0_4] : memref<1x64xf32, #tpu.memory_space<vmem>>, vector<1x64xf32>
    %4 = vector.broadcast %3 : vector<1x64xf32> to vector<98x64xf32>
    %5 = arith.addf %2, %4 : vector<98x64xf32>
    %cst_5 = arith.constant 0.000000e+00 : f32
    %6 = vector.broadcast %cst_5 : f32 to vector<98x64xf32>
    %7 = arith.maximumf %5, %6 : vector<98x64xf32>
    %8 = arith.truncf %7 : vector<98x64xf32> to vector<98x64xbf16>
    %c0_6 = arith.constant 0 : index
    %c0_7 = arith.constant 0 : index
    %9 = vector.load %arg4[%c0_6, %c0_7] : memref<98x64xbf16, #tpu.memory_space<vmem>>, vector<98x64xbf16>
    tpu.vector_store %arg4[%c0_6, %c0_7], %8 {strides = array<i32>} : memref<98x64xbf16, #tpu.memory_space<vmem>>, vector<98x64xbf16>,
    return
  }
  func.func @transform_0(%arg0: i32) -> (i32, i32) {
    %c0_i32 = arith.constant 0 : i32
    %c0_i32_0 = arith.constant 0 : i32
    return %arg0, %c0_i32 : i32, i32
  }
  func.func @transform_1(%arg0: i32) -> (i32, i32) {
    %c0_i32 = arith.constant 0 : i32
    %c0_i32_0 = arith.constant 0 : i32
    %c0_i32_1 = arith.constant 0 : i32
    return %c0_i32, %c0_i32_0 : i32, i32
  }
  func.func @transform_2(%arg0: i32) -> (i32, i32) {
    %c0_i32 = arith.constant 0 : i32
    %c0_i32_0 = arith.constant 0 : i32
    %c0_i32_1 = arith.constant 0 : i32
    return %c0_i32, %c0_i32_0 : i32, i32
  }
  func.func @transform_3(%arg0: i32) -> (i32, i32) {
    %c0_i32 = arith.constant 0 : i32
    %c0_i32_0 = arith.constant 0 : i32
    return %arg0, %c0_i32 : i32, i32
  }
}

module attributes {stable_mosaic.version = 11 : i64} {
  func.func @_fused_mlp_kernel(%arg0: i32, %arg1: i32, %arg2: memref<2x1792xbf16, #tpu.memory_space<vmem>>, %arg3: memref<1792x512xbf16, #tpu.memory_space<vmem>>, %arg4: memref<1x512xf32, #tpu.memory_space<vmem>>, %arg5: memref<512x128xbf16, #tpu.memory_space<vmem>>, %arg6: memref<1x128xf32, #tpu.memory_space<vmem>>, %arg7: memref<2x128xf32, #tpu.memory_space<vmem>>, %arg8: memref<2x512xf32, #tpu.memory_space<vmem>>) attributes {dimension_semantics = [#tpu.dimension_semantics<parallel>, #tpu.dimension_semantics<arbitrary>], iteration_bounds = array<i64: 1, 2>, scalar_prefetch = 0 : i64, scratch_operands = 1 : i64, tpu.core_type = #tpu.core_type<tc>, window_params = [{transform_indices = @transform_0, window_bounds = array<i64: 2, 1792>}, {transform_indices = @transform_1, window_bounds = array<i64: 1792, 512>}, {pipeline_mode = #tpu.pipeline_mode<synchronous>, transform_indices = @transform_2, window_bounds = array<i64: 1, 512>}, {pipeline_mode = #tpu.pipeline_mode<synchronous>, transform_indices = @transform_3, window_bounds = array<i64: 512, 128>}, {pipeline_mode = #tpu.pipeline_mode<synchronous>, transform_indices = @transform_4, window_bounds = array<i64: 1, 128>}, {transform_indices = @transform_5, window_bounds = array<i64: 2, 128>}]} {
    %c0_i32 = arith.constant 0 : i32
    %0 = arith.cmpi eq, %arg1, %c0_i32 : i32
    %1 = arith.extui %0 : i1 to i32
    %c0_i32_0 = arith.constant 0 : i32
    %2 = arith.cmpi ne, %1, %c0_i32_0 : i32
    scf.if %2 {
      %cst_9 = arith.constant 0.000000e+00 : f32
      %12 = vector.broadcast %cst_9 : f32 to vector<2x512xf32>
      %c0_10 = arith.constant 0 : index
      %c0_11 = arith.constant 0 : index
      %13 = vector.load %arg8[%c0_10, %c0_11] : memref<2x512xf32, #tpu.memory_space<vmem>>, vector<2x512xf32>
      tpu.vector_store %arg8[%c0_10, %c0_11], %12 {strides = array<i32>} : memref<2x512xf32, #tpu.memory_space<vmem>>, vector<2x512xf32>,
    } else {
    }
    %c0 = arith.constant 0 : index
    %c0_1 = arith.constant 0 : index
    %3 = vector.load %arg8[%c0, %c0_1] : memref<2x512xf32, #tpu.memory_space<vmem>>, vector<2x512xf32>
    %c0_2 = arith.constant 0 : index
    %c0_3 = arith.constant 0 : index
    %4 = vector.load %arg2[%c0_2, %c0_3] : memref<2x1792xbf16, #tpu.memory_space<vmem>>, vector<2x1792xbf16>
    %c0_4 = arith.constant 0 : index
    %c0_5 = arith.constant 0 : index
    %5 = vector.load %arg3[%c0_4, %c0_5] : memref<1792x512xbf16, #tpu.memory_space<vmem>>, vector<1792x512xbf16>
    %cst = arith.constant dense<0.000000e+00> : vector<2x512xf32>
    %6 = tpu.matmul %4, %5, %cst {dimension_numbers = #tpu.dot_dimension_numbers<[1], [0], [0], [1], [0, 0, 1, 1], [], []>} : vector<2x1792xbf16>, vector<1792x512xbf16>, vector<2x512xf32> -> vector<2x512xf32>
    %7 = arith.addf %3, %6 : vector<2x512xf32>
    %c0_6 = arith.constant 0 : index
    %c0_7 = arith.constant 0 : index
    %8 = vector.load %arg8[%c0_6, %c0_7] : memref<2x512xf32, #tpu.memory_space<vmem>>, vector<2x512xf32>
    tpu.vector_store %arg8[%c0_6, %c0_7], %7 {strides = array<i32>} : memref<2x512xf32, #tpu.memory_space<vmem>>, vector<2x512xf32>,
    %c1_i32 = arith.constant 1 : i32
    %9 = arith.cmpi eq, %arg1, %c1_i32 : i32
    %10 = arith.extui %9 : i1 to i32
    %c0_i32_8 = arith.constant 0 : i32
    %11 = arith.cmpi ne, %10, %c0_i32_8 : i32
    scf.if %11 {
      %c0_9 = arith.constant 0 : index
      %c0_10 = arith.constant 0 : index
      %12 = vector.load %arg8[%c0_9, %c0_10] : memref<2x512xf32, #tpu.memory_space<vmem>>, vector<2x512xf32>
      %c0_11 = arith.constant 0 : index
      %c0_12 = arith.constant 0 : index
      %13 = vector.load %arg4[%c0_11, %c0_12] : memref<1x512xf32, #tpu.memory_space<vmem>>, vector<1x512xf32>
      %14 = vector.broadcast %13 : vector<1x512xf32> to vector<2x512xf32>
      %15 = arith.addf %12, %14 : vector<2x512xf32>
      %cst_13 = arith.constant 0.000000e+00 : f32
      %16 = vector.broadcast %cst_13 : f32 to vector<2x512xf32>
      %17 = arith.cmpf oge, %15, %16 : vector<2x512xf32>
      %cst_14 = arith.constant 0.00999999977 : f32
      %18 = vector.broadcast %cst_14 : f32 to vector<2x512xf32>
      %19 = arith.mulf %18, %15 : vector<2x512xf32>
      %20 = arith.select %17, %15, %19 : vector<2x512xi1>, vector<2x512xf32>
      %21 = arith.truncf %20 : vector<2x512xf32> to vector<2x512xbf16>
      %c0_15 = arith.constant 0 : index
      %c0_16 = arith.constant 0 : index
      %22 = vector.load %arg5[%c0_15, %c0_16] : memref<512x128xbf16, #tpu.memory_space<vmem>>, vector<512x128xbf16>
      %cst_17 = arith.constant dense<0.000000e+00> : vector<2x128xf32>
      %23 = tpu.matmul %21, %22, %cst_17 {dimension_numbers = #tpu.dot_dimension_numbers<[1], [0], [0], [1], [0, 0, 1, 1], [], []>} : vector<2x512xbf16>, vector<512x128xbf16>, vector<2x128xf32> -> vector<2x128xf32>
      %c0_18 = arith.constant 0 : index
      %c0_19 = arith.constant 0 : index
      %24 = vector.load %arg6[%c0_18, %c0_19] : memref<1x128xf32, #tpu.memory_space<vmem>>, vector<1x128xf32>
      %25 = vector.broadcast %24 : vector<1x128xf32> to vector<2x128xf32>
      %26 = arith.addf %23, %25 : vector<2x128xf32>
      %c0_20 = arith.constant 0 : index
      %c0_21 = arith.constant 0 : index
      %27 = vector.load %arg7[%c0_20, %c0_21] : memref<2x128xf32, #tpu.memory_space<vmem>>, vector<2x128xf32>
      tpu.vector_store %arg7[%c0_20, %c0_21], %26 {strides = array<i32>} : memref<2x128xf32, #tpu.memory_space<vmem>>, vector<2x128xf32>,
    } else {
    }
    return
  }
  func.func @transform_0(%arg0: i32, %arg1: i32) -> (i32, i32) {
    %c0_i32 = arith.constant 0 : i32
    return %arg0, %arg1 : i32, i32
  }
  func.func @transform_1(%arg0: i32, %arg1: i32) -> (i32, i32) {
    %c0_i32 = arith.constant 0 : i32
    %c0_i32_0 = arith.constant 0 : i32
    return %arg1, %c0_i32 : i32, i32
  }
  func.func @transform_2(%arg0: i32, %arg1: i32) -> (i32, i32) {
    %c0_i32 = arith.constant 0 : i32
    %c0_i32_0 = arith.constant 0 : i32
    %c0_i32_1 = arith.constant 0 : i32
    return %c0_i32, %c0_i32_0 : i32, i32
  }
  func.func @transform_3(%arg0: i32, %arg1: i32) -> (i32, i32) {
    %c0_i32 = arith.constant 0 : i32
    %c0_i32_0 = arith.constant 0 : i32
    %c0_i32_1 = arith.constant 0 : i32
    return %c0_i32, %c0_i32_0 : i32, i32
  }
  func.func @transform_4(%arg0: i32, %arg1: i32) -> (i32, i32) {
    %c0_i32 = arith.constant 0 : i32
    %c0_i32_0 = arith.constant 0 : i32
    %c0_i32_1 = arith.constant 0 : i32
    return %c0_i32, %c0_i32_0 : i32, i32
  }
  func.func @transform_5(%arg0: i32, %arg1: i32) -> (i32, i32) {
    %c0_i32 = arith.constant 0 : i32
    %c0_i32_0 = arith.constant 0 : i32
    return %arg0, %c0_i32 : i32, i32
  }
}

</mosaic_0001>

<llo_original>
// kernel: dqn_forward.4
$region0: #{dqn_forward.4}
  #allocation0 [shape = 'u32[]', space=smem, size = 0x4, offset = 0x4, fixed_abs, tag = 'smem constant byte address 0x4 - core index']
  #allocation1 [shape = 'u32[144,128]{1,0:T(1,128)}', space=vmem, size = 0x12000, scoped, tag = 'internal scratch']
  %s0 = inlined_call_operand.vmem [shape: bf16[800,256], index: 0, kind: input, shape index: {}]
  %s1 = inlined_call_operand.vmem [shape: bf16[256,32], index: 1, kind: input, shape index: {}]
  %s2 = inlined_call_operand.vmem [shape: f32[1,32], index: 2, kind: input, shape index: {}]
  %s3 = inlined_call_operand.vmem [shape: bf16[800,32], index: 3, kind: output, shape index: {}]
  %s4 = sld [smem:[#allocation0]]
  $region89: #{dqn_forward.4} parent=0
    _
  %s6 = ssub.s32 1, %s4
  %s7 = scalar_select 0, %s6, %s4
  $region1: #{dqn_forward.4} parent=0
    #allocation2 [shape = 'u8[131072]{0}', space=vmem, size = 0x20000, scoped, tag = 'output window, operand 0']
    loop: start=0, step=1, limit=6
    $region2: #{dqn_forward.4} parent=1 // loop_pre_header
      _
    $region3: #{dqn_forward.4} parent=1 // loop_header
      %s9 = sphi 0, %s13
      %p10 = scmp.ge.s32.totalorder %s9, 6
      %s19 = sphi 0, %s21
      %s22 = sphi 0, %s19
      %s23 = sphi 0, %s22
      %s39 = sphi 0, %s23
      %s43 = sphi 0, %s43
      %s45 = sphi 0, %s43
      %s46 = sphi 0, %s45
      %s60 = sphi 0, %s46
      %s64 = sphi 0, %s64
      %s66 = sphi 0, %s64
      %s67 = sphi 0, %s66
      %s81 = sphi 0, %s67
      %s87 = sphi 0, %s89
      %s90 = sphi 0, %s87
      %s91 = sphi 0, %s90
      %s107 = sphi 0, %s91
    $region4: #{dqn_forward.4} parent=1 // loop_header_branch
      %12 = sbr.rel (%p10) target = $region8
    $region5: #{dqn_forward.4} parent=1 // loop_body
      %s14 = ssub.s32 %s9, 1
      %s15 = ssub.s32 %s9, 2
      %s16 = sadd.s32 %s9, 1
      %s17 = ssub.s32 %s9, %s16
      %p18 = scmp.eq.s32.totalorder %s17, 0
      %s20 = sadd.s32 %s19, 1
      %s21 = scalar_select %p18, %s19, %s20
      %p24 = pneg %p18
      %p25 = scmp.eq.s32.totalorder %s9, 3
      %p26 = por %p24, %p25
      %p27 = scmp.ne.s32.totalorder %s19, %s22
      %p28 = scmp.eq.s32.totalorder %s9, 0
      %p29 = por %p27, %p28
      %p30 = scmp.ne.s32.totalorder %s19, %s22
      %p31 = scmp.eq.s32.totalorder %s14, 3
      %p32 = por %p30, %p31
      %p33 = scmp.ne.s32.totalorder %s22, %s23
      %p34 = scmp.eq.s32.totalorder %s14, 0
      %p35 = por %p33, %p34
      %p36 = scmp.ne.s32.totalorder %s22, %s23
      %p37 = scmp.eq.s32.totalorder %s15, 3
      %p38 = por %p36, %p37
      %p40 = scmp.ne.s32.totalorder %s23, %s39
      %p41 = scmp.eq.s32.totalorder %s15, 0
      %p42 = por %p40, %p41
      %s44 = sadd.s32 %s43, 1
      %p47 = scmp.eq.s32.totalorder %s9, 3
      %p48 = scmp.ne.s32.totalorder %s43, %s45
      %p49 = scmp.eq.s32.totalorder %s9, 0
      %p50 = por %p48, %p49
      %p51 = scmp.ne.s32.totalorder %s43, %s45
      %p52 = scmp.eq.s32.totalorder %s14, 3
      %p53 = por %p51, %p52
      %p54 = scmp.ne.s32.totalorder %s45, %s46
      %p55 = scmp.eq.s32.totalorder %s14, 0
      %p56 = por %p54, %p55
      %p57 = scmp.ne.s32.totalorder %s45, %s46
      %p58 = scmp.eq.s32.totalorder %s15, 3
      %p59 = por %p57, %p58
      %p61 = scmp.ne.s32.totalorder %s46, %s60
      %p62 = scmp.eq.s32.totalorder %s15, 0
      %p63 = por %p61, %p62
      %s65 = sadd.s32 %s64, 1
      %p68 = scmp.eq.s32.totalorder %s9, 3
      %p69 = scmp.ne.s32.totalorder %s64, %s66
      %p70 = scmp.eq.s32.totalorder %s9, 0
      %p71 = por %p69, %p70
      %p72 = scmp.ne.s32.totalorder %s64, %s66
      %p73 = scmp.eq.s32.totalorder %s14, 3
      %p74 = por %p72, %p73
      %p75 = scmp.ne.s32.totalorder %s66, %s67
      %p76 = scmp.eq.s32.totalorder %s14, 0
      %p77 = por %p75, %p76
      %p78 = scmp.ne.s32.totalorder %s66, %s67
      %p79 = scmp.eq.s32.totalorder %s15, 3
      %p80 = por %p78, %p79
      %p82 = scmp.ne.s32.totalorder %s67, %s81
      %p83 = scmp.eq.s32.totalorder %s15, 0
      %p84 = por %p82, %p83
      %s85 = ssub.s32 %s9, %s16
      %p86 = scmp.eq.s32.totalorder %s85, 0
      %s88 = sadd.s32 %s87, 1
      %s89 = scalar_select %p86, %s87, %s88
      %p92 = pneg %p86
      %p93 = scmp.eq.s32.totalorder %s9, 3
      %p94 = por %p92, %p93
      %p95 = scmp.ne.s32.totalorder %s87, %s90
      %p96 = scmp.eq.s32.totalorder %s9, 0
      %p97 = por %p95, %p96
      %p98 = scmp.ne.s32.totalorder %s87, %s90
      %p99 = scmp.eq.s32.totalorder %s14, 3
      %p100 = por %p98, %p99
      %p101 = scmp.ne.s32.totalorder %s90, %s91
      %p102 = scmp.eq.s32.totalorder %s14, 0
      %p103 = por %p101, %p102
      %p104 = scmp.ne.s32.totalorder %s90, %s91
      %p105 = scmp.eq.s32.totalorder %s15, 3
      %p106 = por %p104, %p105
      %p108 = scmp.ne.s32.totalorder %s91, %s107
      %p109 = scmp.eq.s32.totalorder %s15, 0
      %p110 = por %p108, %p109
      %p111 = scmp.le.s32.totalorder 1, %s9
      %p112 = scmp.lt.s32.totalorder %s9, 5
      %p113 = pnand %p111, %p112
      %p114 = pneg %p113
      // Predicated region
      $region9: #{dqn_forward.4} parent=5 // pred_check
        _
      $region10: #{dqn_forward.4} parent=5 // pred_check_branch
        %116 = sbr.rel (%p113) target = $region12
      $region11: #{dqn_forward.4} parent=5 // pred_region
        %s117 = ssub.s32 %s9, 1
        // Predicated region
        $region13: #{dqn_forward.4} parent=11 // pred_check
          %p118 = pneg %p56
        $region14: #{dqn_forward.4} parent=11 // pred_check_branch
          %120 = sbr.rel (%p118) target = $region16
        $region15: #{dqn_forward.4} parent=11 // pred_region
          _
        $region16: #{dqn_forward.4} parent=11 // pred_fallthru
          _
        // Predicated region
        $region17: #{dqn_forward.4} parent=11 // pred_check
          %p121 = pneg %p77
        $region18: #{dqn_forward.4} parent=11 // pred_check_branch
          %123 = sbr.rel (%p121) target = $region20
        $region19: #{dqn_forward.4} parent=11 // pred_region
          _
        $region20: #{dqn_forward.4} parent=11 // pred_fallthru
          _
      $region12: #{dqn_forward.4} parent=5 // pred_fallthru
        _
      %p124 = scmp.lt.s32.totalorder %s9, 4
      // Predicated region
      $region21: #{dqn_forward.4} parent=5 // pred_check
        %p125 = pneg %p124
      $region22: #{dqn_forward.4} parent=5 // pred_check_branch
        %127 = sbr.rel (%p125) target = $region24
      $region23: #{dqn_forward.4} parent=5 // pred_region
        // Predicated region
        $region25: #{dqn_forward.4} parent=23 // pred_check
          %p128 = pneg %p29
        $region26: #{dqn_forward.4} parent=23 // pred_check_branch
          %130 = sbr.rel (%p128) target = $region28
        $region27: #{dqn_forward.4} parent=23 // pred_region
          %s131 = smul.u32 32, %s9
          %s132 = ssub.s32 100, %s131
          %p133 = scmp.lt.s32.totalorder %s132, 32
          %s134 = scalar_select %p133, %s132, 32
          %s135 = smul.u32 64, %s134
          %s136 = smul.u32 %s135, 2
          %p137 = scmp.lt.s32.totalorder %s131, 99
          %s138 = scalar_select %p137, %s131, 99
          %s139 = smul.addr %s138, 2
          %s140 = smul.addr %s139, 4
          %s141 = scalar_lea.vmem %s0, %s140
          %s142 = smul.u32 32, %s9
          %s143 = ssub.s32 100, %s142
          %p144 = scmp.lt.s32.totalorder %s143, 32
          %s145 = scalar_select %p144, %s143, 32
          %s146 = smul.u32 64, %s145
          %s147 = smul.u32 %s146, 2
        $region28: #{dqn_forward.4} parent=23 // pred_fallthru
          _
      $region24: #{dqn_forward.4} parent=5 // pred_fallthru
        _
      %p148 = scmp.le.s32.totalorder 1, %s9
      %p149 = scmp.lt.s32.totalorder %s9, 5
      %p150 = pnand %p148, %p149
      %p151 = pneg %p150
      // Predicated region
      $region29: #{dqn_forward.4} parent=5 // pred_check
        _
      $region30: #{dqn_forward.4} parent=5 // pred_check_branch
        %153 = sbr.rel (%p150) target = $region32
      $region31: #{dqn_forward.4} parent=5 // pred_region
        %s154 = ssub.s32 %s9, 1
        %s155 = smul.u32 32, %s14
        %s156 = ssub.s32 100, %s155
        %p157 = scmp.lt.s32.totalorder %s156, 32
        %s158 = scalar_select %p157, %s156, 32
        %s159 = smul.u32 64, %s158
        %s160 = smul.u32 %s159, 2
        %p161 = scmp.lt.s32.totalorder %s155, 99
        %s162 = scalar_select %p161, %s155, 99
        %s163 = smul.addr %s162, 2
        %s164 = smul.addr %s163, 4
        %s165 = scalar_lea.vmem %s0, %s164
        %p166 = pneg %p35
        %p167 = pneg %p32
        %p168 = pneg %p56
        %p169 = pneg %p53
        %p170 = pneg %p77
        %p171 = pneg %p74
        %p172 = pneg %p103
        %p173 = pneg %p100
        %s174 = sand.u32 %s90, 1
        %s175 = sand.u32 %s90, 1
        %s176 = smul.addr %s175, 128
        %s177 = scalar_lea.vmem [#allocation2], %s176
        %s178 = smul.u32 32, %s14
        %s179 = ssub.s32 100, %s178
        %p180 = scmp.lt.s32.totalorder %s179, 32
        %s181 = scalar_select %p180, %s179, 32
        %s182 = smul.u32 64, %s181
        %s183 = smul.u32 %s182, 2
        %p184 = scmp.lt.s32.totalorder %s178, 99
        %s185 = scalar_select %p184, %s178, 99
        %s186 = smul.addr %s185, 2
        %s187 = smul.addr %s186, 4
        %s188 = scalar_lea.vmem %s0, %s187
        %s189 = smul.u32 32, %s14
        %s190 = ssub.s32 100, %s189
        %p191 = scmp.lt.s32.totalorder %s190, 32
        %s192 = scalar_select %p191, %s190, 32
        %s193 = smul.u32 64, %s192
        %s194 = smul.u32 %s193, 2
        %s195 = smul.u32 32, %s14
        %s196 = ssub.s32 100, %s195
        %p197 = scmp.lt.s32.totalorder %s196, 32
        %s198 = scalar_select %p197, %s196, 32
        %s199 = smul.u32 64, %s198
        %v201 = vld [vmem:[%s188] sm:$0xff]
        %v202 = vld [vmem:[%s188 + $0x8] sm:$0xff]
        %v203 = vld [vmem:[%s188 + $0x10] sm:$0xff]
        %v204 = vld [vmem:[%s188 + $0x18] sm:$0xff]
        %v205 = vld [vmem:[%s188 + $0x20] sm:$0xff]
        %v206 = vld [vmem:[%s188 + $0x28] sm:$0xff]
        %v207 = vld [vmem:[%s188 + $0x30] sm:$0xff]
        %v208 = vld [vmem:[%s188 + $0x38] sm:$0xff]
        %v209 = vld [vmem:[%s188 + $0x40] sm:$0xff]
        %v210 = vld [vmem:[%s188 + $0x48] sm:$0xff]
        %v211 = vld [vmem:[%s188 + $0x50] sm:$0xff]
        %v212 = vld [vmem:[%s188 + $0x58] sm:$0xff]
        %v213 = vld [vmem:[%s188 + $0x60] sm:$0xff]
        %v214 = vld [vmem:[%s188 + $0x68] sm:$0xff]
        %v215 = vld [vmem:[%s188 + $0x70] sm:$0xff]
        %v216 = vld [vmem:[%s188 + $0x78] sm:$0xff]
        %v217 = vld [vmem:[%s188 + $0x80] sm:$0xff]
        %v218 = vld [vmem:[%s188 + $0x88] sm:$0xff]
        %v219 = vld [vmem:[%s188 + $0x90] sm:$0xff]
        %v220 = vld [vmem:[%s188 + $0x98] sm:$0xff]
        %v221 = vld [vmem:[%s188 + $0xa0] sm:$0xff]
        %v222 = vld [vmem:[%s188 + $0xa8] sm:$0xff]
        %v223 = vld [vmem:[%s188 + $0xb0] sm:$0xff]
        %v224 = vld [vmem:[%s188 + $0xb8] sm:$0xff]
        %v225 = vld [vmem:[%s188 + $0xc0] sm:$0xff]
        %v226 = vld [vmem:[%s188 + $0xc8] sm:$0xff]
        %v227 = vld [vmem:[%s188 + $0xd0] sm:$0xff]
        %v228 = vld [vmem:[%s188 + $0xd8] sm:$0xff]
        %v229 = vld [vmem:[%s188 + $0xe0] sm:$0xff]
        %v230 = vld [vmem:[%s188 + $0xe8] sm:$0xff]
        %v231 = vld [vmem:[%s188 + $0xf0] sm:$0xff]
        %v232 = vld [vmem:[%s188 + $0xf8] sm:$0xff]
        %v233 = vld [vmem:[%s1] sm:$0xf]
        %v234 = vld [vmem:[%s1 + $0x4] sm:$0xf]
        %v235 = vld [vmem:[%s1 + $0x8] sm:$0xf]
        %v236 = vld [vmem:[%s1 + $0xc] sm:$0xf]
        %v237 = vld [vmem:[%s1 + $0x10] sm:$0xf]
        %v238 = vld [vmem:[%s1 + $0x14] sm:$0xf]
        %v239 = vld [vmem:[%s1 + $0x18] sm:$0xf]
        %v240 = vld [vmem:[%s1 + $0x1c] sm:$0xf]
        %v241 = vld [vmem:[%s1 + $0x20] sm:$0xf]
        %v242 = vld [vmem:[%s1 + $0x24] sm:$0xf]
        %v243 = vld [vmem:[%s1 + $0x28] sm:$0xf]
        %v244 = vld [vmem:[%s1 + $0x2c] sm:$0xf]
        %v245 = vld [vmem:[%s1 + $0x30] sm:$0xf]
        %v246 = vld [vmem:[%s1 + $0x34] sm:$0xf]
        %v247 = vld [vmem:[%s1 + $0x38] sm:$0xf]
        %v248 = vld [vmem:[%s1 + $0x3c] sm:$0xf]
        %v249 = vld [vmem:[%s1 + $0x40] sm:$0xf]
        %v250 = vld [vmem:[%s1 + $0x44] sm:$0xf]
        %v251 = vld [vmem:[%s1 + $0x48] sm:$0xf]
        %v252 = vld [vmem:[%s1 + $0x4c] sm:$0xf]
        %v253 = vld [vmem:[%s1 + $0x50] sm:$0xf]
        %v254 = vld [vmem:[%s1 + $0x54] sm:$0xf]
        %v255 = vld [vmem:[%s1 + $0x58] sm:$0xf]
        %v256 = vld [vmem:[%s1 + $0x5c] sm:$0xf]
        %v257 = vld [vmem:[%s1 + $0x60] sm:$0xf]
        %v258 = vld [vmem:[%s1 + $0x64] sm:$0xf]
        %v259 = vld [vmem:[%s1 + $0x68] sm:$0xf]
        %v260 = vld [vmem:[%s1 + $0x6c] sm:$0xf]
        %v261 = vld [vmem:[%s1 + $0x70] sm:$0xf]
        %v262 = vld [vmem:[%s1 + $0x74] sm:$0xf]
        %v263 = vld [vmem:[%s1 + $0x78] sm:$0xf]
        %v264 = vld [vmem:[%s1 + $0x7c] sm:$0xf]
        %v265 = vld [vmem:[%s2] sm:$0x1]
        %v267 = vlaneseq
        %v268 = vshrl.u32 %v267, 7
        %v269 = vsub.s32 0, %v268
        %v270 = vrot.slane %v265, %v269
        %v304 = vunpack.c.l.b16 %v201
        %v305 = vunpack.c.h.b16 %v201
        %v306 = vunpack.c.l.b16 %v202
        %v307 = vunpack.c.h.b16 %v202
        %v308 = vunpack.c.l.b16 %v203
        %v309 = vunpack.c.h.b16 %v203
        %v310 = vunpack.c.l.b16 %v204
        %v311 = vunpack.c.h.b16 %v204
        %v312 = vunpack.c.l.b16 %v205
        %v313 = vunpack.c.h.b16 %v205
        %v314 = vunpack.c.l.b16 %v206
        %v315 = vunpack.c.h.b16 %v206
        %v316 = vunpack.c.l.b16 %v207
        %v317 = vunpack.c.h.b16 %v207
        %v318 = vunpack.c.l.b16 %v208
        %v319 = vunpack.c.h.b16 %v208
        %v320 = vunpack.c.l.b16 %v209
        %v321 = vunpack.c.h.b16 %v209
        %v322 = vunpack.c.l.b16 %v210
        %v323 = vunpack.c.h.b16 %v210
        %v324 = vunpack.c.l.b16 %v211
        %v325 = vunpack.c.h.b16 %v211
        %v326 = vunpack.c.l.b16 %v212
        %v327 = vunpack.c.h.b16 %v212
        %v328 = vunpack.c.l.b16 %v213
        %v329 = vunpack.c.h.b16 %v213
        %v330 = vunpack.c.l.b16 %v214
        %v331 = vunpack.c.h.b16 %v214
        %v332 = vunpack.c.l.b16 %v215
        %v333 = vunpack.c.h.b16 %v215
        %v334 = vunpack.c.l.b16 %v216
        %v335 = vunpack.c.h.b16 %v216
        %v336 = vunpack.c.l.b16 %v217
        %v337 = vunpack.c.h.b16 %v217
        %v338 = vunpack.c.l.b16 %v218
        %v339 = vunpack.c.h.b16 %v218
        %v340 = vunpack.c.l.b16 %v219
        %v341 = vunpack.c.h.b16 %v219
        %v342 = vunpack.c.l.b16 %v220
        %v343 = vunpack.c.h.b16 %v220
        %v344 = vunpack.c.l.b16 %v221
        %v345 = vunpack.c.h.b16 %v221
        %v346 = vunpack.c.l.b16 %v222
        %v347 = vunpack.c.h.b16 %v222
        %v348 = vunpack.c.l.b16 %v223
        %v349 = vunpack.c.h.b16 %v223
        %v350 = vunpack.c.l.b16 %v224
        %v351 = vunpack.c.h.b16 %v224
        %v352 = vunpack.c.l.b16 %v225
        %v353 = vunpack.c.h.b16 %v225
        %v354 = vunpack.c.l.b16 %v226
        %v355 = vunpack.c.h.b16 %v226
        %v356 = vunpack.c.l.b16 %v227
        %v357 = vunpack.c.h.b16 %v227
        %v358 = vunpack.c.l.b16 %v228
        %v359 = vunpack.c.h.b16 %v228
        %v360 = vunpack.c.l.b16 %v229
        %v361 = vunpack.c.h.b16 %v229
        %v362 = vunpack.c.l.b16 %v230
        %v363 = vunpack.c.h.b16 %v230
        %v364 = vunpack.c.l.b16 %v231
        %v365 = vunpack.c.h.b16 %v231
        %v366 = vunpack.c.l.b16 %v232
        %v367 = vunpack.c.h.b16 %v232
        %v368 = vpack.c.b16 %v306, %v304
        %v369 = vpack.c.b16 %v307, %v305
        %v370 = vpack.c.b16 %v310, %v308
        %v371 = vpack.c.b16 %v311, %v309
        %v372 = vpack.c.b16 %v314, %v312
        %v373 = vpack.c.b16 %v315, %v313
        %v374 = vpack.c.b16 %v318, %v316
        %v375 = vpack.c.b16 %v319, %v317
        %v376 = vpack.c.b16 %v322, %v320
        %v377 = vpack.c.b16 %v323, %v321
        %v378 = vpack.c.b16 %v326, %v324
        %v379 = vpack.c.b16 %v327, %v325
        %v380 = vpack.c.b16 %v330, %v328
        %v381 = vpack.c.b16 %v331, %v329
        %v382 = vpack.c.b16 %v334, %v332
        %v383 = vpack.c.b16 %v335, %v333
        %v384 = vpack.c.b16 %v338, %v336
        %v385 = vpack.c.b16 %v339, %v337
        %v386 = vpack.c.b16 %v342, %v340
        %v387 = vpack.c.b16 %v343, %v341
        %v388 = vpack.c.b16 %v346, %v344
        %v389 = vpack.c.b16 %v347, %v345
        %v390 = vpack.c.b16 %v350, %v348
        %v391 = vpack.c.b16 %v351, %v349
        %v392 = vpack.c.b16 %v354, %v352
        %v393 = vpack.c.b16 %v355, %v353
        %v394 = vpack.c.b16 %v358, %v356
        %v395 = vpack.c.b16 %v359, %v357
        %v396 = vpack.c.b16 %v362, %v360
        %v397 = vpack.c.b16 %v363, %v361
        %v398 = vpack.c.b16 %v366, %v364
        %v399 = vpack.c.b16 %v367, %v365
        %v464 = vunpack.c.l.b16 %v233
        %v465 = vunpack.c.l.b16 %v234
        %v466 = vunpack.c.l.b16 %v235
        %v467 = vunpack.c.l.b16 %v236
        %v468 = vunpack.c.l.b16 %v237
        %v469 = vunpack.c.l.b16 %v238
        %v470 = vunpack.c.l.b16 %v239
        %v471 = vunpack.c.l.b16 %v240
        %v472 = vunpack.c.l.b16 %v241
        %v473 = vunpack.c.l.b16 %v242
        %v474 = vunpack.c.l.b16 %v243
        %v475 = vunpack.c.l.b16 %v244
        %v476 = vunpack.c.l.b16 %v245
        %v477 = vunpack.c.l.b16 %v246
        %v478 = vunpack.c.l.b16 %v247
        %v479 = vunpack.c.l.b16 %v248
        %v480 = vunpack.c.l.b16 %v249
        %v481 = vunpack.c.l.b16 %v250
        %v482 = vunpack.c.l.b16 %v251
        %v483 = vunpack.c.l.b16 %v252
        %v484 = vunpack.c.l.b16 %v253
        %v485 = vunpack.c.l.b16 %v254
        %v486 = vunpack.c.l.b16 %v255
        %v487 = vunpack.c.l.b16 %v256
        %v488 = vunpack.c.l.b16 %v257
        %v489 = vunpack.c.l.b16 %v258
        %v490 = vunpack.c.l.b16 %v259
        %v491 = vunpack.c.l.b16 %v260
        %v492 = vunpack.c.l.b16 %v261
        %v493 = vunpack.c.l.b16 %v262
        %v494 = vunpack.c.l.b16 %v263
        %v495 = vunpack.c.l.b16 %v264
        %v496 = vpack.c.b16 %v465, %v464
        %v497 = vpack.c.b16 %v467, %v466
        %v498 = vpack.c.b16 %v469, %v468
        %v499 = vpack.c.b16 %v471, %v470
        %v500 = vpack.c.b16 %v473, %v472
        %v501 = vpack.c.b16 %v475, %v474
        %v502 = vpack.c.b16 %v477, %v476
        %v503 = vpack.c.b16 %v479, %v478
        %v504 = vpack.c.b16 %v481, %v480
        %v505 = vpack.c.b16 %v483, %v482
        %v506 = vpack.c.b16 %v485, %v484
        %v507 = vpack.c.b16 %v487, %v486
        %v508 = vpack.c.b16 %v489, %v488
        %v509 = vpack.c.b16 %v491, %v490
        %v510 = vpack.c.b16 %v493, %v492
        %v511 = vpack.c.b16 %v495, %v494
        %528 = vmatprep.subr.bf16.mxu0 0
        %529 = vmatpush1.bf16.msra.mxu0 %v496
        %530 = vmatprep.subr.bf16.mxu0 0
        %531 = vmatpush1.bf16.msra.mxu0 %v497
        %532 = vmatprep.subr.bf16.mxu0 0
        %533 = vmatpush1.bf16.msra.mxu0 %v498
        %534 = vmatprep.subr.bf16.mxu0 0
        %535 = vmatpush1.bf16.msra.mxu0 %v499
        %536 = vmatprep.subr.bf16.mxu0 0
        %537 = vmatpush1.bf16.msra.mxu0 %v500
        %538 = vmatprep.subr.bf16.mxu0 0
        %539 = vmatpush1.bf16.msra.mxu0 %v501
        %540 = vmatprep.subr.bf16.mxu0 0
        %541 = vmatpush1.bf16.msra.mxu0 %v502
        %542 = vmatprep.subr.bf16.mxu0 0
        %543 = vmatpush1.bf16.msra.mxu0 %v503
        %544 = vmatprep.subr.bf16.mxu0 0
        %545 = vmatpush1.bf16.msra.mxu0 %v504
        %546 = vmatprep.subr.bf16.mxu0 0
        %547 = vmatpush1.bf16.msra.mxu0 %v505
        %548 = vmatprep.subr.bf16.mxu0 0
        %549 = vmatpush1.bf16.msra.mxu0 %v506
        %550 = vmatprep.subr.bf16.mxu0 0
        %551 = vmatpush1.bf16.msra.mxu0 %v507
        %552 = vmatprep.subr.bf16.mxu0 0
        %553 = vmatpush1.bf16.msra.mxu0 %v508
        %554 = vmatprep.subr.bf16.mxu0 0
        %555 = vmatpush1.bf16.msra.mxu0 %v509
        %556 = vmatprep.subr.bf16.mxu0 0
        %557 = vmatpush1.bf16.msra.mxu0 %v510
        %558 = vmatprep.subr.bf16.mxu0 0
        %559 = vmatpush1.bf16.msra.mxu0 %v511
        %560 = vmatprep.mubr.bf16.mxu0 %v369
        %561 = vmatmul.mubr.bf16.gmra.mrb[0].mxu0 %v368
        %v562 = vpop.f32.mrb[0].mxu0
        %v563 = vadd.f32 %v270, %v562
        %v564 = vpop.f32.mrb[0].mxu0
        %v565 = vpop.f32.mrb[0].mxu0
        %v566 = vadd.f32 %v270, %v565
        %v567 = vpop.f32.mrb[0].mxu0
        %568 = vmatprep.mubr.bf16.mxu0 %v371
        %569 = vmatmul.mubr.bf16.gmra.mrb[0].mxu0 %v370
        %v570 = vpop.f32.mrb[0].mxu0
        %v571 = vadd.f32 %v270, %v570
        %v572 = vpop.f32.mrb[0].mxu0
        %v573 = vpop.f32.mrb[0].mxu0
        %v574 = vadd.f32 %v270, %v573
        %v575 = vpop.f32.mrb[0].mxu0
        %576 = vmatprep.mubr.bf16.mxu0 %v373
        %577 = vmatmul.mubr.bf16.gmra.mrb[0].mxu0 %v372
        %v578 = vpop.f32.mrb[0].mxu0
        %v579 = vadd.f32 %v270, %v578
        %v580 = vpop.f32.mrb[0].mxu0
        %v581 = vpop.f32.mrb[0].mxu0
        %v582 = vadd.f32 %v270, %v581
        %v583 = vpop.f32.mrb[0].mxu0
        %584 = vmatprep.mubr.bf16.mxu0 %v375
        %585 = vmatmul.mubr.bf16.gmra.mrb[0].mxu0 %v374
        %v586 = vpop.f32.mrb[0].mxu0
        %v587 = vadd.f32 %v270, %v586
        %v588 = vpop.f32.mrb[0].mxu0
        %v589 = vpop.f32.mrb[0].mxu0
        %v590 = vadd.f32 %v270, %v589
        %v591 = vpop.f32.mrb[0].mxu0
        %592 = vmatprep.mubr.bf16.mxu0 %v377
        %593 = vmatmul.mubr.bf16.gmra.mrb[0].mxu0 %v376
        %v594 = vpop.f32.mrb[0].mxu0
        %v595 = vadd.f32 %v270, %v594
        %v596 = vpop.f32.mrb[0].mxu0
        %v597 = vpop.f32.mrb[0].mxu0
        %v598 = vadd.f32 %v270, %v597
        %v599 = vpop.f32.mrb[0].mxu0
        %600 = vmatprep.mubr.bf16.mxu0 %v379
        %601 = vmatmul.mubr.bf16.gmra.mrb[0].mxu0 %v378
        %v602 = vpop.f32.mrb[0].mxu0
        %v603 = vadd.f32 %v270, %v602
        %v604 = vpop.f32.mrb[0].mxu0
        %v605 = vpop.f32.mrb[0].mxu0
        %v606 = vadd.f32 %v270, %v605
        %v607 = vpop.f32.mrb[0].mxu0
        %608 = vmatprep.mubr.bf16.mxu0 %v381
        %609 = vmatmul.mubr.bf16.gmra.mrb[0].mxu0 %v380
        %v610 = vpop.f32.mrb[0].mxu0
        %v611 = vadd.f32 %v270, %v610
        %v612 = vpop.f32.mrb[0].mxu0
        %v613 = vpop.f32.mrb[0].mxu0
        %v614 = vadd.f32 %v270, %v613
        %v615 = vpop.f32.mrb[0].mxu0
        %616 = vmatprep.mubr.bf16.mxu0 %v383
        %617 = vmatmul.mubr.bf16.gmra.mrb[0].mxu0 %v382
        %v618 = vpop.f32.mrb[0].mxu0
        %v619 = vadd.f32 %v270, %v618
        %v620 = vpop.f32.mrb[0].mxu0
        %v621 = vpop.f32.mrb[0].mxu0
        %v622 = vadd.f32 %v270, %v621
        %v623 = vpop.f32.mrb[0].mxu0
        %624 = vmatprep.mubr.bf16.mxu0 %v385
        %625 = vmatmul.mubr.bf16.gmra.mrb[0].mxu0 %v384
        %v626 = vpop.f32.mrb[0].mxu0
        %v627 = vadd.f32 %v270, %v626
        %v628 = vpop.f32.mrb[0].mxu0
        %v629 = vpop.f32.mrb[0].mxu0
        %v630 = vadd.f32 %v270, %v629
        %v631 = vpop.f32.mrb[0].mxu0
        %632 = vmatprep.mubr.bf16.mxu0 %v387
        %633 = vmatmul.mubr.bf16.gmra.mrb[0].mxu0 %v386
        %v634 = vpop.f32.mrb[0].mxu0
        %v635 = vadd.f32 %v270, %v634
        %v636 = vpop.f32.mrb[0].mxu0
        %v637 = vpop.f32.mrb[0].mxu0
        %v638 = vadd.f32 %v270, %v637
        %v639 = vpop.f32.mrb[0].mxu0
        %640 = vmatprep.mubr.bf16.mxu0 %v389
        %641 = vmatmul.mubr.bf16.gmra.mrb[0].mxu0 %v388
        %v642 = vpop.f32.mrb[0].mxu0
        %v643 = vadd.f32 %v270, %v642
        %v644 = vpop.f32.mrb[0].mxu0
        %v645 = vpop.f32.mrb[0].mxu0
        %v646 = vadd.f32 %v270, %v645
        %v647 = vpop.f32.mrb[0].mxu0
        %648 = vmatprep.mubr.bf16.mxu0 %v391
        %649 = vmatmul.mubr.bf16.gmra.mrb[0].mxu0 %v390
        %v650 = vpop.f32.mrb[0].mxu0
        %v651 = vadd.f32 %v270, %v650
        %v652 = vpop.f32.mrb[0].mxu0
        %v653 = vpop.f32.mrb[0].mxu0
        %v654 = vadd.f32 %v270, %v653
        %v655 = vpop.f32.mrb[0].mxu0
        %656 = vmatprep.mubr.bf16.mxu0 %v393
        %657 = vmatmul.mubr.bf16.gmra.mrb[0].mxu0 %v392
        %v658 = vpop.f32.mrb[0].mxu0
        %v659 = vadd.f32 %v270, %v658
        %v660 = vpop.f32.mrb[0].mxu0
        %v661 = vpop.f32.mrb[0].mxu0
        %v662 = vadd.f32 %v270, %v661
        %v663 = vpop.f32.mrb[0].mxu0
        %664 = vmatprep.mubr.bf16.mxu0 %v395
        %665 = vmatmul.mubr.bf16.gmra.mrb[0].mxu0 %v394
        %v666 = vpop.f32.mrb[0].mxu0
        %v667 = vadd.f32 %v270, %v666
        %v668 = vpop.f32.mrb[0].mxu0
        %v669 = vpop.f32.mrb[0].mxu0
        %v670 = vadd.f32 %v270, %v669
        %v671 = vpop.f32.mrb[0].mxu0
        %672 = vmatprep.mubr.bf16.mxu0 %v397
        %673 = vmatmul.mubr.bf16.gmra.mrb[0].mxu0 %v396
        %v674 = vpop.f32.mrb[0].mxu0
        %v675 = vadd.f32 %v270, %v674
        %v676 = vpop.f32.mrb[0].mxu0
        %v677 = vpop.f32.mrb[0].mxu0
        %v678 = vadd.f32 %v270, %v677
        %v679 = vpop.f32.mrb[0].mxu0
        %680 = vmatprep.mubr.bf16.mxu0 %v399
        %681 = vmatmul.mubr.bf16.gmra.mrb[0].mxu0 %v398
        %v682 = vpop.f32.mrb[0].mxu0
        %v683 = vadd.f32 %v270, %v682
        %v684 = vpop.f32.mrb[0].mxu0
        %v685 = vpop.f32.mrb[0].mxu0
        %v686 = vadd.f32 %v270, %v685
        %v687 = vpop.f32.mrb[0].mxu0
        %688 = vdwg.mxu0
        %v689 = vmax.f32 %v563, 0.0
        %v690 = vmax.f32 %v566, 0.0
        %v691 = vmax.f32 %v571, 0.0
        %v692 = vmax.f32 %v574, 0.0
        %v693 = vmax.f32 %v579, 0.0
        %v694 = vmax.f32 %v582, 0.0
        %v695 = vmax.f32 %v587, 0.0
        %v696 = vmax.f32 %v590, 0.0
        %v697 = vmax.f32 %v595, 0.0
        %v698 = vmax.f32 %v598, 0.0
        %v699 = vmax.f32 %v603, 0.0
        %v700 = vmax.f32 %v606, 0.0
        %v701 = vmax.f32 %v611, 0.0
        %v702 = vmax.f32 %v614, 0.0
        %v703 = vmax.f32 %v619, 0.0
        %v704 = vmax.f32 %v622, 0.0
        %v705 = vmax.f32 %v627, 0.0
        %v706 = vmax.f32 %v630, 0.0
        %v707 = vmax.f32 %v635, 0.0
        %v708 = vmax.f32 %v638, 0.0
        %v709 = vmax.f32 %v643, 0.0
        %v710 = vmax.f32 %v646, 0.0
        %v711 = vmax.f32 %v651, 0.0
        %v712 = vmax.f32 %v654, 0.0
        %v713 = vmax.f32 %v659, 0.0
        %v714 = vmax.f32 %v662, 0.0
        %v715 = vmax.f32 %v667, 0.0
        %v716 = vmax.f32 %v670, 0.0
        %v717 = vmax.f32 %v675, 0.0
        %v718 = vmax.f32 %v678, 0.0
        %v719 = vmax.f32 %v683, 0.0
        %v720 = vmax.f32 %v686, 0.0
        %v721 = vpack.c.bf16 %v690, %v689
        %v722 = vpack.c.bf16 %v692, %v691
        %v723 = vpack.c.bf16 %v694, %v693
        %v724 = vpack.c.bf16 %v696, %v695
        %v725 = vpack.c.bf16 %v698, %v697
        %v726 = vpack.c.bf16 %v700, %v699
        %v727 = vpack.c.bf16 %v702, %v701
        %v728 = vpack.c.bf16 %v704, %v703
        %v729 = vpack.c.bf16 %v706, %v705
        %v730 = vpack.c.bf16 %v708, %v707
        %v731 = vpack.c.bf16 %v710, %v709
        %v732 = vpack.c.bf16 %v712, %v711
        %v733 = vpack.c.bf16 %v714, %v713
        %v734 = vpack.c.bf16 %v716, %v715
        %v735 = vpack.c.bf16 %v718, %v717
        %v736 = vpack.c.bf16 %v720, %v719
        %v753 = vunpack.c.l.b16 %v721
        %v754 = vunpack.c.h.b16 %v721
        %v755 = vunpack.c.l.b16 %v722
        %v756 = vunpack.c.h.b16 %v722
        %v757 = vunpack.c.l.b16 %v723
        %v758 = vunpack.c.h.b16 %v723
        %v759 = vunpack.c.l.b16 %v724
        %v760 = vunpack.c.h.b16 %v724
        %v761 = vunpack.c.l.b16 %v725
        %v762 = vunpack.c.h.b16 %v725
        %v763 = vunpack.c.l.b16 %v726
        %v764 = vunpack.c.h.b16 %v726
        %v765 = vunpack.c.l.b16 %v727
        %v766 = vunpack.c.h.b16 %v727
        %v767 = vunpack.c.l.b16 %v728
        %v768 = vunpack.c.h.b16 %v728
        %v769 = vunpack.c.l.b16 %v729
        %v770 = vunpack.c.h.b16 %v729
        %v771 = vunpack.c.l.b16 %v730
        %v772 = vunpack.c.h.b16 %v730
        %v773 = vunpack.c.l.b16 %v731
        %v774 = vunpack.c.h.b16 %v731
        %v775 = vunpack.c.l.b16 %v732
        %v776 = vunpack.c.h.b16 %v732
        %v777 = vunpack.c.l.b16 %v733
        %v778 = vunpack.c.h.b16 %v733
        %v779 = vunpack.c.l.b16 %v734
        %v780 = vunpack.c.h.b16 %v734
        %v781 = vunpack.c.l.b16 %v735
        %v782 = vunpack.c.h.b16 %v735
        %v783 = vunpack.c.l.b16 %v736
        %v784 = vunpack.c.h.b16 %v736
        %v785 = vpack.c.b16 %v753, %v753
        %v786 = vpack.c.b16 %v754, %v754
        %v787 = vpack.c.b16 %v755, %v755
        %v788 = vpack.c.b16 %v756, %v756
        %v789 = vpack.c.b16 %v757, %v757
        %v790 = vpack.c.b16 %v758, %v758
        %v791 = vpack.c.b16 %v759, %v759
        %v792 = vpack.c.b16 %v760, %v760
        %v793 = vpack.c.b16 %v761, %v761
        %v794 = vpack.c.b16 %v762, %v762
        %v795 = vpack.c.b16 %v763, %v763
        %v796 = vpack.c.b16 %v764, %v764
        %v797 = vpack.c.b16 %v765, %v765
        %v798 = vpack.c.b16 %v766, %v766
        %v799 = vpack.c.b16 %v767, %v767
        %v800 = vpack.c.b16 %v768, %v768
        %v801 = vpack.c.b16 %v769, %v769
        %v802 = vpack.c.b16 %v770, %v770
        %v803 = vpack.c.b16 %v771, %v771
        %v804 = vpack.c.b16 %v772, %v772
        %v805 = vpack.c.b16 %v773, %v773
        %v806 = vpack.c.b16 %v774, %v774
        %v807 = vpack.c.b16 %v775, %v775
        %v808 = vpack.c.b16 %v776, %v776
        %v809 = vpack.c.b16 %v777, %v777
        %v810 = vpack.c.b16 %v778, %v778
        %v811 = vpack.c.b16 %v779, %v779
        %v812 = vpack.c.b16 %v780, %v780
        %v813 = vpack.c.b16 %v781, %v781
        %v814 = vpack.c.b16 %v782, %v782
        %v815 = vpack.c.b16 %v783, %v783
        %v816 = vpack.c.b16 %v784, %v784
        %vm849 = vcmask 257024
        %850 = vst.msk [vmem:[%s177] sm:$0xf] %vm849, %v785
        %851 = vst.msk [vmem:[%s177 + $0x4] sm:$0xf] %vm849, %v786
        %852 = vst.msk [vmem:[%s177 + $0x8] sm:$0xf] %vm849, %v787
        %853 = vst.msk [vmem:[%s177 + $0xc] sm:$0xf] %vm849, %v788
        %854 = vst.msk [vmem:[%s177 + $0x10] sm:$0xf] %vm849, %v789
        %855 = vst.msk [vmem:[%s177 + $0x14] sm:$0xf] %vm849, %v790
        %856 = vst.msk [vmem:[%s177 + $0x18] sm:$0xf] %vm849, %v791
        %857 = vst.msk [vmem:[%s177 + $0x1c] sm:$0xf] %vm849, %v792
        %858 = vst.msk [vmem:[%s177 + $0x20] sm:$0xf] %vm849, %v793
        %859 = vst.msk [vmem:[%s177 + $0x24] sm:$0xf] %vm849, %v794
        %860 = vst.msk [vmem:[%s177 + $0x28] sm:$0xf] %vm849, %v795
        %861 = vst.msk [vmem:[%s177 + $0x2c] sm:$0xf] %vm849, %v796
        %862 = vst.msk [vmem:[%s177 + $0x30] sm:$0xf] %vm849, %v797
        %863 = vst.msk [vmem:[%s177 + $0x34] sm:$0xf] %vm849, %v798
        %864 = vst.msk [vmem:[%s177 + $0x38] sm:$0xf] %vm849, %v799
        %865 = vst.msk [vmem:[%s177 + $0x3c] sm:$0xf] %vm849, %v800
        %866 = vst.msk [vmem:[%s177 + $0x40] sm:$0xf] %vm849, %v801
        %867 = vst.msk [vmem:[%s177 + $0x44] sm:$0xf] %vm849, %v802
        %868 = vst.msk [vmem:[%s177 + $0x48] sm:$0xf] %vm849, %v803
        %869 = vst.msk [vmem:[%s177 + $0x4c] sm:$0xf] %vm849, %v804
        %870 = vst.msk [vmem:[%s177 + $0x50] sm:$0xf] %vm849, %v805
        %871 = vst.msk [vmem:[%s177 + $0x54] sm:$0xf] %vm849, %v806
        %872 = vst.msk [vmem:[%s177 + $0x58] sm:$0xf] %vm849, %v807
        %873 = vst.msk [vmem:[%s177 + $0x5c] sm:$0xf] %vm849, %v808
        %874 = vst.msk [vmem:[%s177 + $0x60] sm:$0xf] %vm849, %v809
        %875 = vst.msk [vmem:[%s177 + $0x64] sm:$0xf] %vm849, %v810
        %876 = vst.msk [vmem:[%s177 + $0x68] sm:$0xf] %vm849, %v811
        %877 = vst.msk [vmem:[%s177 + $0x6c] sm:$0xf] %vm849, %v812
        %878 = vst.msk [vmem:[%s177 + $0x70] sm:$0xf] %vm849, %v813
        %879 = vst.msk [vmem:[%s177 + $0x74] sm:$0xf] %vm849, %v814
        %880 = vst.msk [vmem:[%s177 + $0x78] sm:$0xf] %vm849, %v815
        %881 = vst.msk [vmem:[%s177 + $0x7c] sm:$0xf] %vm849, %v816
        %s882 = sand.u32 %s90, 1
        %s883 = sand.u32 %s90, 1
        %s884 = smul.addr %s883, 128
        %s885 = scalar_lea.vmem [#allocation2], %s884
        // Predicated region
        $region33: #{dqn_forward.4} parent=31 // pred_check
          %p886 = pneg %p100
        $region34: #{dqn_forward.4} parent=31 // pred_check_branch
          %888 = sbr.rel (%p886) target = $region36
        $region35: #{dqn_forward.4} parent=31 // pred_region
          %s889 = smul.u32 32, %s14
          %s890 = ssub.s32 100, %s889
          %p891 = scmp.lt.s32.totalorder %s890, 32
          %s892 = scalar_select %p891, %s890, 32
          %s893 = smul.u32 64, %s892
          %p894 = scmp.ne.s32.totalorder 0, %s893
          %s895 = smul.addr %s889, 4
          %s896 = scalar_lea.vmem %s3, %s895
          // Predicated region
          $region37: #{dqn_forward.4} parent=35 // pred_check
            %p897 = pneg %p894
          $region38: #{dqn_forward.4} parent=35 // pred_check_branch
            %899 = sbr.rel (%p897) target = $region40
          $region39: #{dqn_forward.4} parent=35 // pred_region
            // Predicated region
            $region41: #{dqn_forward.4} parent=39 // pred_check
              _
            $region42: #{dqn_forward.4} parent=39 // pred_check_branch
              %901 = sbr.rel target = $region44
            $region43: #{dqn_forward.4} parent=39 // pred_region
              // Predicated region
              $region63: #{dqn_forward.4} parent=43 // pred_check
                _
              $region64: #{dqn_forward.4} parent=43 // pred_check_branch
                %1012 = sbr.rel (0) target = $region66
              $region65: #{dqn_forward.4} parent=43 // pred_region
                %s1014 = sshrl.u32 %s892, 5
                // While loop
                $region67: #{dqn_forward.4} parent=65 // loop_pre_header
                  _
                $region68: #{dqn_forward.4} parent=65 // loop_header
                  %s1016 = sphi 0, %s1018
                  %p1017 = scmp.ge.s32.totalorder %s1016, %s1014
                  %s1021 = sphi 0, %s1090
                  %s1022 = sphi %s885, %s1093
                  %s1023 = sphi %s896, %s1094
                $region69: #{dqn_forward.4} parent=65 // loop_header_branch
                  %1020 = sbr.rel (%p1017) target = $region73
                $region70: #{dqn_forward.4} parent=65 // loop_body
                  %v1024 = vld [vmem:[%s1022] sm:$0xf]
                  %1025 = vst [vmem:[%s1023] sm:$0xf] %v1024
                  %v1026 = vld [vmem:[%s1022 + $0x4] sm:$0xf]
                  %1027 = vst [vmem:[%s1023 + $0x4] sm:$0xf] %v1026
                  %v1028 = vld [vmem:[%s1022 + $0x8] sm:$0xf]
                  %1029 = vst [vmem:[%s1023 + $0x8] sm:$0xf] %v1028
                  %v1030 = vld [vmem:[%s1022 + $0xc] sm:$0xf]
                  %1031 = vst [vmem:[%s1023 + $0xc] sm:$0xf] %v1030
                  %v1032 = vld [vmem:[%s1022 + $0x10] sm:$0xf]
                  %1033 = vst [vmem:[%s1023 + $0x10] sm:$0xf] %v1032
                  %v1034 = vld [vmem:[%s1022 + $0x14] sm:$0xf]
                  %1035 = vst [vmem:[%s1023 + $0x14] sm:$0xf] %v1034
                  %v1036 = vld [vmem:[%s1022 + $0x18] sm:$0xf]
                  %1037 = vst [vmem:[%s1023 + $0x18] sm:$0xf] %v1036
                  %v1038 = vld [vmem:[%s1022 + $0x1c] sm:$0xf]
                  %1039 = vst [vmem:[%s1023 + $0x1c] sm:$0xf] %v1038
                  %v1040 = vld [vmem:[%s1022 + $0x20] sm:$0xf]
                  %1041 = vst [vmem:[%s1023 + $0x20] sm:$0xf] %v1040
                  %v1042 = vld [vmem:[%s1022 + $0x24] sm:$0xf]
                  %1043 = vst [vmem:[%s1023 + $0x24] sm:$0xf] %v1042
                  %v1044 = vld [vmem:[%s1022 + $0x28] sm:$0xf]
                  %1045 = vst [vmem:[%s1023 + $0x28] sm:$0xf] %v1044
                  %v1046 = vld [vmem:[%s1022 + $0x2c] sm:$0xf]
                  %1047 = vst [vmem:[%s1023 + $0x2c] sm:$0xf] %v1046
                  %v1048 = vld [vmem:[%s1022 + $0x30] sm:$0xf]
                  %1049 = vst [vmem:[%s1023 + $0x30] sm:$0xf] %v1048
                  %v1050 = vld [vmem:[%s1022 + $0x34] sm:$0xf]
                  %1051 = vst [vmem:[%s1023 + $0x34] sm:$0xf] %v1050
                  %v1052 = vld [vmem:[%s1022 + $0x38] sm:$0xf]
                  %1053 = vst [vmem:[%s1023 + $0x38] sm:$0xf] %v1052
                  %v1054 = vld [vmem:[%s1022 + $0x3c] sm:$0xf]
                  %1055 = vst [vmem:[%s1023 + $0x3c] sm:$0xf] %v1054
                  %v1056 = vld [vmem:[%s1022 + $0x40] sm:$0xf]
                  %1057 = vst [vmem:[%s1023 + $0x40] sm:$0xf] %v1056
                  %v1058 = vld [vmem:[%s1022 + $0x44] sm:$0xf]
                  %1059 = vst [vmem:[%s1023 + $0x44] sm:$0xf] %v1058
                  %v1060 = vld [vmem:[%s1022 + $0x48] sm:$0xf]
                  %1061 = vst [vmem:[%s1023 + $0x48] sm:$0xf] %v1060
                  %v1062 = vld [vmem:[%s1022 + $0x4c] sm:$0xf]
                  %1063 = vst [vmem:[%s1023 + $0x4c] sm:$0xf] %v1062
                  %v1064 = vld [vmem:[%s1022 + $0x50] sm:$0xf]
                  %1065 = vst [vmem:[%s1023 + $0x50] sm:$0xf] %v1064
                  %v1066 = vld [vmem:[%s1022 + $0x54] sm:$0xf]
                  %1067 = vst [vmem:[%s1023 + $0x54] sm:$0xf] %v1066
                  %v1068 = vld [vmem:[%s1022 + $0x58] sm:$0xf]
                  %1069 = vst [vmem:[%s1023 + $0x58] sm:$0xf] %v1068
                  %v1070 = vld [vmem:[%s1022 + $0x5c] sm:$0xf]
                  %1071 = vst [vmem:[%s1023 + $0x5c] sm:$0xf] %v1070
                  %v1072 = vld [vmem:[%s1022 + $0x60] sm:$0xf]
                  %1073 = vst [vmem:[%s1023 + $0x60] sm:$0xf] %v1072
                  %v1074 = vld [vmem:[%s1022 + $0x64] sm:$0xf]
                  %1075 = vst [vmem:[%s1023 + $0x64] sm:$0xf] %v1074
                  %v1076 = vld [vmem:[%s1022 + $0x68] sm:$0xf]
                  %1077 = vst [vmem:[%s1023 + $0x68] sm:$0xf] %v1076
                  %v1078 = vld [vmem:[%s1022 + $0x6c] sm:$0xf]
                  %1079 = vst [vmem:[%s1023 + $0x6c] sm:$0xf] %v1078
                  %v1080 = vld [vmem:[%s1022 + $0x70] sm:$0xf]
                  %1081 = vst [vmem:[%s1023 + $0x70] sm:$0xf] %v1080
                  %v1082 = vld [vmem:[%s1022 + $0x74] sm:$0xf]
                  %1083 = vst [vmem:[%s1023 + $0x74] sm:$0xf] %v1082
                  %v1084 = vld [vmem:[%s1022 + $0x78] sm:$0xf]
                  %1085 = vst [vmem:[%s1023 + $0x78] sm:$0xf] %v1084
                  %v1086 = vld [vmem:[%s1022 + $0x7c] sm:$0xf]
                  %1087 = vst [vmem:[%s1023 + $0x7c] sm:$0xf] %v1086
                  %s1088 = sadd.s32 1, %s1021
                  %p1089 = scmp.ge.s32.totalorder %s1088, %s1014
                  %s1090 = scalar_select %p1089, 0, %s1088
                  %s1091 = smul.u32 %s1090, 128
                  %s1092 = smul.u32 %s1090, 128
                  %s1093 = scalar_lea.vmem %s885, %s1091 [#allocation2]
                  %s1094 = scalar_lea.vmem %s896, %s1092
                $region71: #{dqn_forward.4} parent=65 // loop_footer
                  %s1018 = sadd.s32 %s1016, 1
                $region72: #{dqn_forward.4} parent=65 // loop_footer_branch
                  %1015 = sbr.rel target = $region68
                $region73: #{dqn_forward.4} parent=65 // loop_exit
                  _
                %s1095 = sshrl.u32 %s892, 5
                %s1096 = sand.u32 %s892, 31
                %s1097 = smul.u32 %s1095, 32
                %s1098 = smul.u32 4, %s1097
                %s1099 = scalar_lea.vmem %s885, %s1098 [#allocation2]
                %s1100 = smul.u32 4, %s1097
                %s1101 = scalar_lea.vmem %s896, %s1100
                // While loop
                $region74: #{dqn_forward.4} parent=65 // loop_pre_header
                  _
                $region75: #{dqn_forward.4} parent=65 // loop_header
                  %s1103 = sphi 0, %s1105
                  %p1104 = scmp.ge.s32.totalorder %s1103, %s1096
                  %s1108 = sphi 0, %s1115
                  %s1109 = sphi %s1099, %s1118
                  %s1110 = sphi %s1101, %s1119
                $region76: #{dqn_forward.4} parent=65 // loop_header_branch
                  %1107 = sbr.rel (%p1104) target = $region80
                $region77: #{dqn_forward.4} parent=65 // loop_body
                  %v1111 = vld [vmem:[%s1109] sm:$0xf]
                  %1112 = vst [vmem:[%s1110] sm:$0xf] %v1111
                  %s1113 = sadd.s32 1, %s1108
                  %p1114 = scmp.ge.s32.totalorder %s1113, %s1096
                  %s1115 = scalar_select %p1114, 0, %s1113
                  %s1116 = smul.u32 %s1115, 4
                  %s1117 = smul.u32 %s1115, 4
                  %s1118 = scalar_lea.vmem %s1099, %s1116 [#allocation2]
                  %s1119 = scalar_lea.vmem %s1101, %s1117
                $region78: #{dqn_forward.4} parent=65 // loop_footer
                  %s1105 = sadd.s32 %s1103, 1
                $region79: #{dqn_forward.4} parent=65 // loop_footer_branch
                  %1102 = sbr.rel target = $region75
                $region80: #{dqn_forward.4} parent=65 // loop_exit
                  _
              $region66: #{dqn_forward.4} parent=43 // pred_fallthru
                _
            $region44: #{dqn_forward.4} parent=39 // pred_fallthru
              _
            // Predicated region
            $region45: #{dqn_forward.4} parent=39 // pred_check
              _
            $region46: #{dqn_forward.4} parent=39 // pred_check_branch
              %903 = sbr.rel (0) target = $region48
            $region47: #{dqn_forward.4} parent=39 // pred_region
              %s905 = sshrl.u32 %s892, 5
              // While loop
              $region49: #{dqn_forward.4} parent=47 // loop_pre_header
                _
              $region50: #{dqn_forward.4} parent=47 // loop_header
                %s907 = sphi 0, %s909
                %p908 = scmp.ge.s32.totalorder %s907, %s905
                %s912 = sphi 0, %s981
                %s913 = sphi %s885, %s984
                %s914 = sphi %s896, %s985
              $region51: #{dqn_forward.4} parent=47 // loop_header_branch
                %911 = sbr.rel (%p908) target = $region55
              $region52: #{dqn_forward.4} parent=47 // loop_body
                %v915 = vld [vmem:[%s913] sm:$0xf]
                %916 = vst [vmem:[%s914] sm:$0xf] %v915
                %v917 = vld [vmem:[%s913 + $0x4] sm:$0xf]
                %918 = vst [vmem:[%s914 + $0x4] sm:$0xf] %v917
                %v919 = vld [vmem:[%s913 + $0x8] sm:$0xf]
                %920 = vst [vmem:[%s914 + $0x8] sm:$0xf] %v919
                %v921 = vld [vmem:[%s913 + $0xc] sm:$0xf]
                %922 = vst [vmem:[%s914 + $0xc] sm:$0xf] %v921
                %v923 = vld [vmem:[%s913 + $0x10] sm:$0xf]
                %924 = vst [vmem:[%s914 + $0x10] sm:$0xf] %v923
                %v925 = vld [vmem:[%s913 + $0x14] sm:$0xf]
                %926 = vst [vmem:[%s914 + $0x14] sm:$0xf] %v925
                %v927 = vld [vmem:[%s913 + $0x18] sm:$0xf]
                %928 = vst [vmem:[%s914 + $0x18] sm:$0xf] %v927
                %v929 = vld [vmem:[%s913 + $0x1c] sm:$0xf]
                %930 = vst [vmem:[%s914 + $0x1c] sm:$0xf] %v929
                %v931 = vld [vmem:[%s913 + $0x20] sm:$0xf]
                %932 = vst [vmem:[%s914 + $0x20] sm:$0xf] %v931
                %v933 = vld [vmem:[%s913 + $0x24] sm:$0xf]
                %934 = vst [vmem:[%s914 + $0x24] sm:$0xf] %v933
                %v935 = vld [vmem:[%s913 + $0x28] sm:$0xf]
                %936 = vst [vmem:[%s914 + $0x28] sm:$0xf] %v935
                %v937 = vld [vmem:[%s913 + $0x2c] sm:$0xf]
                %938 = vst [vmem:[%s914 + $0x2c] sm:$0xf] %v937
                %v939 = vld [vmem:[%s913 + $0x30] sm:$0xf]
                %940 = vst [vmem:[%s914 + $0x30] sm:$0xf] %v939
                %v941 = vld [vmem:[%s913 + $0x34] sm:$0xf]
                %942 = vst [vmem:[%s914 + $0x34] sm:$0xf] %v941
                %v943 = vld [vmem:[%s913 + $0x38] sm:$0xf]
                %944 = vst [vmem:[%s914 + $0x38] sm:$0xf] %v943
                %v945 = vld [vmem:[%s913 + $0x3c] sm:$0xf]
                %946 = vst [vmem:[%s914 + $0x3c] sm:$0xf] %v945
                %v947 = vld [vmem:[%s913 + $0x40] sm:$0xf]
                %948 = vst [vmem:[%s914 + $0x40] sm:$0xf] %v947
                %v949 = vld [vmem:[%s913 + $0x44] sm:$0xf]
                %950 = vst [vmem:[%s914 + $0x44] sm:$0xf] %v949
                %v951 = vld [vmem:[%s913 + $0x48] sm:$0xf]
                %952 = vst [vmem:[%s914 + $0x48] sm:$0xf] %v951
                %v953 = vld [vmem:[%s913 + $0x4c] sm:$0xf]
                %954 = vst [vmem:[%s914 + $0x4c] sm:$0xf] %v953
                %v955 = vld [vmem:[%s913 + $0x50] sm:$0xf]
                %956 = vst [vmem:[%s914 + $0x50] sm:$0xf] %v955
                %v957 = vld [vmem:[%s913 + $0x54] sm:$0xf]
                %958 = vst [vmem:[%s914 + $0x54] sm:$0xf] %v957
                %v959 = vld [vmem:[%s913 + $0x58] sm:$0xf]
                %960 = vst [vmem:[%s914 + $0x58] sm:$0xf] %v959
                %v961 = vld [vmem:[%s913 + $0x5c] sm:$0xf]
                %962 = vst [vmem:[%s914 + $0x5c] sm:$0xf] %v961
                %v963 = vld [vmem:[%s913 + $0x60] sm:$0xf]
                %964 = vst [vmem:[%s914 + $0x60] sm:$0xf] %v963
                %v965 = vld [vmem:[%s913 + $0x64] sm:$0xf]
                %966 = vst [vmem:[%s914 + $0x64] sm:$0xf] %v965
                %v967 = vld [vmem:[%s913 + $0x68] sm:$0xf]
                %968 = vst [vmem:[%s914 + $0x68] sm:$0xf] %v967
                %v969 = vld [vmem:[%s913 + $0x6c] sm:$0xf]
                %970 = vst [vmem:[%s914 + $0x6c] sm:$0xf] %v969
                %v971 = vld [vmem:[%s913 + $0x70] sm:$0xf]
                %972 = vst [vmem:[%s914 + $0x70] sm:$0xf] %v971
                %v973 = vld [vmem:[%s913 + $0x74] sm:$0xf]
                %974 = vst [vmem:[%s914 + $0x74] sm:$0xf] %v973
                %v975 = vld [vmem:[%s913 + $0x78] sm:$0xf]
                %976 = vst [vmem:[%s914 + $0x78] sm:$0xf] %v975
                %v977 = vld [vmem:[%s913 + $0x7c] sm:$0xf]
                %978 = vst [vmem:[%s914 + $0x7c] sm:$0xf] %v977
                %s979 = sadd.s32 1, %s912
                %p980 = scmp.ge.s32.totalorder %s979, %s905
                %s981 = scalar_select %p980, 0, %s979
                %s982 = smul.u32 %s981, 128
                %s983 = smul.u32 %s981, 128
                %s984 = scalar_lea.vmem %s885, %s982 [#allocation2]
                %s985 = scalar_lea.vmem %s896, %s983
              $region53: #{dqn_forward.4} parent=47 // loop_footer
                %s909 = sadd.s32 %s907, 1
              $region54: #{dqn_forward.4} parent=47 // loop_footer_branch
                %906 = sbr.rel target = $region50
              $region55: #{dqn_forward.4} parent=47 // loop_exit
                _
              %s986 = sshrl.u32 %s892, 5
              %s987 = sand.u32 %s892, 31
              %s988 = smul.u32 %s986, 32
              %s989 = smul.u32 4, %s988
              %s990 = scalar_lea.vmem %s885, %s989 [#allocation2]
              %s991 = smul.u32 4, %s988
              %s992 = scalar_lea.vmem %s896, %s991
              // While loop
              $region56: #{dqn_forward.4} parent=47 // loop_pre_header
                _
              $region57: #{dqn_forward.4} parent=47 // loop_header
                %s994 = sphi 0, %s996
                %p995 = scmp.ge.s32.totalorder %s994, %s987
                %s999 = sphi 0, %s1006
                %s1000 = sphi %s990, %s1009
                %s1001 = sphi %s992, %s1010
              $region58: #{dqn_forward.4} parent=47 // loop_header_branch
                %998 = sbr.rel (%p995) target = $region62
              $region59: #{dqn_forward.4} parent=47 // loop_body
                %v1002 = vld [vmem:[%s1000] sm:$0xf]
                %1003 = vst [vmem:[%s1001] sm:$0xf] %v1002
                %s1004 = sadd.s32 1, %s999
                %p1005 = scmp.ge.s32.totalorder %s1004, %s987
                %s1006 = scalar_select %p1005, 0, %s1004
                %s1007 = smul.u32 %s1006, 4
                %s1008 = smul.u32 %s1006, 4
                %s1009 = scalar_lea.vmem %s990, %s1007 [#allocation2]
                %s1010 = scalar_lea.vmem %s992, %s1008
              $region60: #{dqn_forward.4} parent=47 // loop_footer
                %s996 = sadd.s32 %s994, 1
              $region61: #{dqn_forward.4} parent=47 // loop_footer_branch
                %993 = sbr.rel target = $region57
              $region62: #{dqn_forward.4} parent=47 // loop_exit
                _
            $region48: #{dqn_forward.4} parent=39 // pred_fallthru
              _
          $region40: #{dqn_forward.4} parent=35 // pred_fallthru
            _
          %1120 = vnop
        $region36: #{dqn_forward.4} parent=31 // pred_fallthru
          _
      $region32: #{dqn_forward.4} parent=5 // pred_fallthru
        _
      %p1121 = scmp.le.s32.totalorder 2, %s9
      // Predicated region
      $region81: #{dqn_forward.4} parent=5 // pred_check
        %p1122 = pneg %p1121
      $region82: #{dqn_forward.4} parent=5 // pred_check_branch
        %1124 = sbr.rel (%p1122) target = $region84
      $region83: #{dqn_forward.4} parent=5 // pred_region
        %s1125 = ssub.s32 %s9, 2
        // Predicated region
        $region85: #{dqn_forward.4} parent=83 // pred_check
          %p1126 = pneg %p106
        $region86: #{dqn_forward.4} parent=83 // pred_check_branch
          %1128 = sbr.rel (%p1126) target = $region88
        $region87: #{dqn_forward.4} parent=83 // pred_region
          %s1129 = sand.u32 %s91, 1
          %s1130 = sand.u32 %s91, 1
          %s1131 = smul.addr %s1130, 128
          %s1132 = scalar_lea.vmem [#allocation2], %s1131
        $region88: #{dqn_forward.4} parent=83 // pred_fallthru
          _
      $region84: #{dqn_forward.4} parent=5 // pred_fallthru
        _
    $region6: #{dqn_forward.4} parent=1 // loop_footer
      %s13 = sadd.s32 1, %s9
    $region7: #{dqn_forward.4} parent=1 // loop_footer_branch
      %8 = sbr.rel target = $region3
    $region8: #{dqn_forward.4} parent=1 // loop_exit
      _

// kernel: dqn_forward.5
$region0: #{dqn_forward.5}
  #allocation0 [shape = 'u32[]', space=smem, size = 0x4, offset = 0x4, fixed_abs, tag = 'smem constant byte address 0x4 - core index']
  #allocation1 [shape = 'u32[144,128]{1,0:T(1,128)}', space=vmem, size = 0x12000, scoped, tag = 'internal scratch']
  %s0 = inlined_call_operand.vmem [shape: bf16[162,512], index: 0, kind: input, shape index: {}]
  %s1 = inlined_call_operand.vmem [shape: bf16[512,64], index: 1, kind: input, shape index: {}]
  %s2 = inlined_call_operand.vmem [shape: f32[1,64], index: 2, kind: input, shape index: {}]
  %s3 = inlined_call_operand.vmem [shape: bf16[162,64], index: 3, kind: output, shape index: {}]
  %s4 = sld [smem:[#allocation0]]
  $region22: #{dqn_forward.5} parent=0
    _
  %s6 = ssub.s32 1, %s4
  %s7 = scalar_select 0, %s6, %s4
  // Predicated region
  $region2: #{dqn_forward.5} parent=0 // pred_check
    _
  $region3: #{dqn_forward.5} parent=0 // pred_check_branch
    %9 = sbr.rel (0) target = $region5
  $region4: #{dqn_forward.5} parent=0 // pred_region
    _
  $region5: #{dqn_forward.5} parent=0 // pred_fallthru
    _
  // Predicated region
  $region6: #{dqn_forward.5} parent=0 // pred_check
    _
  $region7: #{dqn_forward.5} parent=0 // pred_check_branch
    %11 = sbr.rel (0) target = $region9
  $region8: #{dqn_forward.5} parent=0 // pred_region
    _
  $region9: #{dqn_forward.5} parent=0 // pred_fallthru
    _
  // Predicated region
  $region10: #{dqn_forward.5} parent=0 // pred_check
    _
  $region11: #{dqn_forward.5} parent=0 // pred_check_branch
    %13 = sbr.rel (0) target = $region13
  $region12: #{dqn_forward.5} parent=0 // pred_region
    _
  $region13: #{dqn_forward.5} parent=0 // pred_fallthru
    _
  %v15 = vld [vmem:[%s0] sm:$0xff]
  %v16 = vld [vmem:[%s0 + $0x8] sm:$0xff]
  %v17 = vld [vmem:[%s0 + $0x10] sm:$0xff]
  %v18 = vld [vmem:[%s0 + $0x18] sm:$0xff]
  %v19 = vld [vmem:[%s0 + $0x20] sm:$0xff]
  %v20 = vld [vmem:[%s0 + $0x28] sm:$0xff]
  %v21 = vld [vmem:[%s0 + $0x30] sm:$0xff]
  %v22 = vld [vmem:[%s0 + $0x38] sm:$0xff]
  %v23 = vld [vmem:[%s0 + $0x40] sm:$0xff]
  %v24 = vld [vmem:[%s0 + $0x48] sm:$0xff]
  %v25 = vld [vmem:[%s0 + $0x50] sm:$0xff]
  %v26 = vld [vmem:[%s0 + $0x58] sm:$0xff]
  %v27 = vld [vmem:[%s0 + $0x60] sm:$0xff]
  %v28 = vld [vmem:[%s0 + $0x68] sm:$0xff]
  %v29 = vld [vmem:[%s0 + $0x70] sm:$0xff]
  %v30 = vld [vmem:[%s0 + $0x78] sm:$0xff]
  %v31 = vld [vmem:[%s0 + $0x80] sm:$0xff]
  %v32 = vld [vmem:[%s0 + $0x88] sm:$0xff]
  %v33 = vld [vmem:[%s0 + $0x90] sm:$0xff]
  %v34 = vld [vmem:[%s0 + $0x98] sm:$0xff]
  %v35 = vld [vmem:[%s0 + $0xa0] sm:$0xff]
  %v36 = vld [vmem:[%s0 + $0xa8] sm:$0xff]
  %v37 = vld [vmem:[%s0 + $0xb0] sm:$0xff]
  %v38 = vld [vmem:[%s0 + $0xb8] sm:$0xff]
  %v39 = vld [vmem:[%s0 + $0xc0] sm:$0xff]
  %v40 = vld [vmem:[%s0 + $0xc8] sm:$0xff]
  %v41 = vld [vmem:[%s0 + $0xd0] sm:$0xff]
  %v42 = vld [vmem:[%s0 + $0xd8] sm:$0xff]
  %v43 = vld [vmem:[%s0 + $0xe0] sm:$0xff]
  %v44 = vld [vmem:[%s0 + $0xe8] sm:$0xff]
  %v45 = vld [vmem:[%s0 + $0xf0] sm:$0xff]
  %v46 = vld [vmem:[%s0 + $0xf8] sm:$0xff]
  %v47 = vld [vmem:[%s0 + $0x100] sm:$0xff]
  %v48 = vld [vmem:[%s0 + $0x108] sm:$0xff]
  %v49 = vld [vmem:[%s0 + $0x110] sm:$0xff]
  %v50 = vld [vmem:[%s0 + $0x118] sm:$0xff]
  %v51 = vld [vmem:[%s0 + $0x120] sm:$0xff]
  %v52 = vld [vmem:[%s0 + $0x128] sm:$0xff]
  %v53 = vld [vmem:[%s0 + $0x130] sm:$0xff]
  %v54 = vld [vmem:[%s0 + $0x138] sm:$0xff]
  %v55 = vld [vmem:[%s0 + $0x140] sm:$0x11]
  %v56 = vld [vmem:[%s0 + $0x148] sm:$0x11]
  %v57 = vld [vmem:[%s1] sm:$0xf]
  %v58 = vld [vmem:[%s1 + $0x4] sm:$0xf]
  %v59 = vld [vmem:[%s1 + $0x8] sm:$0xf]
  %v60 = vld [vmem:[%s1 + $0xc] sm:$0xf]
  %v61 = vld [vmem:[%s1 + $0x10] sm:$0xf]
  %v62 = vld [vmem:[%s1 + $0x14] sm:$0xf]
  %v63 = vld [vmem:[%s1 + $0x18] sm:$0xf]
  %v64 = vld [vmem:[%s1 + $0x1c] sm:$0xf]
  %v65 = vld [vmem:[%s1 + $0x20] sm:$0xf]
  %v66 = vld [vmem:[%s1 + $0x24] sm:$0xf]
  %v67 = vld [vmem:[%s1 + $0x28] sm:$0xf]
  %v68 = vld [vmem:[%s1 + $0x2c] sm:$0xf]
  %v69 = vld [vmem:[%s1 + $0x30] sm:$0xf]
  %v70 = vld [vmem:[%s1 + $0x34] sm:$0xf]
  %v71 = vld [vmem:[%s1 + $0x38] sm:$0xf]
  %v72 = vld [vmem:[%s1 + $0x3c] sm:$0xf]
  %v73 = vld [vmem:[%s1 + $0x40] sm:$0xf]
  %v74 = vld [vmem:[%s1 + $0x44] sm:$0xf]
  %v75 = vld [vmem:[%s1 + $0x48] sm:$0xf]
  %v76 = vld [vmem:[%s1 + $0x4c] sm:$0xf]
  %v77 = vld [vmem:[%s1 + $0x50] sm:$0xf]
  %v78 = vld [vmem:[%s1 + $0x54] sm:$0xf]
  %v79 = vld [vmem:[%s1 + $0x58] sm:$0xf]
  %v80 = vld [vmem:[%s1 + $0x5c] sm:$0xf]
  %v81 = vld [vmem:[%s1 + $0x60] sm:$0xf]
  %v82 = vld [vmem:[%s1 + $0x64] sm:$0xf]
  %v83 = vld [vmem:[%s1 + $0x68] sm:$0xf]
  %v84 = vld [vmem:[%s1 + $0x6c] sm:$0xf]
  %v85 = vld [vmem:[%s1 + $0x70] sm:$0xf]
  %v86 = vld [vmem:[%s1 + $0x74] sm:$0xf]
  %v87 = vld [vmem:[%s1 + $0x78] sm:$0xf]
  %v88 = vld [vmem:[%s1 + $0x7c] sm:$0xf]
  %v89 = vld [vmem:[%s1 + $0x80] sm:$0xf]
  %v90 = vld [vmem:[%s1 + $0x84] sm:$0xf]
  %v91 = vld [vmem:[%s1 + $0x88] sm:$0xf]
  %v92 = vld [vmem:[%s1 + $0x8c] sm:$0xf]
  %v93 = vld [vmem:[%s1 + $0x90] sm:$0xf]
  %v94 = vld [vmem:[%s1 + $0x94] sm:$0xf]
  %v95 = vld [vmem:[%s1 + $0x98] sm:$0xf]
  %v96 = vld [vmem:[%s1 + $0x9c] sm:$0xf]
  %v97 = vld [vmem:[%s1 + $0xa0] sm:$0xf]
  %v98 = vld [vmem:[%s1 + $0xa4] sm:$0xf]
  %v99 = vld [vmem:[%s1 + $0xa8] sm:$0xf]
  %v100 = vld [vmem:[%s1 + $0xac] sm:$0xf]
  %v101 = vld [vmem:[%s1 + $0xb0] sm:$0xf]
  %v102 = vld [vmem:[%s1 + $0xb4] sm:$0xf]
  %v103 = vld [vmem:[%s1 + $0xb8] sm:$0xf]
  %v104 = vld [vmem:[%s1 + $0xbc] sm:$0xf]
  %v105 = vld [vmem:[%s1 + $0xc0] sm:$0xf]
  %v106 = vld [vmem:[%s1 + $0xc4] sm:$0xf]
  %v107 = vld [vmem:[%s1 + $0xc8] sm:$0xf]
  %v108 = vld [vmem:[%s1 + $0xcc] sm:$0xf]
  %v109 = vld [vmem:[%s1 + $0xd0] sm:$0xf]
  %v110 = vld [vmem:[%s1 + $0xd4] sm:$0xf]
  %v111 = vld [vmem:[%s1 + $0xd8] sm:$0xf]
  %v112 = vld [vmem:[%s1 + $0xdc] sm:$0xf]
  %v113 = vld [vmem:[%s1 + $0xe0] sm:$0xf]
  %v114 = vld [vmem:[%s1 + $0xe4] sm:$0xf]
  %v115 = vld [vmem:[%s1 + $0xe8] sm:$0xf]
  %v116 = vld [vmem:[%s1 + $0xec] sm:$0xf]
  %v117 = vld [vmem:[%s1 + $0xf0] sm:$0xf]
  %v118 = vld [vmem:[%s1 + $0xf4] sm:$0xf]
  %v119 = vld [vmem:[%s1 + $0xf8] sm:$0xf]
  %v120 = vld [vmem:[%s1 + $0xfc] sm:$0xf]
  %v121 = vld [vmem:[%s2] sm:$0x1]
  %v123 = vlaneseq
  %v124 = vshrl.u32 %v123, 7
  %v125 = vsub.s32 0, %v124
  %v126 = vrot.slane %v121, %v125
  %v170 = vunpack.c.l.b16 %v15
  %v171 = vunpack.c.h.b16 %v15
  %v172 = vunpack.c.l.b16 %v16
  %v173 = vunpack.c.h.b16 %v16
  %v174 = vunpack.c.l.b16 %v17
  %v175 = vunpack.c.h.b16 %v17
  %v176 = vunpack.c.l.b16 %v18
  %v177 = vunpack.c.h.b16 %v18
  %v178 = vunpack.c.l.b16 %v19
  %v179 = vunpack.c.h.b16 %v19
  %v180 = vunpack.c.l.b16 %v20
  %v181 = vunpack.c.h.b16 %v20
  %v182 = vunpack.c.l.b16 %v21
  %v183 = vunpack.c.h.b16 %v21
  %v184 = vunpack.c.l.b16 %v22
  %v185 = vunpack.c.h.b16 %v22
  %v186 = vunpack.c.l.b16 %v23
  %v187 = vunpack.c.h.b16 %v23
  %v188 = vunpack.c.l.b16 %v24
  %v189 = vunpack.c.h.b16 %v24
  %v190 = vunpack.c.l.b16 %v25
  %v191 = vunpack.c.h.b16 %v25
  %v192 = vunpack.c.l.b16 %v26
  %v193 = vunpack.c.h.b16 %v26
  %v194 = vunpack.c.l.b16 %v27
  %v195 = vunpack.c.h.b16 %v27
  %v196 = vunpack.c.l.b16 %v28
  %v197 = vunpack.c.h.b16 %v28
  %v198 = vunpack.c.l.b16 %v29
  %v199 = vunpack.c.h.b16 %v29
  %v200 = vunpack.c.l.b16 %v30
  %v201 = vunpack.c.h.b16 %v30
  %v202 = vunpack.c.l.b16 %v31
  %v203 = vunpack.c.h.b16 %v31
  %v204 = vunpack.c.l.b16 %v32
  %v205 = vunpack.c.h.b16 %v32
  %v206 = vunpack.c.l.b16 %v33
  %v207 = vunpack.c.h.b16 %v33
  %v208 = vunpack.c.l.b16 %v34
  %v209 = vunpack.c.h.b16 %v34
  %v210 = vunpack.c.l.b16 %v35
  %v211 = vunpack.c.h.b16 %v35
  %v212 = vunpack.c.l.b16 %v36
  %v213 = vunpack.c.h.b16 %v36
  %v214 = vunpack.c.l.b16 %v37
  %v215 = vunpack.c.h.b16 %v37
  %v216 = vunpack.c.l.b16 %v38
  %v217 = vunpack.c.h.b16 %v38
  %v218 = vunpack.c.l.b16 %v39
  %v219 = vunpack.c.h.b16 %v39
  %v220 = vunpack.c.l.b16 %v40
  %v221 = vunpack.c.h.b16 %v40
  %v222 = vunpack.c.l.b16 %v41
  %v223 = vunpack.c.h.b16 %v41
  %v224 = vunpack.c.l.b16 %v42
  %v225 = vunpack.c.h.b16 %v42
  %v226 = vunpack.c.l.b16 %v43
  %v227 = vunpack.c.h.b16 %v43
  %v228 = vunpack.c.l.b16 %v44
  %v229 = vunpack.c.h.b16 %v44
  %v230 = vunpack.c.l.b16 %v45
  %v231 = vunpack.c.h.b16 %v45
  %v232 = vunpack.c.l.b16 %v46
  %v233 = vunpack.c.h.b16 %v46
  %v234 = vunpack.c.l.b16 %v47
  %v235 = vunpack.c.h.b16 %v47
  %v236 = vunpack.c.l.b16 %v48
  %v237 = vunpack.c.h.b16 %v48
  %v238 = vunpack.c.l.b16 %v49
  %v239 = vunpack.c.h.b16 %v49
  %v240 = vunpack.c.l.b16 %v50
  %v241 = vunpack.c.h.b16 %v50
  %v242 = vunpack.c.l.b16 %v51
  %v243 = vunpack.c.h.b16 %v51
  %v244 = vunpack.c.l.b16 %v52
  %v245 = vunpack.c.h.b16 %v52
  %v246 = vunpack.c.l.b16 %v53
  %v247 = vunpack.c.h.b16 %v53
  %v248 = vunpack.c.l.b16 %v54
  %v249 = vunpack.c.h.b16 %v54
  %v250 = vunpack.c.l.b16 %v55
  %v251 = vunpack.c.h.b16 %v55
  %v252 = vunpack.c.l.b16 %v56
  %v253 = vunpack.c.h.b16 %v56
  %v254 = vpack.c.b16 %v174, %v170
  %v255 = vpack.c.b16 %v175, %v171
  %v256 = vpack.c.b16 %v176, %v172
  %v257 = vpack.c.b16 %v177, %v173
  %v258 = vpack.c.b16 %v182, %v178
  %v259 = vpack.c.b16 %v183, %v179
  %v260 = vpack.c.b16 %v184, %v180
  %v261 = vpack.c.b16 %v185, %v181
  %v262 = vpack.c.b16 %v190, %v186
  %v263 = vpack.c.b16 %v191, %v187
  %v264 = vpack.c.b16 %v192, %v188
  %v265 = vpack.c.b16 %v193, %v189
  %v266 = vpack.c.b16 %v198, %v194
  %v267 = vpack.c.b16 %v199, %v195
  %v268 = vpack.c.b16 %v200, %v196
  %v269 = vpack.c.b16 %v201, %v197
  %v270 = vpack.c.b16 %v206, %v202
  %v271 = vpack.c.b16 %v207, %v203
  %v272 = vpack.c.b16 %v208, %v204
  %v273 = vpack.c.b16 %v209, %v205
  %v274 = vpack.c.b16 %v214, %v210
  %v275 = vpack.c.b16 %v215, %v211
  %v276 = vpack.c.b16 %v216, %v212
  %v277 = vpack.c.b16 %v217, %v213
  %v278 = vpack.c.b16 %v222, %v218
  %v279 = vpack.c.b16 %v223, %v219
  %v280 = vpack.c.b16 %v224, %v220
  %v281 = vpack.c.b16 %v225, %v221
  %v282 = vpack.c.b16 %v230, %v226
  %v283 = vpack.c.b16 %v231, %v227
  %v284 = vpack.c.b16 %v232, %v228
  %v285 = vpack.c.b16 %v233, %v229
  %v286 = vpack.c.b16 %v238, %v234
  %v287 = vpack.c.b16 %v239, %v235
  %v288 = vpack.c.b16 %v240, %v236
  %v289 = vpack.c.b16 %v241, %v237
  %v290 = vpack.c.b16 %v246, %v242
  %v291 = vpack.c.b16 %v247, %v243
  %v292 = vpack.c.b16 %v248, %v244
  %v293 = vpack.c.b16 %v249, %v245
  %v294 = vpack.c.b16 %v250, %v250
  %v295 = vpack.c.b16 %v251, %v251
  %v296 = vpack.c.b16 %v252, %v252
  %v297 = vpack.c.b16 %v253, %v253
  %v406 = vunpack.c.l.b16 %v57
  %v407 = vunpack.c.l.b16 %v58
  %v408 = vunpack.c.l.b16 %v59
  %v409 = vunpack.c.l.b16 %v60
  %v410 = vunpack.c.l.b16 %v61
  %v411 = vunpack.c.l.b16 %v62
  %v412 = vunpack.c.l.b16 %v63
  %v413 = vunpack.c.l.b16 %v64
  %v414 = vunpack.c.l.b16 %v65
  %v415 = vunpack.c.l.b16 %v66
  %v416 = vunpack.c.l.b16 %v67
  %v417 = vunpack.c.l.b16 %v68
  %v418 = vunpack.c.l.b16 %v69
  %v419 = vunpack.c.l.b16 %v70
  %v420 = vunpack.c.l.b16 %v71
  %v421 = vunpack.c.l.b16 %v72
  %v422 = vunpack.c.l.b16 %v73
  %v423 = vunpack.c.l.b16 %v74
  %v424 = vunpack.c.l.b16 %v75
  %v425 = vunpack.c.l.b16 %v76
  %v426 = vunpack.c.l.b16 %v77
  %v427 = vunpack.c.l.b16 %v78
  %v428 = vunpack.c.l.b16 %v79
  %v429 = vunpack.c.l.b16 %v80
  %v430 = vunpack.c.l.b16 %v81
  %v431 = vunpack.c.l.b16 %v82
  %v432 = vunpack.c.l.b16 %v83
  %v433 = vunpack.c.l.b16 %v84
  %v434 = vunpack.c.l.b16 %v85
  %v435 = vunpack.c.l.b16 %v86
  %v436 = vunpack.c.l.b16 %v87
  %v437 = vunpack.c.l.b16 %v88
  %v438 = vunpack.c.l.b16 %v89
  %v439 = vunpack.c.l.b16 %v90
  %v440 = vunpack.c.l.b16 %v91
  %v441 = vunpack.c.l.b16 %v92
  %v442 = vunpack.c.l.b16 %v93
  %v443 = vunpack.c.l.b16 %v94
  %v444 = vunpack.c.l.b16 %v95
  %v445 = vunpack.c.l.b16 %v96
  %v446 = vunpack.c.l.b16 %v97
  %v447 = vunpack.c.l.b16 %v98
  %v448 = vunpack.c.l.b16 %v99
  %v449 = vunpack.c.l.b16 %v100
  %v450 = vunpack.c.l.b16 %v101
  %v451 = vunpack.c.l.b16 %v102
  %v452 = vunpack.c.l.b16 %v103
  %v453 = vunpack.c.l.b16 %v104
  %v454 = vunpack.c.l.b16 %v105
  %v455 = vunpack.c.l.b16 %v106
  %v456 = vunpack.c.l.b16 %v107
  %v457 = vunpack.c.l.b16 %v108
  %v458 = vunpack.c.l.b16 %v109
  %v459 = vunpack.c.l.b16 %v110
  %v460 = vunpack.c.l.b16 %v111
  %v461 = vunpack.c.l.b16 %v112
  %v462 = vunpack.c.l.b16 %v113
  %v463 = vunpack.c.l.b16 %v114
  %v464 = vunpack.c.l.b16 %v115
  %v465 = vunpack.c.l.b16 %v116
  %v466 = vunpack.c.l.b16 %v117
  %v467 = vunpack.c.l.b16 %v118
  %v468 = vunpack.c.l.b16 %v119
  %v469 = vunpack.c.l.b16 %v120
  %v470 = vpack.c.b16 %v407, %v406
  %v471 = vpack.c.b16 %v409, %v408
  %v472 = vpack.c.b16 %v411, %v410
  %v473 = vpack.c.b16 %v413, %v412
  %v474 = vpack.c.b16 %v415, %v414
  %v475 = vpack.c.b16 %v417, %v416
  %v476 = vpack.c.b16 %v419, %v418
  %v477 = vpack.c.b16 %v421, %v420
  %v478 = vpack.c.b16 %v423, %v422
  %v479 = vpack.c.b16 %v425, %v424
  %v480 = vpack.c.b16 %v427, %v426
  %v481 = vpack.c.b16 %v429, %v428
  %v482 = vpack.c.b16 %v431, %v430
  %v483 = vpack.c.b16 %v433, %v432
  %v484 = vpack.c.b16 %v435, %v434
  %v485 = vpack.c.b16 %v437, %v436
  %v486 = vpack.c.b16 %v439, %v438
  %v487 = vpack.c.b16 %v441, %v440
  %v488 = vpack.c.b16 %v443, %v442
  %v489 = vpack.c.b16 %v445, %v444
  %v490 = vpack.c.b16 %v447, %v446
  %v491 = vpack.c.b16 %v449, %v448
  %v492 = vpack.c.b16 %v451, %v450
  %v493 = vpack.c.b16 %v453, %v452
  %v494 = vpack.c.b16 %v455, %v454
  %v495 = vpack.c.b16 %v457, %v456
  %v496 = vpack.c.b16 %v459, %v458
  %v497 = vpack.c.b16 %v461, %v460
  %v498 = vpack.c.b16 %v463, %v462
  %v499 = vpack.c.b16 %v465, %v464
  %v500 = vpack.c.b16 %v467, %v466
  %v501 = vpack.c.b16 %v469, %v468
  %534 = vmatprep.subr.bf16.mxu0 0
  %535 = vmatpush1.bf16.msra.mxu0 %v470
  %536 = vmatprep.subr.bf16.mxu0 0
  %537 = vmatpush1.bf16.msra.mxu0 %v471
  %538 = vmatprep.subr.bf16.mxu0 0
  %539 = vmatpush1.bf16.msra.mxu0 %v472
  %540 = vmatprep.subr.bf16.mxu0 0
  %541 = vmatpush1.bf16.msra.mxu0 %v473
  %542 = vmatprep.subr.bf16.mxu0 0
  %543 = vmatpush1.bf16.msra.mxu0 %v474
  %544 = vmatprep.subr.bf16.mxu0 0
  %545 = vmatpush1.bf16.msra.mxu0 %v475
  %546 = vmatprep.subr.bf16.mxu0 0
  %547 = vmatpush1.bf16.msra.mxu0 %v476
  %548 = vmatprep.subr.bf16.mxu0 0
  %549 = vmatpush1.bf16.msra.mxu0 %v477
  %550 = vmatprep.subr.bf16.mxu0 0
  %551 = vmatpush1.bf16.msra.mxu0 %v478
  %552 = vmatprep.subr.bf16.mxu0 0
  %553 = vmatpush1.bf16.msra.mxu0 %v479
  %554 = vmatprep.subr.bf16.mxu0 0
  %555 = vmatpush1.bf16.msra.mxu0 %v480
  %556 = vmatprep.subr.bf16.mxu0 0
  %557 = vmatpush1.bf16.msra.mxu0 %v481
  %558 = vmatprep.subr.bf16.mxu0 0
  %559 = vmatpush1.bf16.msra.mxu0 %v482
  %560 = vmatprep.subr.bf16.mxu0 0
  %561 = vmatpush1.bf16.msra.mxu0 %v483
  %562 = vmatprep.subr.bf16.mxu0 0
  %563 = vmatpush1.bf16.msra.mxu0 %v484
  %564 = vmatprep.subr.bf16.mxu0 0
  %565 = vmatpush1.bf16.msra.mxu0 %v485
  %566 = vmatprep.mubr.bf16.mxu0 %v255
  %567 = vmatmul.mubr.bf16.gmra.mrb[0].mxu0 %v254
  %v568 = vpop.f32.mrb[0].mxu0
  %v569 = vadd.f32 %v126, %v568
  %v570 = vpop.f32.mrb[0].mxu0
  %v571 = vpop.f32.mrb[0].mxu0
  %v572 = vadd.f32 %v126, %v571
  %v573 = vpop.f32.mrb[0].mxu0
  %574 = vmatprep.mubr.bf16.mxu0 %v259
  %575 = vmatmul.mubr.bf16.gmra.mrb[0].mxu0 %v258
  %v576 = vpop.f32.mrb[0].mxu0
  %v577 = vadd.f32 %v126, %v576
  %v578 = vpop.f32.mrb[0].mxu0
  %v579 = vpop.f32.mrb[0].mxu0
  %v580 = vadd.f32 %v126, %v579
  %v581 = vpop.f32.mrb[0].mxu0
  %582 = vmatprep.mubr.bf16.mxu0 %v263
  %583 = vmatmul.mubr.bf16.gmra.mrb[0].mxu0 %v262
  %v584 = vpop.f32.mrb[0].mxu0
  %v585 = vadd.f32 %v126, %v584
  %v586 = vpop.f32.mrb[0].mxu0
  %v587 = vpop.f32.mrb[0].mxu0
  %v588 = vadd.f32 %v126, %v587
  %v589 = vpop.f32.mrb[0].mxu0
  %590 = vmatprep.mubr.bf16.mxu0 %v267
  %591 = vmatmul.mubr.bf16.gmra.mrb[0].mxu0 %v266
  %v592 = vpop.f32.mrb[0].mxu0
  %v593 = vadd.f32 %v126, %v592
  %v594 = vpop.f32.mrb[0].mxu0
  %v595 = vpop.f32.mrb[0].mxu0
  %v596 = vadd.f32 %v126, %v595
  %v597 = vpop.f32.mrb[0].mxu0
  %598 = vmatprep.mubr.bf16.mxu0 %v271
  %599 = vmatmul.mubr.bf16.gmra.mrb[0].mxu0 %v270
  %v600 = vpop.f32.mrb[0].mxu0
  %v601 = vadd.f32 %v126, %v600
  %v602 = vpop.f32.mrb[0].mxu0
  %v603 = vpop.f32.mrb[0].mxu0
  %v604 = vadd.f32 %v126, %v603
  %v605 = vpop.f32.mrb[0].mxu0
  %606 = vmatprep.mubr.bf16.mxu0 %v275
  %607 = vmatmul.mubr.bf16.gmra.mrb[0].mxu0 %v274
  %v608 = vpop.f32.mrb[0].mxu0
  %v609 = vadd.f32 %v126, %v608
  %v610 = vpop.f32.mrb[0].mxu0
  %v611 = vpop.f32.mrb[0].mxu0
  %v612 = vadd.f32 %v126, %v611
  %v613 = vpop.f32.mrb[0].mxu0
  %614 = vmatprep.mubr.bf16.mxu0 %v279
  %615 = vmatmul.mubr.bf16.gmra.mrb[0].mxu0 %v278
  %v616 = vpop.f32.mrb[0].mxu0
  %v617 = vadd.f32 %v126, %v616
  %v618 = vpop.f32.mrb[0].mxu0
  %v619 = vpop.f32.mrb[0].mxu0
  %v620 = vadd.f32 %v126, %v619
  %v621 = vpop.f32.mrb[0].mxu0
  %622 = vmatprep.mubr.bf16.mxu0 %v283
  %623 = vmatmul.mubr.bf16.gmra.mrb[0].mxu0 %v282
  %v624 = vpop.f32.mrb[0].mxu0
  %v625 = vadd.f32 %v126, %v624
  %v626 = vpop.f32.mrb[0].mxu0
  %v627 = vpop.f32.mrb[0].mxu0
  %v628 = vadd.f32 %v126, %v627
  %v629 = vpop.f32.mrb[0].mxu0
  %630 = vmatprep.mubr.bf16.mxu0 %v287
  %631 = vmatmul.mubr.bf16.gmra.mrb[0].mxu0 %v286
  %v632 = vpop.f32.mrb[0].mxu0
  %v633 = vadd.f32 %v126, %v632
  %v634 = vpop.f32.mrb[0].mxu0
  %v635 = vpop.f32.mrb[0].mxu0
  %v636 = vadd.f32 %v126, %v635
  %v637 = vpop.f32.mrb[0].mxu0
  %638 = vmatprep.mubr.bf16.mxu0 %v291
  %639 = vmatmul.mubr.bf16.gmra.mrb[0].mxu0 %v290
  %v640 = vpop.f32.mrb[0].mxu0
  %v641 = vadd.f32 %v126, %v640
  %v642 = vpop.f32.mrb[0].mxu0
  %v643 = vpop.f32.mrb[0].mxu0
  %v644 = vadd.f32 %v126, %v643
  %v645 = vpop.f32.mrb[0].mxu0
  %646 = vmatprep.mubr.bf16.mxu0 %v295
  %647 = vmatmul.mubr.bf16.gmra.mrb[0].mxu0 %v294
  %v648 = vpop.f32.mrb[0].mxu0
  %v649 = vadd.f32 %v126, %v648
  %v650 = vpop.f32.mrb[0].mxu0
  %v651 = vpop.f32.mrb[0].mxu0
  %v652 = vpop.f32.mrb[0].mxu0
  %653 = vdwg.mxu0
  %654 = vmatprep.subr.bf16.mxu0 0
  %655 = vmatpush1.bf16.msra.mxu0 %v486
  %656 = vmatprep.subr.bf16.mxu0 0
  %657 = vmatpush1.bf16.msra.mxu0 %v487
  %658 = vmatprep.subr.bf16.mxu0 0
  %659 = vmatpush1.bf16.msra.mxu0 %v488
  %660 = vmatprep.subr.bf16.mxu0 0
  %661 = vmatpush1.bf16.msra.mxu0 %v489
  %662 = vmatprep.subr.bf16.mxu0 0
  %663 = vmatpush1.bf16.msra.mxu0 %v490
  %664 = vmatprep.subr.bf16.mxu0 0
  %665 = vmatpush1.bf16.msra.mxu0 %v491
  %666 = vmatprep.subr.bf16.mxu0 0
  %667 = vmatpush1.bf16.msra.mxu0 %v492
  %668 = vmatprep.subr.bf16.mxu0 0
  %669 = vmatpush1.bf16.msra.mxu0 %v493
  %670 = vmatprep.subr.bf16.mxu0 0
  %671 = vmatpush1.bf16.msra.mxu0 %v494
  %672 = vmatprep.subr.bf16.mxu0 0
  %673 = vmatpush1.bf16.msra.mxu0 %v495
  %674 = vmatprep.subr.bf16.mxu0 0
  %675 = vmatpush1.bf16.msra.mxu0 %v496
  %676 = vmatprep.subr.bf16.mxu0 0
  %677 = vmatpush1.bf16.msra.mxu0 %v497
  %678 = vmatprep.subr.bf16.mxu0 0
  %679 = vmatpush1.bf16.msra.mxu0 %v498
  %680 = vmatprep.subr.bf16.mxu0 0
  %681 = vmatpush1.bf16.msra.mxu0 %v499
  %682 = vmatprep.subr.bf16.mxu0 0
  %683 = vmatpush1.bf16.msra.mxu0 %v500
  %684 = vmatprep.subr.bf16.mxu0 0
  %685 = vmatpush1.bf16.msra.mxu0 %v501
  %686 = vmatprep.mubr.bf16.mxu0 %v257
  %687 = vmatmul.mubr.bf16.gmra.mrb[0].mxu0 %v256
  %v688 = vpop.f32.mrb[0].mxu0
  %v689 = vadd.f32 %v569, %v688
  %v690 = vpop.f32.mrb[0].mxu0
  %v691 = vpop.f32.mrb[0].mxu0
  %v692 = vadd.f32 %v572, %v691
  %v693 = vpop.f32.mrb[0].mxu0
  %694 = vmatprep.mubr.bf16.mxu0 %v261
  %695 = vmatmul.mubr.bf16.gmra.mrb[0].mxu0 %v260
  %v696 = vpop.f32.mrb[0].mxu0
  %v697 = vadd.f32 %v577, %v696
  %v698 = vpop.f32.mrb[0].mxu0
  %v699 = vpop.f32.mrb[0].mxu0
  %v700 = vadd.f32 %v580, %v699
  %v701 = vpop.f32.mrb[0].mxu0
  %702 = vmatprep.mubr.bf16.mxu0 %v265
  %703 = vmatmul.mubr.bf16.gmra.mrb[0].mxu0 %v264
  %v704 = vpop.f32.mrb[0].mxu0
  %v705 = vadd.f32 %v585, %v704
  %v706 = vpop.f32.mrb[0].mxu0
  %v707 = vpop.f32.mrb[0].mxu0
  %v708 = vadd.f32 %v588, %v707
  %v709 = vpop.f32.mrb[0].mxu0
  %710 = vmatprep.mubr.bf16.mxu0 %v269
  %711 = vmatmul.mubr.bf16.gmra.mrb[0].mxu0 %v268
  %v712 = vpop.f32.mrb[0].mxu0
  %v713 = vadd.f32 %v593, %v712
  %v714 = vpop.f32.mrb[0].mxu0
  %v715 = vpop.f32.mrb[0].mxu0
  %v716 = vadd.f32 %v596, %v715
  %v717 = vpop.f32.mrb[0].mxu0
  %718 = vmatprep.mubr.bf16.mxu0 %v273
  %719 = vmatmul.mubr.bf16.gmra.mrb[0].mxu0 %v272
  %v720 = vpop.f32.mrb[0].mxu0
  %v721 = vadd.f32 %v601, %v720
  %v722 = vpop.f32.mrb[0].mxu0
  %v723 = vpop.f32.mrb[0].mxu0
  %v724 = vadd.f32 %v604, %v723
  %v725 = vpop.f32.mrb[0].mxu0
  %726 = vmatprep.mubr.bf16.mxu0 %v277
  %727 = vmatmul.mubr.bf16.gmra.mrb[0].mxu0 %v276
  %v728 = vpop.f32.mrb[0].mxu0
  %v729 = vadd.f32 %v609, %v728
  %v730 = vpop.f32.mrb[0].mxu0
  %v731 = vpop.f32.mrb[0].mxu0
  %v732 = vadd.f32 %v612, %v731
  %v733 = vpop.f32.mrb[0].mxu0
  %734 = vmatprep.mubr.bf16.mxu0 %v281
  %735 = vmatmul.mubr.bf16.gmra.mrb[0].mxu0 %v280
  %v736 = vpop.f32.mrb[0].mxu0
  %v737 = vadd.f32 %v617, %v736
  %v738 = vpop.f32.mrb[0].mxu0
  %v739 = vpop.f32.mrb[0].mxu0
  %v740 = vadd.f32 %v620, %v739
  %v741 = vpop.f32.mrb[0].mxu0
  %742 = vmatprep.mubr.bf16.mxu0 %v285
  %743 = vmatmul.mubr.bf16.gmra.mrb[0].mxu0 %v284
  %v744 = vpop.f32.mrb[0].mxu0
  %v745 = vadd.f32 %v625, %v744
  %v746 = vpop.f32.mrb[0].mxu0
  %v747 = vpop.f32.mrb[0].mxu0
  %v748 = vadd.f32 %v628, %v747
  %v749 = vpop.f32.mrb[0].mxu0
  %750 = vmatprep.mubr.bf16.mxu0 %v289
  %751 = vmatmul.mubr.bf16.gmra.mrb[0].mxu0 %v288
  %v752 = vpop.f32.mrb[0].mxu0
  %v753 = vadd.f32 %v633, %v752
  %v754 = vpop.f32.mrb[0].mxu0
  %v755 = vpop.f32.mrb[0].mxu0
  %v756 = vadd.f32 %v636, %v755
  %v757 = vpop.f32.mrb[0].mxu0
  %758 = vmatprep.mubr.bf16.mxu0 %v293
  %759 = vmatmul.mubr.bf16.gmra.mrb[0].mxu0 %v292
  %v760 = vpop.f32.mrb[0].mxu0
  %v761 = vadd.f32 %v641, %v760
  %v762 = vpop.f32.mrb[0].mxu0
  %v763 = vpop.f32.mrb[0].mxu0
  %v764 = vadd.f32 %v644, %v763
  %v765 = vpop.f32.mrb[0].mxu0
  %766 = vmatprep.mubr.bf16.mxu0 %v297
  %767 = vmatmul.mubr.bf16.gmra.mrb[0].mxu0 %v296
  %v768 = vpop.f32.mrb[0].mxu0
  %v769 = vadd.f32 %v649, %v768
  %v770 = vpop.f32.mrb[0].mxu0
  %v771 = vpop.f32.mrb[0].mxu0
  %v772 = vpop.f32.mrb[0].mxu0
  %773 = vdwg.mxu0
  %v774 = vmax.f32 %v689, 0.0
  %v775 = vmax.f32 %v692, 0.0
  %v776 = vmax.f32 %v697, 0.0
  %v777 = vmax.f32 %v700, 0.0
  %v778 = vmax.f32 %v705, 0.0
  %v779 = vmax.f32 %v708, 0.0
  %v780 = vmax.f32 %v713, 0.0
  %v781 = vmax.f32 %v716, 0.0
  %v782 = vmax.f32 %v721, 0.0
  %v783 = vmax.f32 %v724, 0.0
  %v784 = vmax.f32 %v729, 0.0
  %v785 = vmax.f32 %v732, 0.0
  %v786 = vmax.f32 %v737, 0.0
  %v787 = vmax.f32 %v740, 0.0
  %v788 = vmax.f32 %v745, 0.0
  %v789 = vmax.f32 %v748, 0.0
  %v790 = vmax.f32 %v753, 0.0
  %v791 = vmax.f32 %v756, 0.0
  %v792 = vmax.f32 %v761, 0.0
  %v793 = vmax.f32 %v764, 0.0
  %v794 = vmax.f32 %v769, 0.0
  %v795 = vpack.c.bf16 %v775, %v774
  %v796 = vpack.c.bf16 %v777, %v776
  %v797 = vpack.c.bf16 %v779, %v778
  %v798 = vpack.c.bf16 %v781, %v780
  %v799 = vpack.c.bf16 %v783, %v782
  %v800 = vpack.c.bf16 %v785, %v784
  %v801 = vpack.c.bf16 %v787, %v786
  %v802 = vpack.c.bf16 %v789, %v788
  %v803 = vpack.c.bf16 %v791, %v790
  %v804 = vpack.c.bf16 %v793, %v792
  %v805 = vpack.c.bf16 %v794, %v794
  %v817 = vunpack.c.l.b16 %v795
  %v818 = vunpack.c.h.b16 %v795
  %v819 = vunpack.c.l.b16 %v796
  %v820 = vunpack.c.h.b16 %v796
  %v821 = vunpack.c.l.b16 %v797
  %v822 = vunpack.c.h.b16 %v797
  %v823 = vunpack.c.l.b16 %v798
  %v824 = vunpack.c.h.b16 %v798
  %v825 = vunpack.c.l.b16 %v799
  %v826 = vunpack.c.h.b16 %v799
  %v827 = vunpack.c.l.b16 %v800
  %v828 = vunpack.c.h.b16 %v800
  %v829 = vunpack.c.l.b16 %v801
  %v830 = vunpack.c.h.b16 %v801
  %v831 = vunpack.c.l.b16 %v802
  %v832 = vunpack.c.h.b16 %v802
  %v833 = vunpack.c.l.b16 %v803
  %v834 = vunpack.c.h.b16 %v803
  %v835 = vunpack.c.l.b16 %v804
  %v836 = vunpack.c.h.b16 %v804
  %v837 = vunpack.c.l.b16 %v805
  %v838 = vpack.c.b16 %v817, %v817
  %v839 = vpack.c.b16 %v818, %v818
  %v840 = vpack.c.b16 %v819, %v819
  %v841 = vpack.c.b16 %v820, %v820
  %v842 = vpack.c.b16 %v821, %v821
  %v843 = vpack.c.b16 %v822, %v822
  %v844 = vpack.c.b16 %v823, %v823
  %v845 = vpack.c.b16 %v824, %v824
  %v846 = vpack.c.b16 %v825, %v825
  %v847 = vpack.c.b16 %v826, %v826
  %v848 = vpack.c.b16 %v827, %v827
  %v849 = vpack.c.b16 %v828, %v828
  %v850 = vpack.c.b16 %v829, %v829
  %v851 = vpack.c.b16 %v830, %v830
  %v852 = vpack.c.b16 %v831, %v831
  %v853 = vpack.c.b16 %v832, %v832
  %v854 = vpack.c.b16 %v833, %v833
  %v855 = vpack.c.b16 %v834, %v834
  %v856 = vpack.c.b16 %v835, %v835
  %v857 = vpack.c.b16 %v836, %v836
  %v858 = vpack.c.b16 %v837, %v837
  %vm880 = vcmask 519168
  %881 = vst.msk [vmem:[%s3] sm:$0xf] %vm880, %v838
  %882 = vst.msk [vmem:[%s3 + $0x4] sm:$0xf] %vm880, %v839
  %883 = vst.msk [vmem:[%s3 + $0x8] sm:$0xf] %vm880, %v840
  %884 = vst.msk [vmem:[%s3 + $0xc] sm:$0xf] %vm880, %v841
  %885 = vst.msk [vmem:[%s3 + $0x10] sm:$0xf] %vm880, %v842
  %886 = vst.msk [vmem:[%s3 + $0x14] sm:$0xf] %vm880, %v843
  %887 = vst.msk [vmem:[%s3 + $0x18] sm:$0xf] %vm880, %v844
  %888 = vst.msk [vmem:[%s3 + $0x1c] sm:$0xf] %vm880, %v845
  %889 = vst.msk [vmem:[%s3 + $0x20] sm:$0xf] %vm880, %v846
  %890 = vst.msk [vmem:[%s3 + $0x24] sm:$0xf] %vm880, %v847
  %891 = vst.msk [vmem:[%s3 + $0x28] sm:$0xf] %vm880, %v848
  %892 = vst.msk [vmem:[%s3 + $0x2c] sm:$0xf] %vm880, %v849
  %893 = vst.msk [vmem:[%s3 + $0x30] sm:$0xf] %vm880, %v850
  %894 = vst.msk [vmem:[%s3 + $0x34] sm:$0xf] %vm880, %v851
  %895 = vst.msk [vmem:[%s3 + $0x38] sm:$0xf] %vm880, %v852
  %896 = vst.msk [vmem:[%s3 + $0x3c] sm:$0xf] %vm880, %v853
  %897 = vst.msk [vmem:[%s3 + $0x40] sm:$0xf] %vm880, %v854
  %898 = vst.msk [vmem:[%s3 + $0x44] sm:$0xf] %vm880, %v855
  %899 = vst.msk [vmem:[%s3 + $0x48] sm:$0xf] %vm880, %v856
  %900 = vst.msk [vmem:[%s3 + $0x4c] sm:$0xf] %vm880, %v857
  %vm901 = vcmask 516096
  %902 = vst.msk [vmem:[%s3 + $0x50] sm:$0x1] %vm901, %v858
  // Predicated region
  $region14: #{dqn_forward.5} parent=0 // pred_check
    _
  $region15: #{dqn_forward.5} parent=0 // pred_check_branch
    %904 = sbr.rel (0) target = $region17
  $region16: #{dqn_forward.5} parent=0 // pred_region
    _
  $region17: #{dqn_forward.5} parent=0 // pred_fallthru
    _
  // Predicated region
  $region18: #{dqn_forward.5} parent=0 // pred_check
    _
  $region19: #{dqn_forward.5} parent=0 // pred_check_branch
    %906 = sbr.rel (0) target = $region21
  $region20: #{dqn_forward.5} parent=0 // pred_region
    _
  $region21: #{dqn_forward.5} parent=0 // pred_fallthru
    _

// kernel: dqn_forward.6
$region0: #{dqn_forward.6}
  #allocation0 [shape = 'u32[]', space=smem, size = 0x4, offset = 0x4, fixed_abs, tag = 'smem constant byte address 0x4 - core index']
  #allocation1 [shape = 'u32[144,128]{1,0:T(1,128)}', space=vmem, size = 0x12000, scoped, tag = 'internal scratch']
  %s0 = inlined_call_operand.vmem [shape: bf16[98,640], index: 0, kind: input, shape index: {}]
  %s1 = inlined_call_operand.vmem [shape: bf16[640,64], index: 1, kind: input, shape index: {}]
  %s2 = inlined_call_operand.vmem [shape: f32[1,64], index: 2, kind: input, shape index: {}]
  %s3 = inlined_call_operand.vmem [shape: bf16[98,64], index: 3, kind: output, shape index: {}]
  %s4 = sld [smem:[#allocation0]]
  $region22: #{dqn_forward.6} parent=0
    _
  %s6 = ssub.s32 1, %s4
  %s7 = scalar_select 0, %s6, %s4
  // Predicated region
  $region2: #{dqn_forward.6} parent=0 // pred_check
    _
  $region3: #{dqn_forward.6} parent=0 // pred_check_branch
    %9 = sbr.rel (0) target = $region5
  $region4: #{dqn_forward.6} parent=0 // pred_region
    _
  $region5: #{dqn_forward.6} parent=0 // pred_fallthru
    _
  // Predicated region
  $region6: #{dqn_forward.6} parent=0 // pred_check
    _
  $region7: #{dqn_forward.6} parent=0 // pred_check_branch
    %11 = sbr.rel (0) target = $region9
  $region8: #{dqn_forward.6} parent=0 // pred_region
    _
  $region9: #{dqn_forward.6} parent=0 // pred_fallthru
    _
  // Predicated region
  $region10: #{dqn_forward.6} parent=0 // pred_check
    _
  $region11: #{dqn_forward.6} parent=0 // pred_check_branch
    %13 = sbr.rel (0) target = $region13
  $region12: #{dqn_forward.6} parent=0 // pred_region
    _
  $region13: #{dqn_forward.6} parent=0 // pred_fallthru
    _
  %v15 = vld [vmem:[%s0] sm:$0xff]
  %v16 = vld [vmem:[%s0 + $0x8] sm:$0xff]
  %v17 = vld [vmem:[%s0 + $0x10] sm:$0xf]
  %v18 = vld [vmem:[%s0 + $0x14] sm:$0xff]
  %v19 = vld [vmem:[%s0 + $0x1c] sm:$0xff]
  %v20 = vld [vmem:[%s0 + $0x24] sm:$0xf]
  %v21 = vld [vmem:[%s0 + $0x28] sm:$0xff]
  %v22 = vld [vmem:[%s0 + $0x30] sm:$0xff]
  %v23 = vld [vmem:[%s0 + $0x38] sm:$0xf]
  %v24 = vld [vmem:[%s0 + $0x3c] sm:$0xff]
  %v25 = vld [vmem:[%s0 + $0x44] sm:$0xff]
  %v26 = vld [vmem:[%s0 + $0x4c] sm:$0xf]
  %v27 = vld [vmem:[%s0 + $0x50] sm:$0xff]
  %v28 = vld [vmem:[%s0 + $0x58] sm:$0xff]
  %v29 = vld [vmem:[%s0 + $0x60] sm:$0xf]
  %v30 = vld [vmem:[%s0 + $0x64] sm:$0xff]
  %v31 = vld [vmem:[%s0 + $0x6c] sm:$0xff]
  %v32 = vld [vmem:[%s0 + $0x74] sm:$0xf]
  %v33 = vld [vmem:[%s0 + $0x78] sm:$0xff]
  %v34 = vld [vmem:[%s0 + $0x80] sm:$0xff]
  %v35 = vld [vmem:[%s0 + $0x88] sm:$0xf]
  %v36 = vld [vmem:[%s0 + $0x8c] sm:$0xff]
  %v37 = vld [vmem:[%s0 + $0x94] sm:$0xff]
  %v38 = vld [vmem:[%s0 + $0x9c] sm:$0xf]
  %v39 = vld [vmem:[%s0 + $0xa0] sm:$0xff]
  %v40 = vld [vmem:[%s0 + $0xa8] sm:$0xff]
  %v41 = vld [vmem:[%s0 + $0xb0] sm:$0xf]
  %v42 = vld [vmem:[%s0 + $0xb4] sm:$0xff]
  %v43 = vld [vmem:[%s0 + $0xbc] sm:$0xff]
  %v44 = vld [vmem:[%s0 + $0xc4] sm:$0xf]
  %v45 = vld [vmem:[%s0 + $0xc8] sm:$0xff]
  %v46 = vld [vmem:[%s0 + $0xd0] sm:$0xff]
  %v47 = vld [vmem:[%s0 + $0xd8] sm:$0xf]
  %v48 = vld [vmem:[%s0 + $0xdc] sm:$0xff]
  %v49 = vld [vmem:[%s0 + $0xe4] sm:$0xff]
  %v50 = vld [vmem:[%s0 + $0xec] sm:$0xf]
  %v51 = vld [vmem:[%s0 + $0xf0] sm:$0x11]
  %v52 = vld [vmem:[%s0 + $0xf8] sm:$0x11]
  %v53 = vld [vmem:[%s0 + $0x100] sm:$0x1]
  %v54 = vld [vmem:[%s1] sm:$0xf]
  %v55 = vld [vmem:[%s1 + $0x4] sm:$0xf]
  %v56 = vld [vmem:[%s1 + $0x8] sm:$0xf]
  %v57 = vld [vmem:[%s1 + $0xc] sm:$0xf]
  %v58 = vld [vmem:[%s1 + $0x10] sm:$0xf]
  %v59 = vld [vmem:[%s1 + $0x14] sm:$0xf]
  %v60 = vld [vmem:[%s1 + $0x18] sm:$0xf]
  %v61 = vld [vmem:[%s1 + $0x1c] sm:$0xf]
  %v62 = vld [vmem:[%s1 + $0x20] sm:$0xf]
  %v63 = vld [vmem:[%s1 + $0x24] sm:$0xf]
  %v64 = vld [vmem:[%s1 + $0x28] sm:$0xf]
  %v65 = vld [vmem:[%s1 + $0x2c] sm:$0xf]
  %v66 = vld [vmem:[%s1 + $0x30] sm:$0xf]
  %v67 = vld [vmem:[%s1 + $0x34] sm:$0xf]
  %v68 = vld [vmem:[%s1 + $0x38] sm:$0xf]
  %v69 = vld [vmem:[%s1 + $0x3c] sm:$0xf]
  %v70 = vld [vmem:[%s1 + $0x40] sm:$0xf]
  %v71 = vld [vmem:[%s1 + $0x44] sm:$0xf]
  %v72 = vld [vmem:[%s1 + $0x48] sm:$0xf]
  %v73 = vld [vmem:[%s1 + $0x4c] sm:$0xf]
  %v74 = vld [vmem:[%s1 + $0x50] sm:$0xf]
  %v75 = vld [vmem:[%s1 + $0x54] sm:$0xf]
  %v76 = vld [vmem:[%s1 + $0x58] sm:$0xf]
  %v77 = vld [vmem:[%s1 + $0x5c] sm:$0xf]
  %v78 = vld [vmem:[%s1 + $0x60] sm:$0xf]
  %v79 = vld [vmem:[%s1 + $0x64] sm:$0xf]
  %v80 = vld [vmem:[%s1 + $0x68] sm:$0xf]
  %v81 = vld [vmem:[%s1 + $0x6c] sm:$0xf]
  %v82 = vld [vmem:[%s1 + $0x70] sm:$0xf]
  %v83 = vld [vmem:[%s1 + $0x74] sm:$0xf]
  %v84 = vld [vmem:[%s1 + $0x78] sm:$0xf]
  %v85 = vld [vmem:[%s1 + $0x7c] sm:$0xf]
  %v86 = vld [vmem:[%s1 + $0x80] sm:$0xf]
  %v87 = vld [vmem:[%s1 + $0x84] sm:$0xf]
  %v88 = vld [vmem:[%s1 + $0x88] sm:$0xf]
  %v89 = vld [vmem:[%s1 + $0x8c] sm:$0xf]
  %v90 = vld [vmem:[%s1 + $0x90] sm:$0xf]
  %v91 = vld [vmem:[%s1 + $0x94] sm:$0xf]
  %v92 = vld [vmem:[%s1 + $0x98] sm:$0xf]
  %v93 = vld [vmem:[%s1 + $0x9c] sm:$0xf]
  %v94 = vld [vmem:[%s1 + $0xa0] sm:$0xf]
  %v95 = vld [vmem:[%s1 + $0xa4] sm:$0xf]
  %v96 = vld [vmem:[%s1 + $0xa8] sm:$0xf]
  %v97 = vld [vmem:[%s1 + $0xac] sm:$0xf]
  %v98 = vld [vmem:[%s1 + $0xb0] sm:$0xf]
  %v99 = vld [vmem:[%s1 + $0xb4] sm:$0xf]
  %v100 = vld [vmem:[%s1 + $0xb8] sm:$0xf]
  %v101 = vld [vmem:[%s1 + $0xbc] sm:$0xf]
  %v102 = vld [vmem:[%s1 + $0xc0] sm:$0xf]
  %v103 = vld [vmem:[%s1 + $0xc4] sm:$0xf]
  %v104 = vld [vmem:[%s1 + $0xc8] sm:$0xf]
  %v105 = vld [vmem:[%s1 + $0xcc] sm:$0xf]
  %v106 = vld [vmem:[%s1 + $0xd0] sm:$0xf]
  %v107 = vld [vmem:[%s1 + $0xd4] sm:$0xf]
  %v108 = vld [vmem:[%s1 + $0xd8] sm:$0xf]
  %v109 = vld [vmem:[%s1 + $0xdc] sm:$0xf]
  %v110 = vld [vmem:[%s1 + $0xe0] sm:$0xf]
  %v111 = vld [vmem:[%s1 + $0xe4] sm:$0xf]
  %v112 = vld [vmem:[%s1 + $0xe8] sm:$0xf]
  %v113 = vld [vmem:[%s1 + $0xec] sm:$0xf]
  %v114 = vld [vmem:[%s1 + $0xf0] sm:$0xf]
  %v115 = vld [vmem:[%s1 + $0xf4] sm:$0xf]
  %v116 = vld [vmem:[%s1 + $0xf8] sm:$0xf]
  %v117 = vld [vmem:[%s1 + $0xfc] sm:$0xf]
  %v118 = vld [vmem:[%s1 + $0x100] sm:$0xf]
  %v119 = vld [vmem:[%s1 + $0x104] sm:$0xf]
  %v120 = vld [vmem:[%s1 + $0x108] sm:$0xf]
  %v121 = vld [vmem:[%s1 + $0x10c] sm:$0xf]
  %v122 = vld [vmem:[%s1 + $0x110] sm:$0xf]
  %v123 = vld [vmem:[%s1 + $0x114] sm:$0xf]
  %v124 = vld [vmem:[%s1 + $0x118] sm:$0xf]
  %v125 = vld [vmem:[%s1 + $0x11c] sm:$0xf]
  %v126 = vld [vmem:[%s1 + $0x120] sm:$0xf]
  %v127 = vld [vmem:[%s1 + $0x124] sm:$0xf]
  %v128 = vld [vmem:[%s1 + $0x128] sm:$0xf]
  %v129 = vld [vmem:[%s1 + $0x12c] sm:$0xf]
  %v130 = vld [vmem:[%s1 + $0x130] sm:$0xf]
  %v131 = vld [vmem:[%s1 + $0x134] sm:$0xf]
  %v132 = vld [vmem:[%s1 + $0x138] sm:$0xf]
  %v133 = vld [vmem:[%s1 + $0x13c] sm:$0xf]
  %v134 = vld [vmem:[%s2] sm:$0x1]
  %v136 = vlaneseq
  %v137 = vshrl.u32 %v136, 7
  %v138 = vsub.s32 0, %v137
  %v139 = vrot.slane %v134, %v138
  %v180 = vunpack.c.l.b16 %v15
  %v181 = vunpack.c.h.b16 %v15
  %v182 = vunpack.c.l.b16 %v16
  %v183 = vunpack.c.h.b16 %v16
  %v184 = vunpack.c.l.b16 %v17
  %v185 = vunpack.c.l.b16 %v18
  %v186 = vunpack.c.h.b16 %v18
  %v187 = vunpack.c.l.b16 %v19
  %v188 = vunpack.c.h.b16 %v19
  %v189 = vunpack.c.l.b16 %v20
  %v190 = vunpack.c.l.b16 %v21
  %v191 = vunpack.c.h.b16 %v21
  %v192 = vunpack.c.l.b16 %v22
  %v193 = vunpack.c.h.b16 %v22
  %v194 = vunpack.c.l.b16 %v23
  %v195 = vunpack.c.l.b16 %v24
  %v196 = vunpack.c.h.b16 %v24
  %v197 = vunpack.c.l.b16 %v25
  %v198 = vunpack.c.h.b16 %v25
  %v199 = vunpack.c.l.b16 %v26
  %v200 = vunpack.c.l.b16 %v27
  %v201 = vunpack.c.h.b16 %v27
  %v202 = vunpack.c.l.b16 %v28
  %v203 = vunpack.c.h.b16 %v28
  %v204 = vunpack.c.l.b16 %v29
  %v205 = vunpack.c.l.b16 %v30
  %v206 = vunpack.c.h.b16 %v30
  %v207 = vunpack.c.l.b16 %v31
  %v208 = vunpack.c.h.b16 %v31
  %v209 = vunpack.c.l.b16 %v32
  %v210 = vunpack.c.l.b16 %v33
  %v211 = vunpack.c.h.b16 %v33
  %v212 = vunpack.c.l.b16 %v34
  %v213 = vunpack.c.h.b16 %v34
  %v214 = vunpack.c.l.b16 %v35
  %v215 = vunpack.c.l.b16 %v36
  %v216 = vunpack.c.h.b16 %v36
  %v217 = vunpack.c.l.b16 %v37
  %v218 = vunpack.c.h.b16 %v37
  %v219 = vunpack.c.l.b16 %v38
  %v220 = vunpack.c.l.b16 %v39
  %v221 = vunpack.c.h.b16 %v39
  %v222 = vunpack.c.l.b16 %v40
  %v223 = vunpack.c.h.b16 %v40
  %v224 = vunpack.c.l.b16 %v41
  %v225 = vunpack.c.l.b16 %v42
  %v226 = vunpack.c.h.b16 %v42
  %v227 = vunpack.c.l.b16 %v43
  %v228 = vunpack.c.h.b16 %v43
  %v229 = vunpack.c.l.b16 %v44
  %v230 = vunpack.c.l.b16 %v45
  %v231 = vunpack.c.h.b16 %v45
  %v232 = vunpack.c.l.b16 %v46
  %v233 = vunpack.c.h.b16 %v46
  %v234 = vunpack.c.l.b16 %v47
  %v235 = vunpack.c.l.b16 %v48
  %v236 = vunpack.c.h.b16 %v48
  %v237 = vunpack.c.l.b16 %v49
  %v238 = vunpack.c.h.b16 %v49
  %v239 = vunpack.c.l.b16 %v50
  %v240 = vunpack.c.l.b16 %v51
  %v241 = vunpack.c.h.b16 %v51
  %v242 = vunpack.c.l.b16 %v52
  %v243 = vunpack.c.h.b16 %v52
  %v244 = vunpack.c.l.b16 %v53
  %v245 = vpack.c.b16 %v185, %v180
  %v246 = vpack.c.b16 %v186, %v181
  %v247 = vpack.c.b16 %v187, %v182
  %v248 = vpack.c.b16 %v188, %v183
  %v249 = vpack.c.b16 %v189, %v184
  %v250 = vpack.c.b16 %v195, %v190
  %v251 = vpack.c.b16 %v196, %v191
  %v252 = vpack.c.b16 %v197, %v192
  %v253 = vpack.c.b16 %v198, %v193
  %v254 = vpack.c.b16 %v199, %v194
  %v255 = vpack.c.b16 %v205, %v200
  %v256 = vpack.c.b16 %v206, %v201
  %v257 = vpack.c.b16 %v207, %v202
  %v258 = vpack.c.b16 %v208, %v203
  %v259 = vpack.c.b16 %v209, %v204
  %v260 = vpack.c.b16 %v215, %v210
  %v261 = vpack.c.b16 %v216, %v211
  %v262 = vpack.c.b16 %v217, %v212
  %v263 = vpack.c.b16 %v218, %v213
  %v264 = vpack.c.b16 %v219, %v214
  %v265 = vpack.c.b16 %v225, %v220
  %v266 = vpack.c.b16 %v226, %v221
  %v267 = vpack.c.b16 %v227, %v222
  %v268 = vpack.c.b16 %v228, %v223
  %v269 = vpack.c.b16 %v229, %v224
  %v270 = vpack.c.b16 %v235, %v230
  %v271 = vpack.c.b16 %v236, %v231
  %v272 = vpack.c.b16 %v237, %v232
  %v273 = vpack.c.b16 %v238, %v233
  %v274 = vpack.c.b16 %v239, %v234
  %v275 = vpack.c.b16 %v240, %v240
  %v276 = vpack.c.b16 %v241, %v241
  %v277 = vpack.c.b16 %v242, %v242
  %v278 = vpack.c.b16 %v243, %v243
  %v279 = vpack.c.b16 %v244, %v244
  %v395 = vunpack.c.l.b16 %v54
  %v396 = vunpack.c.l.b16 %v55
  %v397 = vunpack.c.l.b16 %v56
  %v398 = vunpack.c.l.b16 %v57
  %v399 = vunpack.c.l.b16 %v58
  %v400 = vunpack.c.l.b16 %v59
  %v401 = vunpack.c.l.b16 %v60
  %v402 = vunpack.c.l.b16 %v61
  %v403 = vunpack.c.l.b16 %v62
  %v404 = vunpack.c.l.b16 %v63
  %v405 = vunpack.c.l.b16 %v64
  %v406 = vunpack.c.l.b16 %v65
  %v407 = vunpack.c.l.b16 %v66
  %v408 = vunpack.c.l.b16 %v67
  %v409 = vunpack.c.l.b16 %v68
  %v410 = vunpack.c.l.b16 %v69
  %v411 = vunpack.c.l.b16 %v70
  %v412 = vunpack.c.l.b16 %v71
  %v413 = vunpack.c.l.b16 %v72
  %v414 = vunpack.c.l.b16 %v73
  %v415 = vunpack.c.l.b16 %v74
  %v416 = vunpack.c.l.b16 %v75
  %v417 = vunpack.c.l.b16 %v76
  %v418 = vunpack.c.l.b16 %v77
  %v419 = vunpack.c.l.b16 %v78
  %v420 = vunpack.c.l.b16 %v79
  %v421 = vunpack.c.l.b16 %v80
  %v422 = vunpack.c.l.b16 %v81
  %v423 = vunpack.c.l.b16 %v82
  %v424 = vunpack.c.l.b16 %v83
  %v425 = vunpack.c.l.b16 %v84
  %v426 = vunpack.c.l.b16 %v85
  %v427 = vunpack.c.l.b16 %v86
  %v428 = vunpack.c.l.b16 %v87
  %v429 = vunpack.c.l.b16 %v88
  %v430 = vunpack.c.l.b16 %v89
  %v431 = vunpack.c.l.b16 %v90
  %v432 = vunpack.c.l.b16 %v91
  %v433 = vunpack.c.l.b16 %v92
  %v434 = vunpack.c.l.b16 %v93
  %v435 = vunpack.c.l.b16 %v94
  %v436 = vunpack.c.l.b16 %v95
  %v437 = vunpack.c.l.b16 %v96
  %v438 = vunpack.c.l.b16 %v97
  %v439 = vunpack.c.l.b16 %v98
  %v440 = vunpack.c.l.b16 %v99
  %v441 = vunpack.c.l.b16 %v100
  %v442 = vunpack.c.l.b16 %v101
  %v443 = vunpack.c.l.b16 %v102
  %v444 = vunpack.c.l.b16 %v103
  %v445 = vunpack.c.l.b16 %v104
  %v446 = vunpack.c.l.b16 %v105
  %v447 = vunpack.c.l.b16 %v106
  %v448 = vunpack.c.l.b16 %v107
  %v449 = vunpack.c.l.b16 %v108
  %v450 = vunpack.c.l.b16 %v109
  %v451 = vunpack.c.l.b16 %v110
  %v452 = vunpack.c.l.b16 %v111
  %v453 = vunpack.c.l.b16 %v112
  %v454 = vunpack.c.l.b16 %v113
  %v455 = vunpack.c.l.b16 %v114
  %v456 = vunpack.c.l.b16 %v115
  %v457 = vunpack.c.l.b16 %v116
  %v458 = vunpack.c.l.b16 %v117
  %v459 = vunpack.c.l.b16 %v118
  %v460 = vunpack.c.l.b16 %v119
  %v461 = vunpack.c.l.b16 %v120
  %v462 = vunpack.c.l.b16 %v121
  %v463 = vunpack.c.l.b16 %v122
  %v464 = vunpack.c.l.b16 %v123
  %v465 = vunpack.c.l.b16 %v124
  %v466 = vunpack.c.l.b16 %v125
  %v467 = vunpack.c.l.b16 %v126
  %v468 = vunpack.c.l.b16 %v127
  %v469 = vunpack.c.l.b16 %v128
  %v470 = vunpack.c.l.b16 %v129
  %v471 = vunpack.c.l.b16 %v130
  %v472 = vunpack.c.l.b16 %v131
  %v473 = vunpack.c.l.b16 %v132
  %v474 = vunpack.c.l.b16 %v133
  %v475 = vpack.c.b16 %v396, %v395
  %v476 = vpack.c.b16 %v398, %v397
  %v477 = vpack.c.b16 %v400, %v399
  %v478 = vpack.c.b16 %v402, %v401
  %v479 = vpack.c.b16 %v404, %v403
  %v480 = vpack.c.b16 %v406, %v405
  %v481 = vpack.c.b16 %v408, %v407
  %v482 = vpack.c.b16 %v410, %v409
  %v483 = vpack.c.b16 %v412, %v411
  %v484 = vpack.c.b16 %v414, %v413
  %v485 = vpack.c.b16 %v416, %v415
  %v486 = vpack.c.b16 %v418, %v417
  %v487 = vpack.c.b16 %v420, %v419
  %v488 = vpack.c.b16 %v422, %v421
  %v489 = vpack.c.b16 %v424, %v423
  %v490 = vpack.c.b16 %v426, %v425
  %v491 = vpack.c.b16 %v428, %v427
  %v492 = vpack.c.b16 %v430, %v429
  %v493 = vpack.c.b16 %v432, %v431
  %v494 = vpack.c.b16 %v434, %v433
  %v495 = vpack.c.b16 %v436, %v435
  %v496 = vpack.c.b16 %v438, %v437
  %v497 = vpack.c.b16 %v440, %v439
  %v498 = vpack.c.b16 %v442, %v441
  %v499 = vpack.c.b16 %v444, %v443
  %v500 = vpack.c.b16 %v446, %v445
  %v501 = vpack.c.b16 %v448, %v447
  %v502 = vpack.c.b16 %v450, %v449
  %v503 = vpack.c.b16 %v452, %v451
  %v504 = vpack.c.b16 %v454, %v453
  %v505 = vpack.c.b16 %v456, %v455
  %v506 = vpack.c.b16 %v458, %v457
  %v507 = vpack.c.b16 %v460, %v459
  %v508 = vpack.c.b16 %v462, %v461
  %v509 = vpack.c.b16 %v464, %v463
  %v510 = vpack.c.b16 %v466, %v465
  %v511 = vpack.c.b16 %v468, %v467
  %v512 = vpack.c.b16 %v470, %v469
  %v513 = vpack.c.b16 %v472, %v471
  %v514 = vpack.c.b16 %v474, %v473
  %555 = vmatprep.subr.bf16.mxu0 0
  %556 = vmatpush1.bf16.msra.mxu0 %v475
  %557 = vmatprep.subr.bf16.mxu0 0
  %558 = vmatpush1.bf16.msra.mxu0 %v476
  %559 = vmatprep.subr.bf16.mxu0 0
  %560 = vmatpush1.bf16.msra.mxu0 %v477
  %561 = vmatprep.subr.bf16.mxu0 0
  %562 = vmatpush1.bf16.msra.mxu0 %v478
  %563 = vmatprep.subr.bf16.mxu0 0
  %564 = vmatpush1.bf16.msra.mxu0 %v479
  %565 = vmatprep.subr.bf16.mxu0 0
  %566 = vmatpush1.bf16.msra.mxu0 %v480
  %567 = vmatprep.subr.bf16.mxu0 0
  %568 = vmatpush1.bf16.msra.mxu0 %v481
  %569 = vmatprep.subr.bf16.mxu0 0
  %570 = vmatpush1.bf16.msra.mxu0 %v482
  %571 = vmatprep.subr.bf16.mxu0 0
  %572 = vmatpush1.bf16.msra.mxu0 %v483
  %573 = vmatprep.subr.bf16.mxu0 0
  %574 = vmatpush1.bf16.msra.mxu0 %v484
  %575 = vmatprep.subr.bf16.mxu0 0
  %576 = vmatpush1.bf16.msra.mxu0 %v485
  %577 = vmatprep.subr.bf16.mxu0 0
  %578 = vmatpush1.bf16.msra.mxu0 %v486
  %579 = vmatprep.subr.bf16.mxu0 0
  %580 = vmatpush1.bf16.msra.mxu0 %v487
  %581 = vmatprep.subr.bf16.mxu0 0
  %582 = vmatpush1.bf16.msra.mxu0 %v488
  %583 = vmatprep.subr.bf16.mxu0 0
  %584 = vmatpush1.bf16.msra.mxu0 %v489
  %585 = vmatprep.subr.bf16.mxu0 0
  %586 = vmatpush1.bf16.msra.mxu0 %v490
  %587 = vmatprep.mubr.bf16.mxu0 %v246
  %588 = vmatmul.mubr.bf16.gmra.mrb[0].mxu0 %v245
  %v589 = vpop.f32.mrb[0].mxu0
  %v590 = vadd.f32 %v139, %v589
  %v591 = vpop.f32.mrb[0].mxu0
  %v592 = vpop.f32.mrb[0].mxu0
  %v593 = vadd.f32 %v139, %v592
  %v594 = vpop.f32.mrb[0].mxu0
  %595 = vmatprep.mubr.bf16.mxu0 %v251
  %596 = vmatmul.mubr.bf16.gmra.mrb[0].mxu0 %v250
  %v597 = vpop.f32.mrb[0].mxu0
  %v598 = vadd.f32 %v139, %v597
  %v599 = vpop.f32.mrb[0].mxu0
  %v600 = vpop.f32.mrb[0].mxu0
  %v601 = vadd.f32 %v139, %v600
  %v602 = vpop.f32.mrb[0].mxu0
  %603 = vmatprep.mubr.bf16.mxu0 %v256
  %604 = vmatmul.mubr.bf16.gmra.mrb[0].mxu0 %v255
  %v605 = vpop.f32.mrb[0].mxu0
  %v606 = vadd.f32 %v139, %v605
  %v607 = vpop.f32.mrb[0].mxu0
  %v608 = vpop.f32.mrb[0].mxu0
  %v609 = vadd.f32 %v139, %v608
  %v610 = vpop.f32.mrb[0].mxu0
  %611 = vmatprep.mubr.bf16.mxu0 %v261
  %612 = vmatmul.mubr.bf16.gmra.mrb[0].mxu0 %v260
  %v613 = vpop.f32.mrb[0].mxu0
  %v614 = vadd.f32 %v139, %v613
  %v615 = vpop.f32.mrb[0].mxu0
  %v616 = vpop.f32.mrb[0].mxu0
  %v617 = vadd.f32 %v139, %v616
  %v618 = vpop.f32.mrb[0].mxu0
  %619 = vmatprep.mubr.bf16.mxu0 %v266
  %620 = vmatmul.mubr.bf16.gmra.mrb[0].mxu0 %v265
  %v621 = vpop.f32.mrb[0].mxu0
  %v622 = vadd.f32 %v139, %v621
  %v623 = vpop.f32.mrb[0].mxu0
  %v624 = vpop.f32.mrb[0].mxu0
  %v625 = vadd.f32 %v139, %v624
  %v626 = vpop.f32.mrb[0].mxu0
  %627 = vmatprep.mubr.bf16.mxu0 %v271
  %628 = vmatmul.mubr.bf16.gmra.mrb[0].mxu0 %v270
  %v629 = vpop.f32.mrb[0].mxu0
  %v630 = vadd.f32 %v139, %v629
  %v631 = vpop.f32.mrb[0].mxu0
  %v632 = vpop.f32.mrb[0].mxu0
  %v633 = vadd.f32 %v139, %v632
  %v634 = vpop.f32.mrb[0].mxu0
  %635 = vmatprep.mubr.bf16.mxu0 %v276
  %636 = vmatmul.mubr.bf16.gmra.mrb[0].mxu0 %v275
  %v637 = vpop.f32.mrb[0].mxu0
  %v638 = vadd.f32 %v139, %v637
  %v639 = vpop.f32.mrb[0].mxu0
  %v640 = vpop.f32.mrb[0].mxu0
  %v641 = vpop.f32.mrb[0].mxu0
  %642 = vdwg.mxu0
  %643 = vmatprep.subr.bf16.mxu0 0
  %644 = vmatpush1.bf16.msra.mxu0 %v491
  %645 = vmatprep.subr.bf16.mxu0 0
  %646 = vmatpush1.bf16.msra.mxu0 %v492
  %647 = vmatprep.subr.bf16.mxu0 0
  %648 = vmatpush1.bf16.msra.mxu0 %v493
  %649 = vmatprep.subr.bf16.mxu0 0
  %650 = vmatpush1.bf16.msra.mxu0 %v494
  %651 = vmatprep.subr.bf16.mxu0 0
  %652 = vmatpush1.bf16.msra.mxu0 %v495
  %653 = vmatprep.subr.bf16.mxu0 0
  %654 = vmatpush1.bf16.msra.mxu0 %v496
  %655 = vmatprep.subr.bf16.mxu0 0
  %656 = vmatpush1.bf16.msra.mxu0 %v497
  %657 = vmatprep.subr.bf16.mxu0 0
  %658 = vmatpush1.bf16.msra.mxu0 %v498
  %659 = vmatprep.subr.bf16.mxu0 0
  %660 = vmatpush1.bf16.msra.mxu0 %v499
  %661 = vmatprep.subr.bf16.mxu0 0
  %662 = vmatpush1.bf16.msra.mxu0 %v500
  %663 = vmatprep.subr.bf16.mxu0 0
  %664 = vmatpush1.bf16.msra.mxu0 %v501
  %665 = vmatprep.subr.bf16.mxu0 0
  %666 = vmatpush1.bf16.msra.mxu0 %v502
  %667 = vmatprep.subr.bf16.mxu0 0
  %668 = vmatpush1.bf16.msra.mxu0 %v503
  %669 = vmatprep.subr.bf16.mxu0 0
  %670 = vmatpush1.bf16.msra.mxu0 %v504
  %671 = vmatprep.subr.bf16.mxu0 0
  %672 = vmatpush1.bf16.msra.mxu0 %v505
  %673 = vmatprep.subr.bf16.mxu0 0
  %674 = vmatpush1.bf16.msra.mxu0 %v506
  %675 = vmatprep.mubr.bf16.mxu0 %v248
  %676 = vmatmul.mubr.bf16.gmra.mrb[0].mxu0 %v247
  %v677 = vpop.f32.mrb[0].mxu0
  %v678 = vadd.f32 %v590, %v677
  %v679 = vpop.f32.mrb[0].mxu0
  %v680 = vpop.f32.mrb[0].mxu0
  %v681 = vadd.f32 %v593, %v680
  %v682 = vpop.f32.mrb[0].mxu0
  %683 = vmatprep.mubr.bf16.mxu0 %v253
  %684 = vmatmul.mubr.bf16.gmra.mrb[0].mxu0 %v252
  %v685 = vpop.f32.mrb[0].mxu0
  %v686 = vadd.f32 %v598, %v685
  %v687 = vpop.f32.mrb[0].mxu0
  %v688 = vpop.f32.mrb[0].mxu0
  %v689 = vadd.f32 %v601, %v688
  %v690 = vpop.f32.mrb[0].mxu0
  %691 = vmatprep.mubr.bf16.mxu0 %v258
  %692 = vmatmul.mubr.bf16.gmra.mrb[0].mxu0 %v257
  %v693 = vpop.f32.mrb[0].mxu0
  %v694 = vadd.f32 %v606, %v693
  %v695 = vpop.f32.mrb[0].mxu0
  %v696 = vpop.f32.mrb[0].mxu0
  %v697 = vadd.f32 %v609, %v696
  %v698 = vpop.f32.mrb[0].mxu0
  %699 = vmatprep.mubr.bf16.mxu0 %v263
  %700 = vmatmul.mubr.bf16.gmra.mrb[0].mxu0 %v262
  %v701 = vpop.f32.mrb[0].mxu0
  %v702 = vadd.f32 %v614, %v701
  %v703 = vpop.f32.mrb[0].mxu0
  %v704 = vpop.f32.mrb[0].mxu0
  %v705 = vadd.f32 %v617, %v704
  %v706 = vpop.f32.mrb[0].mxu0
  %707 = vmatprep.mubr.bf16.mxu0 %v268
  %708 = vmatmul.mubr.bf16.gmra.mrb[0].mxu0 %v267
  %v709 = vpop.f32.mrb[0].mxu0
  %v710 = vadd.f32 %v622, %v709
  %v711 = vpop.f32.mrb[0].mxu0
  %v712 = vpop.f32.mrb[0].mxu0
  %v713 = vadd.f32 %v625, %v712
  %v714 = vpop.f32.mrb[0].mxu0
  %715 = vmatprep.mubr.bf16.mxu0 %v273
  %716 = vmatmul.mubr.bf16.gmra.mrb[0].mxu0 %v272
  %v717 = vpop.f32.mrb[0].mxu0
  %v718 = vadd.f32 %v630, %v717
  %v719 = vpop.f32.mrb[0].mxu0
  %v720 = vpop.f32.mrb[0].mxu0
  %v721 = vadd.f32 %v633, %v720
  %v722 = vpop.f32.mrb[0].mxu0
  %723 = vmatprep.mubr.bf16.mxu0 %v278
  %724 = vmatmul.mubr.bf16.gmra.mrb[0].mxu0 %v277
  %v725 = vpop.f32.mrb[0].mxu0
  %v726 = vadd.f32 %v638, %v725
  %v727 = vpop.f32.mrb[0].mxu0
  %v728 = vpop.f32.mrb[0].mxu0
  %v729 = vpop.f32.mrb[0].mxu0
  %730 = vdwg.mxu0
  %731 = vmatprep.subr.bf16.mxu0 0
  %732 = vmatpush1.bf16.msra.mxu0 %v507
  %733 = vmatprep.subr.bf16.mxu0 0
  %734 = vmatpush1.bf16.msra.mxu0 %v508
  %735 = vmatprep.subr.bf16.mxu0 0
  %736 = vmatpush1.bf16.msra.mxu0 %v509
  %737 = vmatprep.subr.bf16.mxu0 0
  %738 = vmatpush1.bf16.msra.mxu0 %v510
  %739 = vmatprep.subr.bf16.mxu0 0
  %740 = vmatpush1.bf16.msra.mxu0 %v511
  %741 = vmatprep.subr.bf16.mxu0 0
  %742 = vmatpush1.bf16.msra.mxu0 %v512
  %743 = vmatprep.subr.bf16.mxu0 0
  %744 = vmatpush1.bf16.msra.mxu0 %v513
  %745 = vmatprep.subr.bf16.mxu0 0
  %746 = vmatpush1.bf16.msra.mxu0 %v514
  %747 = vmatprep.subr.bf16.mxu0 0
  %748 = vmatpush1.bf16.msra.mxu0 0
  %749 = vmatprep.subr.bf16.mxu0 0
  %750 = vmatpush1.bf16.msra.mxu0 0
  %751 = vmatprep.subr.bf16.mxu0 0
  %752 = vmatpush1.bf16.msra.mxu0 0
  %753 = vmatprep.subr.bf16.mxu0 0
  %754 = vmatpush1.bf16.msra.mxu0 0
  %755 = vmatprep.subr.bf16.mxu0 0
  %756 = vmatpush1.bf16.msra.mxu0 0
  %757 = vmatprep.subr.bf16.mxu0 0
  %758 = vmatpush1.bf16.msra.mxu0 0
  %759 = vmatprep.subr.bf16.mxu0 0
  %760 = vmatpush1.bf16.msra.mxu0 0
  %761 = vmatprep.subr.bf16.mxu0 0
  %762 = vmatpush1.bf16.msra.mxu0 0
  %763 = vmatprep.mubr.bf16.mxu0 0
  %764 = vmatmul.mubr.bf16.gmra.mrb[0].mxu0 %v249
  %v765 = vpop.f32.mrb[0].mxu0
  %v766 = vadd.f32 %v678, %v765
  %v767 = vpop.f32.mrb[0].mxu0
  %v768 = vpop.f32.mrb[0].mxu0
  %v769 = vadd.f32 %v681, %v768
  %v770 = vpop.f32.mrb[0].mxu0
  %771 = vmatprep.mubr.bf16.mxu0 0
  %772 = vmatmul.mubr.bf16.gmra.mrb[0].mxu0 %v254
  %v773 = vpop.f32.mrb[0].mxu0
  %v774 = vadd.f32 %v686, %v773
  %v775 = vpop.f32.mrb[0].mxu0
  %v776 = vpop.f32.mrb[0].mxu0
  %v777 = vadd.f32 %v689, %v776
  %v778 = vpop.f32.mrb[0].mxu0
  %779 = vmatprep.mubr.bf16.mxu0 0
  %780 = vmatmul.mubr.bf16.gmra.mrb[0].mxu0 %v259
  %v781 = vpop.f32.mrb[0].mxu0
  %v782 = vadd.f32 %v694, %v781
  %v783 = vpop.f32.mrb[0].mxu0
  %v784 = vpop.f32.mrb[0].mxu0
  %v785 = vadd.f32 %v697, %v784
  %v786 = vpop.f32.mrb[0].mxu0
  %787 = vmatprep.mubr.bf16.mxu0 0
  %788 = vmatmul.mubr.bf16.gmra.mrb[0].mxu0 %v264
  %v789 = vpop.f32.mrb[0].mxu0
  %v790 = vadd.f32 %v702, %v789
  %v791 = vpop.f32.mrb[0].mxu0
  %v792 = vpop.f32.mrb[0].mxu0
  %v793 = vadd.f32 %v705, %v792
  %v794 = vpop.f32.mrb[0].mxu0
  %795 = vmatprep.mubr.bf16.mxu0 0
  %796 = vmatmul.mubr.bf16.gmra.mrb[0].mxu0 %v269
  %v797 = vpop.f32.mrb[0].mxu0
  %v798 = vadd.f32 %v710, %v797
  %v799 = vpop.f32.mrb[0].mxu0
  %v800 = vpop.f32.mrb[0].mxu0
  %v801 = vadd.f32 %v713, %v800
  %v802 = vpop.f32.mrb[0].mxu0
  %803 = vmatprep.mubr.bf16.mxu0 0
  %804 = vmatmul.mubr.bf16.gmra.mrb[0].mxu0 %v274
  %v805 = vpop.f32.mrb[0].mxu0
  %v806 = vadd.f32 %v718, %v805
  %v807 = vpop.f32.mrb[0].mxu0
  %v808 = vpop.f32.mrb[0].mxu0
  %v809 = vadd.f32 %v721, %v808
  %v810 = vpop.f32.mrb[0].mxu0
  %811 = vmatprep.mubr.bf16.mxu0 0
  %812 = vmatmul.mubr.bf16.gmra.mrb[0].mxu0 %v279
  %v813 = vpop.f32.mrb[0].mxu0
  %v814 = vadd.f32 %v726, %v813
  %v815 = vpop.f32.mrb[0].mxu0
  %v816 = vpop.f32.mrb[0].mxu0
  %v817 = vpop.f32.mrb[0].mxu0
  %818 = vdwg.mxu0
  %v819 = vmax.f32 %v766, 0.0
  %v820 = vmax.f32 %v769, 0.0
  %v821 = vmax.f32 %v774, 0.0
  %v822 = vmax.f32 %v777, 0.0
  %v823 = vmax.f32 %v782, 0.0
  %v824 = vmax.f32 %v785, 0.0
  %v825 = vmax.f32 %v790, 0.0
  %v826 = vmax.f32 %v793, 0.0
  %v827 = vmax.f32 %v798, 0.0
  %v828 = vmax.f32 %v801, 0.0
  %v829 = vmax.f32 %v806, 0.0
  %v830 = vmax.f32 %v809, 0.0
  %v831 = vmax.f32 %v814, 0.0
  %v832 = vpack.c.bf16 %v820, %v819
  %v833 = vpack.c.bf16 %v822, %v821
  %v834 = vpack.c.bf16 %v824, %v823
  %v835 = vpack.c.bf16 %v826, %v825
  %v836 = vpack.c.bf16 %v828, %v827
  %v837 = vpack.c.bf16 %v830, %v829
  %v838 = vpack.c.bf16 %v831, %v831
  %v846 = vunpack.c.l.b16 %v832
  %v847 = vunpack.c.h.b16 %v832
  %v848 = vunpack.c.l.b16 %v833
  %v849 = vunpack.c.h.b16 %v833
  %v850 = vunpack.c.l.b16 %v834
  %v851 = vunpack.c.h.b16 %v834
  %v852 = vunpack.c.l.b16 %v835
  %v853 = vunpack.c.h.b16 %v835
  %v854 = vunpack.c.l.b16 %v836
  %v855 = vunpack.c.h.b16 %v836
  %v856 = vunpack.c.l.b16 %v837
  %v857 = vunpack.c.h.b16 %v837
  %v858 = vunpack.c.l.b16 %v838
  %v859 = vpack.c.b16 %v846, %v846
  %v860 = vpack.c.b16 %v847, %v847
  %v861 = vpack.c.b16 %v848, %v848
  %v862 = vpack.c.b16 %v849, %v849
  %v863 = vpack.c.b16 %v850, %v850
  %v864 = vpack.c.b16 %v851, %v851
  %v865 = vpack.c.b16 %v852, %v852
  %v866 = vpack.c.b16 %v853, %v853
  %v867 = vpack.c.b16 %v854, %v854
  %v868 = vpack.c.b16 %v855, %v855
  %v869 = vpack.c.b16 %v856, %v856
  %v870 = vpack.c.b16 %v857, %v857
  %v871 = vpack.c.b16 %v858, %v858
  %vm885 = vcmask 519168
  %886 = vst.msk [vmem:[%s3] sm:$0xf] %vm885, %v859
  %887 = vst.msk [vmem:[%s3 + $0x4] sm:$0xf] %vm885, %v860
  %888 = vst.msk [vmem:[%s3 + $0x8] sm:$0xf] %vm885, %v861
  %889 = vst.msk [vmem:[%s3 + $0xc] sm:$0xf] %vm885, %v862
  %890 = vst.msk [vmem:[%s3 + $0x10] sm:$0xf] %vm885, %v863
  %891 = vst.msk [vmem:[%s3 + $0x14] sm:$0xf] %vm885, %v864
  %892 = vst.msk [vmem:[%s3 + $0x18] sm:$0xf] %vm885, %v865
  %893 = vst.msk [vmem:[%s3 + $0x1c] sm:$0xf] %vm885, %v866
  %894 = vst.msk [vmem:[%s3 + $0x20] sm:$0xf] %vm885, %v867
  %895 = vst.msk [vmem:[%s3 + $0x24] sm:$0xf] %vm885, %v868
  %896 = vst.msk [vmem:[%s3 + $0x28] sm:$0xf] %vm885, %v869
  %897 = vst.msk [vmem:[%s3 + $0x2c] sm:$0xf] %vm885, %v870
  %vm898 = vcmask 516096
  %899 = vst.msk [vmem:[%s3 + $0x30] sm:$0x1] %vm898, %v871
  // Predicated region
  $region14: #{dqn_forward.6} parent=0 // pred_check
    _
  $region15: #{dqn_forward.6} parent=0 // pred_check_branch
    %901 = sbr.rel (0) target = $region17
  $region16: #{dqn_forward.6} parent=0 // pred_region
    _
  $region17: #{dqn_forward.6} parent=0 // pred_fallthru
    _
  // Predicated region
  $region18: #{dqn_forward.6} parent=0 // pred_check
    _
  $region19: #{dqn_forward.6} parent=0 // pred_check_branch
    %903 = sbr.rel (0) target = $region21
  $region20: #{dqn_forward.6} parent=0 // pred_region
    _
  $region21: #{dqn_forward.6} parent=0 // pred_fallthru
    _

// kernel: dqn_forward.7
$region0: #{dqn_forward.7}
  #allocation0 [shape = 'u32[]', space=smem, size = 0x4, offset = 0x4, fixed_abs, tag = 'smem constant byte address 0x4 - core index']
  #allocation1 [shape = 'u32[144,128]{1,0:T(1,128)}', space=vmem, size = 0x12000, scoped, tag = 'internal scratch']
  #allocation2 [shape = 'f32[2,512]{1,0:T(2,128)}', space=vmem, size = 0x1000, scoped, tag = 'scratch operand']
  %s0 = inlined_call_operand.vmem [shape: bf16[2,3584], index: 0, kind: input, shape index: {}]
  %s1 = inlined_call_operand.vmem [shape: bf16[3584,512], index: 1, kind: input, shape index: {}]
  %s2 = inlined_call_operand.vmem [shape: f32[1,512], index: 2, kind: input, shape index: {}]
  %s3 = inlined_call_operand.vmem [shape: bf16[512,128], index: 3, kind: input, shape index: {}]
  %s4 = inlined_call_operand.vmem [shape: f32[1,128], index: 4, kind: input, shape index: {}]
  %s5 = inlined_call_operand.hbm [shape: f32[2,128], index: 5, kind: output, shape index: {}]
  %s6 = sld [smem:[#allocation0]]
  $region61: #{dqn_forward.7} parent=0
    _
  %s8 = ssub.s32 1, %s6
  %s9 = scalar_select 0, %s8, %s6
  $region1: #{dqn_forward.7} parent=0
    #allocation3 [shape = 'u8[1024]{0}', space=vmem, size = 0x400, scoped, tag = 'output window, operand 0, single buffered']
    #allocation4 [shape = 's32[2]{0}', space=sflag, size = 0x8, scoped, tag = 'scoped memory for dqn_forward.7']
    %10 = vsyncpa [#allocation4], 0
    loop: start=0, step=1, limit=4
    $region2: #{dqn_forward.7} parent=1 // loop_pre_header
      _
    $region3: #{dqn_forward.7} parent=1 // loop_header
      %s12 = sphi 0, %s16
      %p13 = scmp.ge.s32.totalorder %s12, 4
      %s19 = sphi 0, %s31
      %s20 = sphi 0, %s27
      %s21 = sphi 0, %s19
      %s22 = sphi 0, %s20
      %s23 = sphi 0, %s21
      %s24 = sphi 0, %s22
      %s36 = sphi 0, %s38
      %s39 = sphi 0, %s36
      %s40 = sphi 0, %s39
      %s56 = sphi 0, %s40
      %s62 = sphi 0, %s64
      %s65 = sphi 0, %s62
      %s66 = sphi 0, %s65
      %s82 = sphi 0, %s66
      %s86 = sphi 0, %s86
      %s88 = sphi 0, %s86
      %s89 = sphi 0, %s88
      %s103 = sphi 0, %s89
      %s107 = sphi 0, %s107
      %s109 = sphi 0, %s107
      %s110 = sphi 0, %s109
      %s124 = sphi 0, %s110
      %s128 = sphi 0, %s128
      %s130 = sphi 0, %s128
      %s131 = sphi 0, %s130
      %s145 = sphi 0, %s131
      %s151 = sphi 0, %s153
      %s154 = sphi 0, %s151
      %s155 = sphi 0, %s154
      %s171 = sphi 0, %s155
    $region4: #{dqn_forward.7} parent=1 // loop_header_branch
      %15 = sbr.rel (%p13) target = $region8
    $region5: #{dqn_forward.7} parent=1 // loop_body
      %s17 = ssub.s32 %s12, 1
      %s18 = ssub.s32 %s12, 2
      %s25 = sadd.s32 1, %s20
      %p26 = scmp.ge.s32.totalorder %s25, 2
      %s27 = scalar_select %p26, 0, %s25
      %s28 = sadd.s32 1, %s19
      %s29 = scalar_select %p26, %s28, %s19
      %p30 = scmp.ge.s32.totalorder %s29, 1
      %s31 = scalar_select %p30, 0, %s29
      %s32 = ssub.s32 %s19, %s31
      %s33 = ssub.s32 %s20, %s27
      %s34 = sor.u32 %s32, %s33
      %p35 = scmp.eq.s32.totalorder %s34, 0
      %s37 = sadd.s32 %s36, 1
      %s38 = scalar_select %p35, %s36, %s37
      %p41 = pneg %p35
      %p42 = scmp.eq.s32.totalorder %s12, 1
      %p43 = por %p41, %p42
      %p44 = scmp.ne.s32.totalorder %s36, %s39
      %p45 = scmp.eq.s32.totalorder %s12, 0
      %p46 = por %p44, %p45
      %p47 = scmp.ne.s32.totalorder %s36, %s39
      %p48 = scmp.eq.s32.totalorder %s17, 1
      %p49 = por %p47, %p48
      %p50 = scmp.ne.s32.totalorder %s39, %s40
      %p51 = scmp.eq.s32.totalorder %s17, 0
      %p52 = por %p50, %p51
      %p53 = scmp.ne.s32.totalorder %s39, %s40
      %p54 = scmp.eq.s32.totalorder %s18, 1
      %p55 = por %p53, %p54
      %p57 = scmp.ne.s32.totalorder %s40, %s56
      %p58 = scmp.eq.s32.totalorder %s18, 0
      %p59 = por %p57, %p58
      %s60 = ssub.s32 %s20, %s27
      %p61 = scmp.eq.s32.totalorder %s60, 0
      %s63 = sadd.s32 %s62, 1
      %s64 = scalar_select %p61, %s62, %s63
      %p67 = pneg %p61
      %p68 = scmp.eq.s32.totalorder %s12, 1
      %p69 = por %p67, %p68
      %p70 = scmp.ne.s32.totalorder %s62, %s65
      %p71 = scmp.eq.s32.totalorder %s12, 0
      %p72 = por %p70, %p71
      %p73 = scmp.ne.s32.totalorder %s62, %s65
      %p74 = scmp.eq.s32.totalorder %s17, 1
      %p75 = por %p73, %p74
      %p76 = scmp.ne.s32.totalorder %s65, %s66
      %p77 = scmp.eq.s32.totalorder %s17, 0
      %p78 = por %p76, %p77
      %p79 = scmp.ne.s32.totalorder %s65, %s66
      %p80 = scmp.eq.s32.totalorder %s18, 1
      %p81 = por %p79, %p80
      %p83 = scmp.ne.s32.totalorder %s66, %s82
      %p84 = scmp.eq.s32.totalorder %s18, 0
      %p85 = por %p83, %p84
      %s87 = sadd.s32 %s86, 1
      %p90 = scmp.eq.s32.totalorder %s12, 1
      %p91 = scmp.ne.s32.totalorder %s86, %s88
      %p92 = scmp.eq.s32.totalorder %s12, 0
      %p93 = por %p91, %p92
      %p94 = scmp.ne.s32.totalorder %s86, %s88
      %p95 = scmp.eq.s32.totalorder %s17, 1
      %p96 = por %p94, %p95
      %p97 = scmp.ne.s32.totalorder %s88, %s89
      %p98 = scmp.eq.s32.totalorder %s17, 0
      %p99 = por %p97, %p98
      %p100 = scmp.ne.s32.totalorder %s88, %s89
      %p101 = scmp.eq.s32.totalorder %s18, 1
      %p102 = por %p100, %p101
      %p104 = scmp.ne.s32.totalorder %s89, %s103
      %p105 = scmp.eq.s32.totalorder %s18, 0
      %p106 = por %p104, %p105
      %s108 = sadd.s32 %s107, 1
      %p111 = scmp.eq.s32.totalorder %s12, 1
      %p112 = scmp.ne.s32.totalorder %s107, %s109
      %p113 = scmp.eq.s32.totalorder %s12, 0
      %p114 = por %p112, %p113
      %p115 = scmp.ne.s32.totalorder %s107, %s109
      %p116 = scmp.eq.s32.totalorder %s17, 1
      %p117 = por %p115, %p116
      %p118 = scmp.ne.s32.totalorder %s109, %s110
      %p119 = scmp.eq.s32.totalorder %s17, 0
      %p120 = por %p118, %p119
      %p121 = scmp.ne.s32.totalorder %s109, %s110
      %p122 = scmp.eq.s32.totalorder %s18, 1
      %p123 = por %p121, %p122
      %p125 = scmp.ne.s32.totalorder %s110, %s124
      %p126 = scmp.eq.s32.totalorder %s18, 0
      %p127 = por %p125, %p126
      %s129 = sadd.s32 %s128, 1
      %p132 = scmp.eq.s32.totalorder %s12, 1
      %p133 = scmp.ne.s32.totalorder %s128, %s130
      %p134 = scmp.eq.s32.totalorder %s12, 0
      %p135 = por %p133, %p134
      %p136 = scmp.ne.s32.totalorder %s128, %s130
      %p137 = scmp.eq.s32.totalorder %s17, 1
      %p138 = por %p136, %p137
      %p139 = scmp.ne.s32.totalorder %s130, %s131
      %p140 = scmp.eq.s32.totalorder %s17, 0
      %p141 = por %p139, %p140
      %p142 = scmp.ne.s32.totalorder %s130, %s131
      %p143 = scmp.eq.s32.totalorder %s18, 1
      %p144 = por %p142, %p143
      %p146 = scmp.ne.s32.totalorder %s131, %s145
      %p147 = scmp.eq.s32.totalorder %s18, 0
      %p148 = por %p146, %p147
      %s149 = ssub.s32 %s19, %s31
      %p150 = scmp.eq.s32.totalorder %s149, 0
      %s152 = sadd.s32 %s151, 1
      %s153 = scalar_select %p150, %s151, %s152
      %p156 = pneg %p150
      %p157 = scmp.eq.s32.totalorder %s12, 1
      %p158 = por %p156, %p157
      %p159 = scmp.ne.s32.totalorder %s151, %s154
      %p160 = scmp.eq.s32.totalorder %s12, 0
      %p161 = por %p159, %p160
      %p162 = scmp.ne.s32.totalorder %s151, %s154
      %p163 = scmp.eq.s32.totalorder %s17, 1
      %p164 = por %p162, %p163
      %p165 = scmp.ne.s32.totalorder %s154, %s155
      %p166 = scmp.eq.s32.totalorder %s17, 0
      %p167 = por %p165, %p166
      %p168 = scmp.ne.s32.totalorder %s154, %s155
      %p169 = scmp.eq.s32.totalorder %s18, 1
      %p170 = por %p168, %p169
      %p172 = scmp.ne.s32.totalorder %s155, %s171
      %p173 = scmp.eq.s32.totalorder %s18, 0
      %p174 = por %p172, %p173
      %p175 = scmp.le.s32.totalorder 1, %s12
      %p176 = scmp.lt.s32.totalorder %s12, 3
      %p177 = pnand %p175, %p176
      %p178 = pneg %p177
      // Predicated region
      $region9: #{dqn_forward.7} parent=5 // pred_check
        _
      $region10: #{dqn_forward.7} parent=5 // pred_check_branch
        %180 = sbr.rel (%p177) target = $region12
      $region11: #{dqn_forward.7} parent=5 // pred_region
        %s181 = ssub.s32 %s12, 1
        // Predicated region
        $region13: #{dqn_forward.7} parent=11 // pred_check
          %p182 = pneg %p99
        $region14: #{dqn_forward.7} parent=11 // pred_check_branch
          %184 = sbr.rel (%p182) target = $region16
        $region15: #{dqn_forward.7} parent=11 // pred_region
          _
        $region16: #{dqn_forward.7} parent=11 // pred_fallthru
          _
        // Predicated region
        $region17: #{dqn_forward.7} parent=11 // pred_check
          %p185 = pneg %p120
        $region18: #{dqn_forward.7} parent=11 // pred_check_branch
          %187 = sbr.rel (%p185) target = $region20
        $region19: #{dqn_forward.7} parent=11 // pred_region
          _
        $region20: #{dqn_forward.7} parent=11 // pred_fallthru
          _
        // Predicated region
        $region21: #{dqn_forward.7} parent=11 // pred_check
          %p188 = pneg %p141
        $region22: #{dqn_forward.7} parent=11 // pred_check_branch
          %190 = sbr.rel (%p188) target = $region24
        $region23: #{dqn_forward.7} parent=11 // pred_region
          _
        $region24: #{dqn_forward.7} parent=11 // pred_fallthru
          _
      $region12: #{dqn_forward.7} parent=5 // pred_fallthru
        _
      %p191 = scmp.lt.s32.totalorder %s12, 2
      // Predicated region
      $region25: #{dqn_forward.7} parent=5 // pred_check
        %p192 = pneg %p191
      $region26: #{dqn_forward.7} parent=5 // pred_check_branch
        %194 = sbr.rel (%p192) target = $region28
      $region27: #{dqn_forward.7} parent=5 // pred_region
        // Predicated region
        $region29: #{dqn_forward.7} parent=27 // pred_check
          %p195 = pneg %p46
        $region30: #{dqn_forward.7} parent=27 // pred_check_branch
          %197 = sbr.rel (%p195) target = $region32
        $region31: #{dqn_forward.7} parent=27 // pred_region
          %s198 = smul.u32 14, %s20
          %p199 = scmp.lt.s32.totalorder %s19, 0
          %s200 = scalar_select %p199, %s19, 0
          %p201 = scmp.lt.s32.totalorder %s198, 27
          %s202 = scalar_select %p201, %s198, 27
          %s203 = smul.addr %s200, 28
          %s204 = sadd.s32 %s202, %s203
          %s205 = scalar_lea.vmem %s0, %s204
          %s206 = smul.u32 14, %s20
        $region32: #{dqn_forward.7} parent=27 // pred_fallthru
          _
        // Predicated region
        $region33: #{dqn_forward.7} parent=27 // pred_check
          %p207 = pneg %p72
        $region34: #{dqn_forward.7} parent=27 // pred_check_branch
          %209 = sbr.rel (%p207) target = $region36
        $region35: #{dqn_forward.7} parent=27 // pred_region
          %s210 = smul.u32 224, %s20
          %p211 = scmp.lt.s32.totalorder %s210, 447
          %s212 = scalar_select %p211, %s210, 447
          %s213 = smul.addr %s212, 4
          %s214 = smul.addr %s213, 4
          %s215 = scalar_lea.vmem %s1, %s214
          %s216 = smul.u32 224, %s20
        $region36: #{dqn_forward.7} parent=27 // pred_fallthru
          _
      $region28: #{dqn_forward.7} parent=5 // pred_fallthru
        _
      %p217 = scmp.le.s32.totalorder 1, %s12
      %p218 = scmp.lt.s32.totalorder %s12, 3
      %p219 = pnand %p217, %p218
      %p220 = pneg %p219
      // Predicated region
      $region37: #{dqn_forward.7} parent=5 // pred_check
        _
      $region38: #{dqn_forward.7} parent=5 // pred_check_branch
        %222 = sbr.rel (%p219) target = $region40
      $region39: #{dqn_forward.7} parent=5 // pred_region
        %s223 = ssub.s32 %s12, 1
        %s224 = smul.u32 14, %s22
        %p225 = scmp.lt.s32.totalorder %s21, 0
        %s226 = scalar_select %p225, %s21, 0
        %p227 = scmp.lt.s32.totalorder %s224, 27
        %s228 = scalar_select %p227, %s224, 27
        %s229 = smul.addr %s226, 28
        %s230 = sadd.s32 %s228, %s229
        %s231 = scalar_lea.vmem %s0, %s230
        %p232 = pneg %p52
        %p233 = pneg %p49
        %s234 = smul.u32 224, %s22
        %p235 = scmp.lt.s32.totalorder %s234, 447
        %s236 = scalar_select %p235, %s234, 447
        %s237 = smul.addr %s236, 4
        %s238 = smul.addr %s237, 4
        %s239 = scalar_lea.vmem %s1, %s238
        %p240 = pneg %p78
        %p241 = pneg %p75
        %p242 = pneg %p99
        %p243 = pneg %p96
        %p244 = pneg %p120
        %p245 = pneg %p117
        %p246 = pneg %p141
        %p247 = pneg %p138
        %p248 = pneg %p167
        %p249 = pneg %p164
        %s250 = smul.u32 14, %s22
        %p251 = scmp.lt.s32.totalorder %s21, 0
        %s252 = scalar_select %p251, %s21, 0
        %p253 = scmp.lt.s32.totalorder %s250, 27
        %s254 = scalar_select %p253, %s250, 27
        %s255 = smul.addr %s252, 28
        %s256 = sadd.s32 %s254, %s255
        %s257 = scalar_lea.vmem %s0, %s256
        %s258 = smul.u32 14, %s22
        %s259 = smul.u32 224, %s22
        %p260 = scmp.lt.s32.totalorder %s259, 447
        %s261 = scalar_select %p260, %s259, 447
        %s262 = smul.addr %s261, 4
        %s263 = smul.addr %s262, 4
        %s264 = scalar_lea.vmem %s1, %s263
        %s265 = smul.u32 224, %s22
        %p267 = scmp.eq.s32.totalorder %s22, 0
        // Predicated region
        $region41: #{dqn_forward.7} parent=39 // pred_check
          %p268 = pneg %p267
        $region42: #{dqn_forward.7} parent=39 // pred_check_branch
          %270 = sbr.rel (%p268) target = $region44
        $region43: #{dqn_forward.7} parent=39 // pred_region
          %271 = vst [vmem:[#allocation2] sm:$0xff] 0.0
        $region44: #{dqn_forward.7} parent=39 // pred_fallthru
          _
        %v272 = vld [vmem:[#allocation2] sm:$0xff]
        %v273 = vld [vmem:[%s257] sm:$0xff]
        %v274 = vld [vmem:[%s257 + $0x8] sm:$0x3f]
        %v275 = vld [vmem:[%s264] sm:$0xff]
        %v276 = vld [vmem:[%s264 + $0x8] sm:$0xff]
        %v277 = vld [vmem:[%s264 + $0x10] sm:$0xff]
        %v278 = vld [vmem:[%s264 + $0x18] sm:$0xff]
        %v279 = vld [vmem:[%s264 + $0x20] sm:$0xff]
        %v280 = vld [vmem:[%s264 + $0x28] sm:$0xff]
        %v281 = vld [vmem:[%s264 + $0x30] sm:$0xff]
        %v282 = vld [vmem:[%s264 + $0x38] sm:$0xff]
        %v283 = vld [vmem:[%s264 + $0x40] sm:$0xff]
        %v284 = vld [vmem:[%s264 + $0x48] sm:$0xff]
        %v285 = vld [vmem:[%s264 + $0x50] sm:$0xff]
        %v286 = vld [vmem:[%s264 + $0x58] sm:$0xff]
        %v287 = vld [vmem:[%s264 + $0x60] sm:$0xff]
        %v288 = vld [vmem:[%s264 + $0x68] sm:$0xff]
        %v289 = vld [vmem:[%s264 + $0x70] sm:$0xff]
        %v290 = vld [vmem:[%s264 + $0x78] sm:$0xff]
        %v291 = vld [vmem:[%s264 + $0x80] sm:$0xff]
        %v292 = vld [vmem:[%s264 + $0x88] sm:$0xff]
        %v293 = vld [vmem:[%s264 + $0x90] sm:$0xff]
        %v294 = vld [vmem:[%s264 + $0x98] sm:$0xff]
        %v295 = vld [vmem:[%s264 + $0xa0] sm:$0xff]
        %v296 = vld [vmem:[%s264 + $0xa8] sm:$0xff]
        %v297 = vld [vmem:[%s264 + $0xb0] sm:$0xff]
        %v298 = vld [vmem:[%s264 + $0xb8] sm:$0xff]
        %v299 = vld [vmem:[%s264 + $0xc0] sm:$0xff]
        %v300 = vld [vmem:[%s264 + $0xc8] sm:$0xff]
        %v301 = vld [vmem:[%s264 + $0xd0] sm:$0xff]
        %v302 = vld [vmem:[%s264 + $0xd8] sm:$0xff]
        %v303 = vld [vmem:[%s264 + $0xe0] sm:$0xff]
        %v304 = vld [vmem:[%s264 + $0xe8] sm:$0xff]
        %v305 = vld [vmem:[%s264 + $0xf0] sm:$0xff]
        %v306 = vld [vmem:[%s264 + $0xf8] sm:$0xff]
        %v307 = vld [vmem:[%s264 + $0x100] sm:$0xff]
        %v308 = vld [vmem:[%s264 + $0x108] sm:$0xff]
        %v309 = vld [vmem:[%s264 + $0x110] sm:$0xff]
        %v310 = vld [vmem:[%s264 + $0x118] sm:$0xff]
        %v311 = vld [vmem:[%s264 + $0x120] sm:$0xff]
        %v312 = vld [vmem:[%s264 + $0x128] sm:$0xff]
        %v313 = vld [vmem:[%s264 + $0x130] sm:$0xff]
        %v314 = vld [vmem:[%s264 + $0x138] sm:$0xff]
        %v315 = vld [vmem:[%s264 + $0x140] sm:$0xff]
        %v316 = vld [vmem:[%s264 + $0x148] sm:$0xff]
        %v317 = vld [vmem:[%s264 + $0x150] sm:$0xff]
        %v318 = vld [vmem:[%s264 + $0x158] sm:$0xff]
        %v319 = vld [vmem:[%s264 + $0x160] sm:$0xff]
        %v320 = vld [vmem:[%s264 + $0x168] sm:$0xff]
        %v321 = vld [vmem:[%s264 + $0x170] sm:$0xff]
        %v322 = vld [vmem:[%s264 + $0x178] sm:$0xff]
        %v323 = vld [vmem:[%s264 + $0x180] sm:$0xff]
        %v324 = vld [vmem:[%s264 + $0x188] sm:$0xff]
        %v325 = vld [vmem:[%s264 + $0x190] sm:$0xff]
        %v326 = vld [vmem:[%s264 + $0x198] sm:$0xff]
        %v327 = vld [vmem:[%s264 + $0x1a0] sm:$0xff]
        %v328 = vld [vmem:[%s264 + $0x1a8] sm:$0xff]
        %v329 = vld [vmem:[%s264 + $0x1b0] sm:$0xff]
        %v330 = vld [vmem:[%s264 + $0x1b8] sm:$0xff]
        %v331 = vld [vmem:[%s264 + $0x1c0] sm:$0xff]
        %v332 = vld [vmem:[%s264 + $0x1c8] sm:$0xff]
        %v333 = vld [vmem:[%s264 + $0x1d0] sm:$0xff]
        %v334 = vld [vmem:[%s264 + $0x1d8] sm:$0xff]
        %v335 = vld [vmem:[%s264 + $0x1e0] sm:$0xff]
        %v336 = vld [vmem:[%s264 + $0x1e8] sm:$0xff]
        %v337 = vld [vmem:[%s264 + $0x1f0] sm:$0xff]
        %v338 = vld [vmem:[%s264 + $0x1f8] sm:$0xff]
        %v339 = vld [vmem:[%s264 + $0x200] sm:$0xff]
        %v340 = vld [vmem:[%s264 + $0x208] sm:$0xff]
        %v341 = vld [vmem:[%s264 + $0x210] sm:$0xff]
        %v342 = vld [vmem:[%s264 + $0x218] sm:$0xff]
        %v343 = vld [vmem:[%s264 + $0x220] sm:$0xff]
        %v344 = vld [vmem:[%s264 + $0x228] sm:$0xff]
        %v345 = vld [vmem:[%s264 + $0x230] sm:$0xff]
        %v346 = vld [vmem:[%s264 + $0x238] sm:$0xff]
        %v347 = vld [vmem:[%s264 + $0x240] sm:$0xff]
        %v348 = vld [vmem:[%s264 + $0x248] sm:$0xff]
        %v349 = vld [vmem:[%s264 + $0x250] sm:$0xff]
        %v350 = vld [vmem:[%s264 + $0x258] sm:$0xff]
        %v351 = vld [vmem:[%s264 + $0x260] sm:$0xff]
        %v352 = vld [vmem:[%s264 + $0x268] sm:$0xff]
        %v353 = vld [vmem:[%s264 + $0x270] sm:$0xff]
        %v354 = vld [vmem:[%s264 + $0x278] sm:$0xff]
        %v355 = vld [vmem:[%s264 + $0x280] sm:$0xff]
        %v356 = vld [vmem:[%s264 + $0x288] sm:$0xff]
        %v357 = vld [vmem:[%s264 + $0x290] sm:$0xff]
        %v358 = vld [vmem:[%s264 + $0x298] sm:$0xff]
        %v359 = vld [vmem:[%s264 + $0x2a0] sm:$0xff]
        %v360 = vld [vmem:[%s264 + $0x2a8] sm:$0xff]
        %v361 = vld [vmem:[%s264 + $0x2b0] sm:$0xff]
        %v362 = vld [vmem:[%s264 + $0x2b8] sm:$0xff]
        %v363 = vld [vmem:[%s264 + $0x2c0] sm:$0xff]
        %v364 = vld [vmem:[%s264 + $0x2c8] sm:$0xff]
        %v365 = vld [vmem:[%s264 + $0x2d0] sm:$0xff]
        %v366 = vld [vmem:[%s264 + $0x2d8] sm:$0xff]
        %v367 = vld [vmem:[%s264 + $0x2e0] sm:$0xff]
        %v368 = vld [vmem:[%s264 + $0x2e8] sm:$0xff]
        %v369 = vld [vmem:[%s264 + $0x2f0] sm:$0xff]
        %v370 = vld [vmem:[%s264 + $0x2f8] sm:$0xff]
        %v371 = vld [vmem:[%s264 + $0x300] sm:$0xff]
        %v372 = vld [vmem:[%s264 + $0x308] sm:$0xff]
        %v373 = vld [vmem:[%s264 + $0x310] sm:$0xff]
        %v374 = vld [vmem:[%s264 + $0x318] sm:$0xff]
        %v375 = vld [vmem:[%s264 + $0x320] sm:$0xff]
        %v376 = vld [vmem:[%s264 + $0x328] sm:$0xff]
        %v377 = vld [vmem:[%s264 + $0x330] sm:$0xff]
        %v378 = vld [vmem:[%s264 + $0x338] sm:$0xff]
        %v379 = vld [vmem:[%s264 + $0x340] sm:$0xff]
        %v380 = vld [vmem:[%s264 + $0x348] sm:$0xff]
        %v381 = vld [vmem:[%s264 + $0x350] sm:$0xff]
        %v382 = vld [vmem:[%s264 + $0x358] sm:$0xff]
        %v383 = vld [vmem:[%s264 + $0x360] sm:$0xff]
        %v384 = vld [vmem:[%s264 + $0x368] sm:$0xff]
        %v385 = vld [vmem:[%s264 + $0x370] sm:$0xff]
        %v386 = vld [vmem:[%s264 + $0x378] sm:$0xff]
        %v387 = vld [vmem:[%s264 + $0x380] sm:$0xff]
        %v388 = vld [vmem:[%s264 + $0x388] sm:$0xff]
        %v389 = vld [vmem:[%s264 + $0x390] sm:$0xff]
        %v390 = vld [vmem:[%s264 + $0x398] sm:$0xff]
        %v391 = vld [vmem:[%s264 + $0x3a0] sm:$0xff]
        %v392 = vld [vmem:[%s264 + $0x3a8] sm:$0xff]
        %v393 = vld [vmem:[%s264 + $0x3b0] sm:$0xff]
        %v394 = vld [vmem:[%s264 + $0x3b8] sm:$0xff]
        %v395 = vld [vmem:[%s264 + $0x3c0] sm:$0xff]
        %v396 = vld [vmem:[%s264 + $0x3c8] sm:$0xff]
        %v397 = vld [vmem:[%s264 + $0x3d0] sm:$0xff]
        %v398 = vld [vmem:[%s264 + $0x3d8] sm:$0xff]
        %v399 = vld [vmem:[%s264 + $0x3e0] sm:$0xff]
        %v400 = vld [vmem:[%s264 + $0x3e8] sm:$0xff]
        %v401 = vld [vmem:[%s264 + $0x3f0] sm:$0xff]
        %v402 = vld [vmem:[%s264 + $0x3f8] sm:$0xff]
        %v403 = vld [vmem:[%s264 + $0x400] sm:$0xff]
        %v404 = vld [vmem:[%s264 + $0x408] sm:$0xff]
        %v405 = vld [vmem:[%s264 + $0x410] sm:$0xff]
        %v406 = vld [vmem:[%s264 + $0x418] sm:$0xff]
        %v407 = vld [vmem:[%s264 + $0x420] sm:$0xff]
        %v408 = vld [vmem:[%s264 + $0x428] sm:$0xff]
        %v409 = vld [vmem:[%s264 + $0x430] sm:$0xff]
        %v410 = vld [vmem:[%s264 + $0x438] sm:$0xff]
        %v411 = vld [vmem:[%s264 + $0x440] sm:$0xff]
        %v412 = vld [vmem:[%s264 + $0x448] sm:$0xff]
        %v413 = vld [vmem:[%s264 + $0x450] sm:$0xff]
        %v414 = vld [vmem:[%s264 + $0x458] sm:$0xff]
        %v415 = vld [vmem:[%s264 + $0x460] sm:$0xff]
        %v416 = vld [vmem:[%s264 + $0x468] sm:$0xff]
        %v417 = vld [vmem:[%s264 + $0x470] sm:$0xff]
        %v418 = vld [vmem:[%s264 + $0x478] sm:$0xff]
        %v419 = vld [vmem:[%s264 + $0x480] sm:$0xff]
        %v420 = vld [vmem:[%s264 + $0x488] sm:$0xff]
        %v421 = vld [vmem:[%s264 + $0x490] sm:$0xff]
        %v422 = vld [vmem:[%s264 + $0x498] sm:$0xff]
        %v423 = vld [vmem:[%s264 + $0x4a0] sm:$0xff]
        %v424 = vld [vmem:[%s264 + $0x4a8] sm:$0xff]
        %v425 = vld [vmem:[%s264 + $0x4b0] sm:$0xff]
        %v426 = vld [vmem:[%s264 + $0x4b8] sm:$0xff]
        %v427 = vld [vmem:[%s264 + $0x4c0] sm:$0xff]
        %v428 = vld [vmem:[%s264 + $0x4c8] sm:$0xff]
        %v429 = vld [vmem:[%s264 + $0x4d0] sm:$0xff]
        %v430 = vld [vmem:[%s264 + $0x4d8] sm:$0xff]
        %v431 = vld [vmem:[%s264 + $0x4e0] sm:$0xff]
        %v432 = vld [vmem:[%s264 + $0x4e8] sm:$0xff]
        %v433 = vld [vmem:[%s264 + $0x4f0] sm:$0xff]
        %v434 = vld [vmem:[%s264 + $0x4f8] sm:$0xff]
        %v435 = vld [vmem:[%s264 + $0x500] sm:$0xff]
        %v436 = vld [vmem:[%s264 + $0x508] sm:$0xff]
        %v437 = vld [vmem:[%s264 + $0x510] sm:$0xff]
        %v438 = vld [vmem:[%s264 + $0x518] sm:$0xff]
        %v439 = vld [vmem:[%s264 + $0x520] sm:$0xff]
        %v440 = vld [vmem:[%s264 + $0x528] sm:$0xff]
        %v441 = vld [vmem:[%s264 + $0x530] sm:$0xff]
        %v442 = vld [vmem:[%s264 + $0x538] sm:$0xff]
        %v443 = vld [vmem:[%s264 + $0x540] sm:$0xff]
        %v444 = vld [vmem:[%s264 + $0x548] sm:$0xff]
        %v445 = vld [vmem:[%s264 + $0x550] sm:$0xff]
        %v446 = vld [vmem:[%s264 + $0x558] sm:$0xff]
        %v447 = vld [vmem:[%s264 + $0x560] sm:$0xff]
        %v448 = vld [vmem:[%s264 + $0x568] sm:$0xff]
        %v449 = vld [vmem:[%s264 + $0x570] sm:$0xff]
        %v450 = vld [vmem:[%s264 + $0x578] sm:$0xff]
        %v451 = vld [vmem:[%s264 + $0x580] sm:$0xff]
        %v452 = vld [vmem:[%s264 + $0x588] sm:$0xff]
        %v453 = vld [vmem:[%s264 + $0x590] sm:$0xff]
        %v454 = vld [vmem:[%s264 + $0x598] sm:$0xff]
        %v455 = vld [vmem:[%s264 + $0x5a0] sm:$0xff]
        %v456 = vld [vmem:[%s264 + $0x5a8] sm:$0xff]
        %v457 = vld [vmem:[%s264 + $0x5b0] sm:$0xff]
        %v458 = vld [vmem:[%s264 + $0x5b8] sm:$0xff]
        %v459 = vld [vmem:[%s264 + $0x5c0] sm:$0xff]
        %v460 = vld [vmem:[%s264 + $0x5c8] sm:$0xff]
        %v461 = vld [vmem:[%s264 + $0x5d0] sm:$0xff]
        %v462 = vld [vmem:[%s264 + $0x5d8] sm:$0xff]
        %v463 = vld [vmem:[%s264 + $0x5e0] sm:$0xff]
        %v464 = vld [vmem:[%s264 + $0x5e8] sm:$0xff]
        %v465 = vld [vmem:[%s264 + $0x5f0] sm:$0xff]
        %v466 = vld [vmem:[%s264 + $0x5f8] sm:$0xff]
        %v467 = vld [vmem:[%s264 + $0x600] sm:$0xff]
        %v468 = vld [vmem:[%s264 + $0x608] sm:$0xff]
        %v469 = vld [vmem:[%s264 + $0x610] sm:$0xff]
        %v470 = vld [vmem:[%s264 + $0x618] sm:$0xff]
        %v471 = vld [vmem:[%s264 + $0x620] sm:$0xff]
        %v472 = vld [vmem:[%s264 + $0x628] sm:$0xff]
        %v473 = vld [vmem:[%s264 + $0x630] sm:$0xff]
        %v474 = vld [vmem:[%s264 + $0x638] sm:$0xff]
        %v475 = vld [vmem:[%s264 + $0x640] sm:$0xff]
        %v476 = vld [vmem:[%s264 + $0x648] sm:$0xff]
        %v477 = vld [vmem:[%s264 + $0x650] sm:$0xff]
        %v478 = vld [vmem:[%s264 + $0x658] sm:$0xff]
        %v479 = vld [vmem:[%s264 + $0x660] sm:$0xff]
        %v480 = vld [vmem:[%s264 + $0x668] sm:$0xff]
        %v481 = vld [vmem:[%s264 + $0x670] sm:$0xff]
        %v482 = vld [vmem:[%s264 + $0x678] sm:$0xff]
        %v483 = vld [vmem:[%s264 + $0x680] sm:$0xff]
        %v484 = vld [vmem:[%s264 + $0x688] sm:$0xff]
        %v485 = vld [vmem:[%s264 + $0x690] sm:$0xff]
        %v486 = vld [vmem:[%s264 + $0x698] sm:$0xff]
        %v487 = vld [vmem:[%s264 + $0x6a0] sm:$0xff]
        %v488 = vld [vmem:[%s264 + $0x6a8] sm:$0xff]
        %v489 = vld [vmem:[%s264 + $0x6b0] sm:$0xff]
        %v490 = vld [vmem:[%s264 + $0x6b8] sm:$0xff]
        %v491 = vld [vmem:[%s264 + $0x6c0] sm:$0xff]
        %v492 = vld [vmem:[%s264 + $0x6c8] sm:$0xff]
        %v493 = vld [vmem:[%s264 + $0x6d0] sm:$0xff]
        %v494 = vld [vmem:[%s264 + $0x6d8] sm:$0xff]
        %v495 = vld [vmem:[%s264 + $0x6e0] sm:$0xff]
        %v496 = vld [vmem:[%s264 + $0x6e8] sm:$0xff]
        %v497 = vld [vmem:[%s264 + $0x6f0] sm:$0xff]
        %v498 = vld [vmem:[%s264 + $0x6f8] sm:$0xff]
        %v499 = vld [vmem:[%s264 + $0x700] sm:$0xff]
        %v500 = vld [vmem:[%s264 + $0x708] sm:$0xff]
        %v501 = vld [vmem:[%s264 + $0x710] sm:$0xff]
        %v502 = vld [vmem:[%s264 + $0x718] sm:$0xff]
        %v503 = vld [vmem:[%s264 + $0x720] sm:$0xff]
        %v504 = vld [vmem:[%s264 + $0x728] sm:$0xff]
        %v505 = vld [vmem:[%s264 + $0x730] sm:$0xff]
        %v506 = vld [vmem:[%s264 + $0x738] sm:$0xff]
        %v507 = vld [vmem:[%s264 + $0x740] sm:$0xff]
        %v508 = vld [vmem:[%s264 + $0x748] sm:$0xff]
        %v509 = vld [vmem:[%s264 + $0x750] sm:$0xff]
        %v510 = vld [vmem:[%s264 + $0x758] sm:$0xff]
        %v511 = vld [vmem:[%s264 + $0x760] sm:$0xff]
        %v512 = vld [vmem:[%s264 + $0x768] sm:$0xff]
        %v513 = vld [vmem:[%s264 + $0x770] sm:$0xff]
        %v514 = vld [vmem:[%s264 + $0x778] sm:$0xff]
        %v515 = vld [vmem:[%s264 + $0x780] sm:$0xff]
        %v516 = vld [vmem:[%s264 + $0x788] sm:$0xff]
        %v517 = vld [vmem:[%s264 + $0x790] sm:$0xff]
        %v518 = vld [vmem:[%s264 + $0x798] sm:$0xff]
        %v519 = vld [vmem:[%s264 + $0x7a0] sm:$0xff]
        %v520 = vld [vmem:[%s264 + $0x7a8] sm:$0xff]
        %v521 = vld [vmem:[%s264 + $0x7b0] sm:$0xff]
        %v522 = vld [vmem:[%s264 + $0x7b8] sm:$0xff]
        %v523 = vld [vmem:[%s264 + $0x7c0] sm:$0xff]
        %v524 = vld [vmem:[%s264 + $0x7c8] sm:$0xff]
        %v525 = vld [vmem:[%s264 + $0x7d0] sm:$0xff]
        %v526 = vld [vmem:[%s264 + $0x7d8] sm:$0xff]
        %v527 = vld [vmem:[%s264 + $0x7e0] sm:$0xff]
        %v528 = vld [vmem:[%s264 + $0x7e8] sm:$0xff]
        %v529 = vld [vmem:[%s264 + $0x7f0] sm:$0xff]
        %v530 = vld [vmem:[%s264 + $0x7f8] sm:$0xff]
        %v531 = vld [vmem:[%s264 + $0x800] sm:$0xff]
        %v532 = vld [vmem:[%s264 + $0x808] sm:$0xff]
        %v533 = vld [vmem:[%s264 + $0x810] sm:$0xff]
        %v534 = vld [vmem:[%s264 + $0x818] sm:$0xff]
        %v535 = vld [vmem:[%s264 + $0x820] sm:$0xff]
        %v536 = vld [vmem:[%s264 + $0x828] sm:$0xff]
        %v537 = vld [vmem:[%s264 + $0x830] sm:$0xff]
        %v538 = vld [vmem:[%s264 + $0x838] sm:$0xff]
        %v539 = vld [vmem:[%s264 + $0x840] sm:$0xff]
        %v540 = vld [vmem:[%s264 + $0x848] sm:$0xff]
        %v541 = vld [vmem:[%s264 + $0x850] sm:$0xff]
        %v542 = vld [vmem:[%s264 + $0x858] sm:$0xff]
        %v543 = vld [vmem:[%s264 + $0x860] sm:$0xff]
        %v544 = vld [vmem:[%s264 + $0x868] sm:$0xff]
        %v545 = vld [vmem:[%s264 + $0x870] sm:$0xff]
        %v546 = vld [vmem:[%s264 + $0x878] sm:$0xff]
        %v547 = vld [vmem:[%s264 + $0x880] sm:$0xff]
        %v548 = vld [vmem:[%s264 + $0x888] sm:$0xff]
        %v549 = vld [vmem:[%s264 + $0x890] sm:$0xff]
        %v550 = vld [vmem:[%s264 + $0x898] sm:$0xff]
        %v551 = vld [vmem:[%s264 + $0x8a0] sm:$0xff]
        %v552 = vld [vmem:[%s264 + $0x8a8] sm:$0xff]
        %v553 = vld [vmem:[%s264 + $0x8b0] sm:$0xff]
        %v554 = vld [vmem:[%s264 + $0x8b8] sm:$0xff]
        %v555 = vld [vmem:[%s264 + $0x8c0] sm:$0xff]
        %v556 = vld [vmem:[%s264 + $0x8c8] sm:$0xff]
        %v557 = vld [vmem:[%s264 + $0x8d0] sm:$0xff]
        %v558 = vld [vmem:[%s264 + $0x8d8] sm:$0xff]
        %v559 = vld [vmem:[%s264 + $0x8e0] sm:$0xff]
        %v560 = vld [vmem:[%s264 + $0x8e8] sm:$0xff]
        %v561 = vld [vmem:[%s264 + $0x8f0] sm:$0xff]
        %v562 = vld [vmem:[%s264 + $0x8f8] sm:$0xff]
        %v563 = vld [vmem:[%s264 + $0x900] sm:$0xff]
        %v564 = vld [vmem:[%s264 + $0x908] sm:$0xff]
        %v565 = vld [vmem:[%s264 + $0x910] sm:$0xff]
        %v566 = vld [vmem:[%s264 + $0x918] sm:$0xff]
        %v567 = vld [vmem:[%s264 + $0x920] sm:$0xff]
        %v568 = vld [vmem:[%s264 + $0x928] sm:$0xff]
        %v569 = vld [vmem:[%s264 + $0x930] sm:$0xff]
        %v570 = vld [vmem:[%s264 + $0x938] sm:$0xff]
        %v571 = vld [vmem:[%s264 + $0x940] sm:$0xff]
        %v572 = vld [vmem:[%s264 + $0x948] sm:$0xff]
        %v573 = vld [vmem:[%s264 + $0x950] sm:$0xff]
        %v574 = vld [vmem:[%s264 + $0x958] sm:$0xff]
        %v575 = vld [vmem:[%s264 + $0x960] sm:$0xff]
        %v576 = vld [vmem:[%s264 + $0x968] sm:$0xff]
        %v577 = vld [vmem:[%s264 + $0x970] sm:$0xff]
        %v578 = vld [vmem:[%s264 + $0x978] sm:$0xff]
        %v579 = vld [vmem:[%s264 + $0x980] sm:$0xff]
        %v580 = vld [vmem:[%s264 + $0x988] sm:$0xff]
        %v581 = vld [vmem:[%s264 + $0x990] sm:$0xff]
        %v582 = vld [vmem:[%s264 + $0x998] sm:$0xff]
        %v583 = vld [vmem:[%s264 + $0x9a0] sm:$0xff]
        %v584 = vld [vmem:[%s264 + $0x9a8] sm:$0xff]
        %v585 = vld [vmem:[%s264 + $0x9b0] sm:$0xff]
        %v586 = vld [vmem:[%s264 + $0x9b8] sm:$0xff]
        %v587 = vld [vmem:[%s264 + $0x9c0] sm:$0xff]
        %v588 = vld [vmem:[%s264 + $0x9c8] sm:$0xff]
        %v589 = vld [vmem:[%s264 + $0x9d0] sm:$0xff]
        %v590 = vld [vmem:[%s264 + $0x9d8] sm:$0xff]
        %v591 = vld [vmem:[%s264 + $0x9e0] sm:$0xff]
        %v592 = vld [vmem:[%s264 + $0x9e8] sm:$0xff]
        %v593 = vld [vmem:[%s264 + $0x9f0] sm:$0xff]
        %v594 = vld [vmem:[%s264 + $0x9f8] sm:$0xff]
        %v595 = vld [vmem:[%s264 + $0xa00] sm:$0xff]
        %v596 = vld [vmem:[%s264 + $0xa08] sm:$0xff]
        %v597 = vld [vmem:[%s264 + $0xa10] sm:$0xff]
        %v598 = vld [vmem:[%s264 + $0xa18] sm:$0xff]
        %v599 = vld [vmem:[%s264 + $0xa20] sm:$0xff]
        %v600 = vld [vmem:[%s264 + $0xa28] sm:$0xff]
        %v601 = vld [vmem:[%s264 + $0xa30] sm:$0xff]
        %v602 = vld [vmem:[%s264 + $0xa38] sm:$0xff]
        %v603 = vld [vmem:[%s264 + $0xa40] sm:$0xff]
        %v604 = vld [vmem:[%s264 + $0xa48] sm:$0xff]
        %v605 = vld [vmem:[%s264 + $0xa50] sm:$0xff]
        %v606 = vld [vmem:[%s264 + $0xa58] sm:$0xff]
        %v607 = vld [vmem:[%s264 + $0xa60] sm:$0xff]
        %v608 = vld [vmem:[%s264 + $0xa68] sm:$0xff]
        %v609 = vld [vmem:[%s264 + $0xa70] sm:$0xff]
        %v610 = vld [vmem:[%s264 + $0xa78] sm:$0xff]
        %v611 = vld [vmem:[%s264 + $0xa80] sm:$0xff]
        %v612 = vld [vmem:[%s264 + $0xa88] sm:$0xff]
        %v613 = vld [vmem:[%s264 + $0xa90] sm:$0xff]
        %v614 = vld [vmem:[%s264 + $0xa98] sm:$0xff]
        %v615 = vld [vmem:[%s264 + $0xaa0] sm:$0xff]
        %v616 = vld [vmem:[%s264 + $0xaa8] sm:$0xff]
        %v617 = vld [vmem:[%s264 + $0xab0] sm:$0xff]
        %v618 = vld [vmem:[%s264 + $0xab8] sm:$0xff]
        %v619 = vld [vmem:[%s264 + $0xac0] sm:$0xff]
        %v620 = vld [vmem:[%s264 + $0xac8] sm:$0xff]
        %v621 = vld [vmem:[%s264 + $0xad0] sm:$0xff]
        %v622 = vld [vmem:[%s264 + $0xad8] sm:$0xff]
        %v623 = vld [vmem:[%s264 + $0xae0] sm:$0xff]
        %v624 = vld [vmem:[%s264 + $0xae8] sm:$0xff]
        %v625 = vld [vmem:[%s264 + $0xaf0] sm:$0xff]
        %v626 = vld [vmem:[%s264 + $0xaf8] sm:$0xff]
        %v627 = vld [vmem:[%s264 + $0xb00] sm:$0xff]
        %v628 = vld [vmem:[%s264 + $0xb08] sm:$0xff]
        %v629 = vld [vmem:[%s264 + $0xb10] sm:$0xff]
        %v630 = vld [vmem:[%s264 + $0xb18] sm:$0xff]
        %v631 = vld [vmem:[%s264 + $0xb20] sm:$0xff]
        %v632 = vld [vmem:[%s264 + $0xb28] sm:$0xff]
        %v633 = vld [vmem:[%s264 + $0xb30] sm:$0xff]
        %v634 = vld [vmem:[%s264 + $0xb38] sm:$0xff]
        %v635 = vld [vmem:[%s264 + $0xb40] sm:$0xff]
        %v636 = vld [vmem:[%s264 + $0xb48] sm:$0xff]
        %v637 = vld [vmem:[%s264 + $0xb50] sm:$0xff]
        %v638 = vld [vmem:[%s264 + $0xb58] sm:$0xff]
        %v639 = vld [vmem:[%s264 + $0xb60] sm:$0xff]
        %v640 = vld [vmem:[%s264 + $0xb68] sm:$0xff]
        %v641 = vld [vmem:[%s264 + $0xb70] sm:$0xff]
        %v642 = vld [vmem:[%s264 + $0xb78] sm:$0xff]
        %v643 = vld [vmem:[%s264 + $0xb80] sm:$0xff]
        %v644 = vld [vmem:[%s264 + $0xb88] sm:$0xff]
        %v645 = vld [vmem:[%s264 + $0xb90] sm:$0xff]
        %v646 = vld [vmem:[%s264 + $0xb98] sm:$0xff]
        %v647 = vld [vmem:[%s264 + $0xba0] sm:$0xff]
        %v648 = vld [vmem:[%s264 + $0xba8] sm:$0xff]
        %v649 = vld [vmem:[%s264 + $0xbb0] sm:$0xff]
        %v650 = vld [vmem:[%s264 + $0xbb8] sm:$0xff]
        %v651 = vld [vmem:[%s264 + $0xbc0] sm:$0xff]
        %v652 = vld [vmem:[%s264 + $0xbc8] sm:$0xff]
        %v653 = vld [vmem:[%s264 + $0xbd0] sm:$0xff]
        %v654 = vld [vmem:[%s264 + $0xbd8] sm:$0xff]
        %v655 = vld [vmem:[%s264 + $0xbe0] sm:$0xff]
        %v656 = vld [vmem:[%s264 + $0xbe8] sm:$0xff]
        %v657 = vld [vmem:[%s264 + $0xbf0] sm:$0xff]
        %v658 = vld [vmem:[%s264 + $0xbf8] sm:$0xff]
        %v659 = vld [vmem:[%s264 + $0xc00] sm:$0xff]
        %v660 = vld [vmem:[%s264 + $0xc08] sm:$0xff]
        %v661 = vld [vmem:[%s264 + $0xc10] sm:$0xff]
        %v662 = vld [vmem:[%s264 + $0xc18] sm:$0xff]
        %v663 = vld [vmem:[%s264 + $0xc20] sm:$0xff]
        %v664 = vld [vmem:[%s264 + $0xc28] sm:$0xff]
        %v665 = vld [vmem:[%s264 + $0xc30] sm:$0xff]
        %v666 = vld [vmem:[%s264 + $0xc38] sm:$0xff]
        %v667 = vld [vmem:[%s264 + $0xc40] sm:$0xff]
        %v668 = vld [vmem:[%s264 + $0xc48] sm:$0xff]
        %v669 = vld [vmem:[%s264 + $0xc50] sm:$0xff]
        %v670 = vld [vmem:[%s264 + $0xc58] sm:$0xff]
        %v671 = vld [vmem:[%s264 + $0xc60] sm:$0xff]
        %v672 = vld [vmem:[%s264 + $0xc68] sm:$0xff]
        %v673 = vld [vmem:[%s264 + $0xc70] sm:$0xff]
        %v674 = vld [vmem:[%s264 + $0xc78] sm:$0xff]
        %v675 = vld [vmem:[%s264 + $0xc80] sm:$0xff]
        %v676 = vld [vmem:[%s264 + $0xc88] sm:$0xff]
        %v677 = vld [vmem:[%s264 + $0xc90] sm:$0xff]
        %v678 = vld [vmem:[%s264 + $0xc98] sm:$0xff]
        %v679 = vld [vmem:[%s264 + $0xca0] sm:$0xff]
        %v680 = vld [vmem:[%s264 + $0xca8] sm:$0xff]
        %v681 = vld [vmem:[%s264 + $0xcb0] sm:$0xff]
        %v682 = vld [vmem:[%s264 + $0xcb8] sm:$0xff]
        %v683 = vld [vmem:[%s264 + $0xcc0] sm:$0xff]
        %v684 = vld [vmem:[%s264 + $0xcc8] sm:$0xff]
        %v685 = vld [vmem:[%s264 + $0xcd0] sm:$0xff]
        %v686 = vld [vmem:[%s264 + $0xcd8] sm:$0xff]
        %v687 = vld [vmem:[%s264 + $0xce0] sm:$0xff]
        %v688 = vld [vmem:[%s264 + $0xce8] sm:$0xff]
        %v689 = vld [vmem:[%s264 + $0xcf0] sm:$0xff]
        %v690 = vld [vmem:[%s264 + $0xcf8] sm:$0xff]
        %v691 = vld [vmem:[%s264 + $0xd00] sm:$0xff]
        %v692 = vld [vmem:[%s264 + $0xd08] sm:$0xff]
        %v693 = vld [vmem:[%s264 + $0xd10] sm:$0xff]
        %v694 = vld [vmem:[%s264 + $0xd18] sm:$0xff]
        %v695 = vld [vmem:[%s264 + $0xd20] sm:$0xff]
        %v696 = vld [vmem:[%s264 + $0xd28] sm:$0xff]
        %v697 = vld [vmem:[%s264 + $0xd30] sm:$0xff]
        %v698 = vld [vmem:[%s264 + $0xd38] sm:$0xff]
        %v699 = vld [vmem:[%s264 + $0xd40] sm:$0xff]
        %v700 = vld [vmem:[%s264 + $0xd48] sm:$0xff]
        %v701 = vld [vmem:[%s264 + $0xd50] sm:$0xff]
        %v702 = vld [vmem:[%s264 + $0xd58] sm:$0xff]
        %v703 = vld [vmem:[%s264 + $0xd60] sm:$0xff]
        %v704 = vld [vmem:[%s264 + $0xd68] sm:$0xff]
        %v705 = vld [vmem:[%s264 + $0xd70] sm:$0xff]
        %v706 = vld [vmem:[%s264 + $0xd78] sm:$0xff]
        %v707 = vld [vmem:[%s264 + $0xd80] sm:$0xff]
        %v708 = vld [vmem:[%s264 + $0xd88] sm:$0xff]
        %v709 = vld [vmem:[%s264 + $0xd90] sm:$0xff]
        %v710 = vld [vmem:[%s264 + $0xd98] sm:$0xff]
        %v711 = vld [vmem:[%s264 + $0xda0] sm:$0xff]
        %v712 = vld [vmem:[%s264 + $0xda8] sm:$0xff]
        %v713 = vld [vmem:[%s264 + $0xdb0] sm:$0xff]
        %v714 = vld [vmem:[%s264 + $0xdb8] sm:$0xff]
        %v715 = vld [vmem:[%s264 + $0xdc0] sm:$0xff]
        %v716 = vld [vmem:[%s264 + $0xdc8] sm:$0xff]
        %v717 = vld [vmem:[%s264 + $0xdd0] sm:$0xff]
        %v718 = vld [vmem:[%s264 + $0xdd8] sm:$0xff]
        %v719 = vld [vmem:[%s264 + $0xde0] sm:$0xff]
        %v720 = vld [vmem:[%s264 + $0xde8] sm:$0xff]
        %v721 = vld [vmem:[%s264 + $0xdf0] sm:$0xff]
        %v722 = vld [vmem:[%s264 + $0xdf8] sm:$0xff]
        %v725 = vcombine.high %v273, %v273
        %v727 = vunpack.c.l.s4 1966171168
        %v728 = vunpack.c.0.s8 %v727
        %v729 = vlaneseq
        %v730 = vshrl.u32 %v729, 7
        %v731 = vsub.s32 %v728, %v730
        %v732 = vrot.slane %v273, %v731
        %v734 = vunpack.c.l.s4 1966171168
        %v735 = vunpack.c.0.s8 %v734
        %v736 = vlaneseq
        %v737 = vshrl.u32 %v736, 7
        %v738 = vsub.s32 %v735, %v737
        %v739 = vrot.slane %v725, %v738
        %v740 = vcombine.high %v732, %v732
        %v741 = vcombine.high %v739, %v739
        %v743 = vunpack.c.l.s4 1966171168
        %v744 = vunpack.c.0.s8 %v743
        %v745 = vlaneseq
        %v746 = vshrl.u32 %v745, 7
        %v747 = vsub.s32 %v744, %v746
        %v748 = vrot.slane %v732, %v747
        %v750 = vunpack.c.l.s4 1966171168
        %v751 = vunpack.c.0.s8 %v750
        %v752 = vlaneseq
        %v753 = vshrl.u32 %v752, 7
        %v754 = vsub.s32 %v751, %v753
        %v755 = vrot.slane %v739, %v754
        %v757 = vunpack.c.l.s4 1966171168
        %v758 = vunpack.c.0.s8 %v757
        %v759 = vlaneseq
        %v760 = vshrl.u32 %v759, 7
        %v761 = vsub.s32 %v758, %v760
        %v762 = vrot.slane %v740, %v761
        %v764 = vunpack.c.l.s4 1966171168
        %v765 = vunpack.c.0.s8 %v764
        %v766 = vlaneseq
        %v767 = vshrl.u32 %v766, 7
        %v768 = vsub.s32 %v765, %v767
        %v769 = vrot.slane %v741, %v768
        %v770 = vcombine.high %v748, %v748
        %v771 = vcombine.high %v755, %v755
        %v772 = vcombine.high %v762, %v762
        %v773 = vcombine.high %v769, %v769
        %v774 = vcombine.high %v274, %v274
        %v776 = vunpack.c.l.s4 1966171168
        %v777 = vunpack.c.0.s8 %v776
        %v778 = vlaneseq
        %v779 = vshrl.u32 %v778, 7
        %v780 = vsub.s32 %v777, %v779
        %v781 = vrot.slane %v274, %v780
        %v783 = vunpack.c.l.s4 1966171168
        %v784 = vunpack.c.0.s8 %v783
        %v785 = vlaneseq
        %v786 = vshrl.u32 %v785, 7
        %v787 = vsub.s32 %v784, %v786
        %v788 = vrot.slane %v774, %v787
        %v789 = vcombine.high %v781, %v781
        %v790 = vcombine.high %v788, %v788
        %v792 = vunpack.c.l.s4 1966171168
        %v793 = vunpack.c.0.s8 %v792
        %v794 = vlaneseq
        %v795 = vshrl.u32 %v794, 7
        %v796 = vsub.s32 %v793, %v795
        %v797 = vrot.slane %v781, %v796
        %v799 = vunpack.c.l.s4 1966171168
        %v800 = vunpack.c.0.s8 %v799
        %v801 = vlaneseq
        %v802 = vshrl.u32 %v801, 7
        %v803 = vsub.s32 %v800, %v802
        %v804 = vrot.slane %v788, %v803
        %v806 = vunpack.c.l.s4 1966171168
        %v807 = vunpack.c.0.s8 %v806
        %v808 = vlaneseq
        %v809 = vshrl.u32 %v808, 7
        %v810 = vsub.s32 %v807, %v809
        %v811 = vrot.slane %v789, %v810
        %v813 = vunpack.c.l.s4 1966171168
        %v814 = vunpack.c.0.s8 %v813
        %v815 = vlaneseq
        %v816 = vshrl.u32 %v815, 7
        %v817 = vsub.s32 %v814, %v816
        %v818 = vrot.slane %v790, %v817
        %v819 = vcombine.high %v797, %v797
        %v820 = vcombine.high %v811, %v811
        %v1283 = vunpack.c.l.b16 %v275
        %v1284 = vunpack.c.h.b16 %v275
        %v1285 = vunpack.c.l.b16 %v276
        %v1286 = vunpack.c.h.b16 %v276
        %v1287 = vunpack.c.l.b16 %v277
        %v1288 = vunpack.c.h.b16 %v277
        %v1289 = vunpack.c.l.b16 %v278
        %v1290 = vunpack.c.h.b16 %v278
        %v1291 = vunpack.c.l.b16 %v279
        %v1292 = vunpack.c.h.b16 %v279
        %v1293 = vunpack.c.l.b16 %v280
        %v1294 = vunpack.c.h.b16 %v280
        %v1295 = vunpack.c.l.b16 %v281
        %v1296 = vunpack.c.h.b16 %v281
        %v1297 = vunpack.c.l.b16 %v282
        %v1298 = vunpack.c.h.b16 %v282
        %v1299 = vunpack.c.l.b16 %v283
        %v1300 = vunpack.c.h.b16 %v283
        %v1301 = vunpack.c.l.b16 %v284
        %v1302 = vunpack.c.h.b16 %v284
        %v1303 = vunpack.c.l.b16 %v285
        %v1304 = vunpack.c.h.b16 %v285
        %v1305 = vunpack.c.l.b16 %v286
        %v1306 = vunpack.c.h.b16 %v286
        %v1307 = vunpack.c.l.b16 %v287
        %v1308 = vunpack.c.h.b16 %v287
        %v1309 = vunpack.c.l.b16 %v288
        %v1310 = vunpack.c.h.b16 %v288
        %v1311 = vunpack.c.l.b16 %v289
        %v1312 = vunpack.c.h.b16 %v289
        %v1313 = vunpack.c.l.b16 %v290
        %v1314 = vunpack.c.h.b16 %v290
        %v1315 = vunpack.c.l.b16 %v291
        %v1316 = vunpack.c.h.b16 %v291
        %v1317 = vunpack.c.l.b16 %v292
        %v1318 = vunpack.c.h.b16 %v292
        %v1319 = vunpack.c.l.b16 %v293
        %v1320 = vunpack.c.h.b16 %v293
        %v1321 = vunpack.c.l.b16 %v294
        %v1322 = vunpack.c.h.b16 %v294
        %v1323 = vunpack.c.l.b16 %v295
        %v1324 = vunpack.c.h.b16 %v295
        %v1325 = vunpack.c.l.b16 %v296
        %v1326 = vunpack.c.h.b16 %v296
        %v1327 = vunpack.c.l.b16 %v297
        %v1328 = vunpack.c.h.b16 %v297
        %v1329 = vunpack.c.l.b16 %v298
        %v1330 = vunpack.c.h.b16 %v298
        %v1331 = vunpack.c.l.b16 %v299
        %v1332 = vunpack.c.h.b16 %v299
        %v1333 = vunpack.c.l.b16 %v300
        %v1334 = vunpack.c.h.b16 %v300
        %v1335 = vunpack.c.l.b16 %v301
        %v1336 = vunpack.c.h.b16 %v301
        %v1337 = vunpack.c.l.b16 %v302
        %v1338 = vunpack.c.h.b16 %v302
        %v1339 = vunpack.c.l.b16 %v303
        %v1340 = vunpack.c.h.b16 %v303
        %v1341 = vunpack.c.l.b16 %v304
        %v1342 = vunpack.c.h.b16 %v304
        %v1343 = vunpack.c.l.b16 %v305
        %v1344 = vunpack.c.h.b16 %v305
        %v1345 = vunpack.c.l.b16 %v306
        %v1346 = vunpack.c.h.b16 %v306
        %v1347 = vunpack.c.l.b16 %v307
        %v1348 = vunpack.c.h.b16 %v307
        %v1349 = vunpack.c.l.b16 %v308
        %v1350 = vunpack.c.h.b16 %v308
        %v1351 = vunpack.c.l.b16 %v309
        %v1352 = vunpack.c.h.b16 %v309
        %v1353 = vunpack.c.l.b16 %v310
        %v1354 = vunpack.c.h.b16 %v310
        %v1355 = vunpack.c.l.b16 %v311
        %v1356 = vunpack.c.h.b16 %v311
        %v1357 = vunpack.c.l.b16 %v312
        %v1358 = vunpack.c.h.b16 %v312
        %v1359 = vunpack.c.l.b16 %v313
        %v1360 = vunpack.c.h.b16 %v313
        %v1361 = vunpack.c.l.b16 %v314
        %v1362 = vunpack.c.h.b16 %v314
        %v1363 = vunpack.c.l.b16 %v315
        %v1364 = vunpack.c.h.b16 %v315
        %v1365 = vunpack.c.l.b16 %v316
        %v1366 = vunpack.c.h.b16 %v316
        %v1367 = vunpack.c.l.b16 %v317
        %v1368 = vunpack.c.h.b16 %v317
        %v1369 = vunpack.c.l.b16 %v318
        %v1370 = vunpack.c.h.b16 %v318
        %v1371 = vunpack.c.l.b16 %v319
        %v1372 = vunpack.c.h.b16 %v319
        %v1373 = vunpack.c.l.b16 %v320
        %v1374 = vunpack.c.h.b16 %v320
        %v1375 = vunpack.c.l.b16 %v321
        %v1376 = vunpack.c.h.b16 %v321
        %v1377 = vunpack.c.l.b16 %v322
        %v1378 = vunpack.c.h.b16 %v322
        %v1379 = vunpack.c.l.b16 %v323
        %v1380 = vunpack.c.h.b16 %v323
        %v1381 = vunpack.c.l.b16 %v324
        %v1382 = vunpack.c.h.b16 %v324
        %v1383 = vunpack.c.l.b16 %v325
        %v1384 = vunpack.c.h.b16 %v325
        %v1385 = vunpack.c.l.b16 %v326
        %v1386 = vunpack.c.h.b16 %v326
        %v1387 = vunpack.c.l.b16 %v327
        %v1388 = vunpack.c.h.b16 %v327
        %v1389 = vunpack.c.l.b16 %v328
        %v1390 = vunpack.c.h.b16 %v328
        %v1391 = vunpack.c.l.b16 %v329
        %v1392 = vunpack.c.h.b16 %v329
        %v1393 = vunpack.c.l.b16 %v330
        %v1394 = vunpack.c.h.b16 %v330
        %v1395 = vunpack.c.l.b16 %v331
        %v1396 = vunpack.c.h.b16 %v331
        %v1397 = vunpack.c.l.b16 %v332
        %v1398 = vunpack.c.h.b16 %v332
        %v1399 = vunpack.c.l.b16 %v333
        %v1400 = vunpack.c.h.b16 %v333
        %v1401 = vunpack.c.l.b16 %v334
        %v1402 = vunpack.c.h.b16 %v334
        %v1403 = vunpack.c.l.b16 %v335
        %v1404 = vunpack.c.h.b16 %v335
        %v1405 = vunpack.c.l.b16 %v336
        %v1406 = vunpack.c.h.b16 %v336
        %v1407 = vunpack.c.l.b16 %v337
        %v1408 = vunpack.c.h.b16 %v337
        %v1409 = vunpack.c.l.b16 %v338
        %v1410 = vunpack.c.h.b16 %v338
        %v1411 = vunpack.c.l.b16 %v339
        %v1412 = vunpack.c.h.b16 %v339
        %v1413 = vunpack.c.l.b16 %v340
        %v1414 = vunpack.c.h.b16 %v340
        %v1415 = vunpack.c.l.b16 %v341
        %v1416 = vunpack.c.h.b16 %v341
        %v1417 = vunpack.c.l.b16 %v342
        %v1418 = vunpack.c.h.b16 %v342
        %v1419 = vunpack.c.l.b16 %v343
        %v1420 = vunpack.c.h.b16 %v343
        %v1421 = vunpack.c.l.b16 %v344
        %v1422 = vunpack.c.h.b16 %v344
        %v1423 = vunpack.c.l.b16 %v345
        %v1424 = vunpack.c.h.b16 %v345
        %v1425 = vunpack.c.l.b16 %v346
        %v1426 = vunpack.c.h.b16 %v346
        %v1427 = vunpack.c.l.b16 %v347
        %v1428 = vunpack.c.h.b16 %v347
        %v1429 = vunpack.c.l.b16 %v348
        %v1430 = vunpack.c.h.b16 %v348
        %v1431 = vunpack.c.l.b16 %v349
        %v1432 = vunpack.c.h.b16 %v349
        %v1433 = vunpack.c.l.b16 %v350
        %v1434 = vunpack.c.h.b16 %v350
        %v1435 = vunpack.c.l.b16 %v351
        %v1436 = vunpack.c.h.b16 %v351
        %v1437 = vunpack.c.l.b16 %v352
        %v1438 = vunpack.c.h.b16 %v352
        %v1439 = vunpack.c.l.b16 %v353
        %v1440 = vunpack.c.h.b16 %v353
        %v1441 = vunpack.c.l.b16 %v354
        %v1442 = vunpack.c.h.b16 %v354
        %v1443 = vunpack.c.l.b16 %v355
        %v1444 = vunpack.c.h.b16 %v355
        %v1445 = vunpack.c.l.b16 %v356
        %v1446 = vunpack.c.h.b16 %v356
        %v1447 = vunpack.c.l.b16 %v357
        %v1448 = vunpack.c.h.b16 %v357
        %v1449 = vunpack.c.l.b16 %v358
        %v1450 = vunpack.c.h.b16 %v358
        %v1451 = vunpack.c.l.b16 %v359
        %v1452 = vunpack.c.h.b16 %v359
        %v1453 = vunpack.c.l.b16 %v360
        %v1454 = vunpack.c.h.b16 %v360
        %v1455 = vunpack.c.l.b16 %v361
        %v1456 = vunpack.c.h.b16 %v361
        %v1457 = vunpack.c.l.b16 %v362
        %v1458 = vunpack.c.h.b16 %v362
        %v1459 = vunpack.c.l.b16 %v363
        %v1460 = vunpack.c.h.b16 %v363
        %v1461 = vunpack.c.l.b16 %v364
        %v1462 = vunpack.c.h.b16 %v364
        %v1463 = vunpack.c.l.b16 %v365
        %v1464 = vunpack.c.h.b16 %v365
        %v1465 = vunpack.c.l.b16 %v366
        %v1466 = vunpack.c.h.b16 %v366
        %v1467 = vunpack.c.l.b16 %v367
        %v1468 = vunpack.c.h.b16 %v367
        %v1469 = vunpack.c.l.b16 %v368
        %v1470 = vunpack.c.h.b16 %v368
        %v1471 = vunpack.c.l.b16 %v369
        %v1472 = vunpack.c.h.b16 %v369
        %v1473 = vunpack.c.l.b16 %v370
        %v1474 = vunpack.c.h.b16 %v370
        %v1475 = vunpack.c.l.b16 %v371
        %v1476 = vunpack.c.h.b16 %v371
        %v1477 = vunpack.c.l.b16 %v372
        %v1478 = vunpack.c.h.b16 %v372
        %v1479 = vunpack.c.l.b16 %v373
        %v1480 = vunpack.c.h.b16 %v373
        %v1481 = vunpack.c.l.b16 %v374
        %v1482 = vunpack.c.h.b16 %v374
        %v1483 = vunpack.c.l.b16 %v375
        %v1484 = vunpack.c.h.b16 %v375
        %v1485 = vunpack.c.l.b16 %v376
        %v1486 = vunpack.c.h.b16 %v376
        %v1487 = vunpack.c.l.b16 %v377
        %v1488 = vunpack.c.h.b16 %v377
        %v1489 = vunpack.c.l.b16 %v378
        %v1490 = vunpack.c.h.b16 %v378
        %v1491 = vunpack.c.l.b16 %v379
        %v1492 = vunpack.c.h.b16 %v379
        %v1493 = vunpack.c.l.b16 %v380
        %v1494 = vunpack.c.h.b16 %v380
        %v1495 = vunpack.c.l.b16 %v381
        %v1496 = vunpack.c.h.b16 %v381
        %v1497 = vunpack.c.l.b16 %v382
        %v1498 = vunpack.c.h.b16 %v382
        %v1499 = vunpack.c.l.b16 %v383
        %v1500 = vunpack.c.h.b16 %v383
        %v1501 = vunpack.c.l.b16 %v384
        %v1502 = vunpack.c.h.b16 %v384
        %v1503 = vunpack.c.l.b16 %v385
        %v1504 = vunpack.c.h.b16 %v385
        %v1505 = vunpack.c.l.b16 %v386
        %v1506 = vunpack.c.h.b16 %v386
        %v1507 = vunpack.c.l.b16 %v387
        %v1508 = vunpack.c.h.b16 %v387
        %v1509 = vunpack.c.l.b16 %v388
        %v1510 = vunpack.c.h.b16 %v388
        %v1511 = vunpack.c.l.b16 %v389
        %v1512 = vunpack.c.h.b16 %v389
        %v1513 = vunpack.c.l.b16 %v390
        %v1514 = vunpack.c.h.b16 %v390
        %v1515 = vunpack.c.l.b16 %v391
        %v1516 = vunpack.c.h.b16 %v391
        %v1517 = vunpack.c.l.b16 %v392
        %v1518 = vunpack.c.h.b16 %v392
        %v1519 = vunpack.c.l.b16 %v393
        %v1520 = vunpack.c.h.b16 %v393
        %v1521 = vunpack.c.l.b16 %v394
        %v1522 = vunpack.c.h.b16 %v394
        %v1523 = vunpack.c.l.b16 %v395
        %v1524 = vunpack.c.h.b16 %v395
        %v1525 = vunpack.c.l.b16 %v396
        %v1526 = vunpack.c.h.b16 %v396
        %v1527 = vunpack.c.l.b16 %v397
        %v1528 = vunpack.c.h.b16 %v397
        %v1529 = vunpack.c.l.b16 %v398
        %v1530 = vunpack.c.h.b16 %v398
        %v1531 = vunpack.c.l.b16 %v399
        %v1532 = vunpack.c.h.b16 %v399
        %v1533 = vunpack.c.l.b16 %v400
        %v1534 = vunpack.c.h.b16 %v400
        %v1535 = vunpack.c.l.b16 %v401
        %v1536 = vunpack.c.h.b16 %v401
        %v1537 = vunpack.c.l.b16 %v402
        %v1538 = vunpack.c.h.b16 %v402
        %v1539 = vunpack.c.l.b16 %v403
        %v1540 = vunpack.c.h.b16 %v403
        %v1541 = vunpack.c.l.b16 %v404
        %v1542 = vunpack.c.h.b16 %v404
        %v1543 = vunpack.c.l.b16 %v405
        %v1544 = vunpack.c.h.b16 %v405
        %v1545 = vunpack.c.l.b16 %v406
        %v1546 = vunpack.c.h.b16 %v406
        %v1547 = vunpack.c.l.b16 %v407
        %v1548 = vunpack.c.h.b16 %v407
        %v1549 = vunpack.c.l.b16 %v408
        %v1550 = vunpack.c.h.b16 %v408
        %v1551 = vunpack.c.l.b16 %v409
        %v1552 = vunpack.c.h.b16 %v409
        %v1553 = vunpack.c.l.b16 %v410
        %v1554 = vunpack.c.h.b16 %v410
        %v1555 = vunpack.c.l.b16 %v411
        %v1556 = vunpack.c.h.b16 %v411
        %v1557 = vunpack.c.l.b16 %v412
        %v1558 = vunpack.c.h.b16 %v412
        %v1559 = vunpack.c.l.b16 %v413
        %v1560 = vunpack.c.h.b16 %v413
        %v1561 = vunpack.c.l.b16 %v414
        %v1562 = vunpack.c.h.b16 %v414
        %v1563 = vunpack.c.l.b16 %v415
        %v1564 = vunpack.c.h.b16 %v415
        %v1565 = vunpack.c.l.b16 %v416
        %v1566 = vunpack.c.h.b16 %v416
        %v1567 = vunpack.c.l.b16 %v417
        %v1568 = vunpack.c.h.b16 %v417
        %v1569 = vunpack.c.l.b16 %v418
        %v1570 = vunpack.c.h.b16 %v418
        %v1571 = vunpack.c.l.b16 %v419
        %v1572 = vunpack.c.h.b16 %v419
        %v1573 = vunpack.c.l.b16 %v420
        %v1574 = vunpack.c.h.b16 %v420
        %v1575 = vunpack.c.l.b16 %v421
        %v1576 = vunpack.c.h.b16 %v421
        %v1577 = vunpack.c.l.b16 %v422
        %v1578 = vunpack.c.h.b16 %v422
        %v1579 = vunpack.c.l.b16 %v423
        %v1580 = vunpack.c.h.b16 %v423
        %v1581 = vunpack.c.l.b16 %v424
        %v1582 = vunpack.c.h.b16 %v424
        %v1583 = vunpack.c.l.b16 %v425
        %v1584 = vunpack.c.h.b16 %v425
        %v1585 = vunpack.c.l.b16 %v426
        %v1586 = vunpack.c.h.b16 %v426
        %v1587 = vunpack.c.l.b16 %v427
        %v1588 = vunpack.c.h.b16 %v427
        %v1589 = vunpack.c.l.b16 %v428
        %v1590 = vunpack.c.h.b16 %v428
        %v1591 = vunpack.c.l.b16 %v429
        %v1592 = vunpack.c.h.b16 %v429
        %v1593 = vunpack.c.l.b16 %v430
        %v1594 = vunpack.c.h.b16 %v430
        %v1595 = vunpack.c.l.b16 %v431
        %v1596 = vunpack.c.h.b16 %v431
        %v1597 = vunpack.c.l.b16 %v432
        %v1598 = vunpack.c.h.b16 %v432
        %v1599 = vunpack.c.l.b16 %v433
        %v1600 = vunpack.c.h.b16 %v433
        %v1601 = vunpack.c.l.b16 %v434
        %v1602 = vunpack.c.h.b16 %v434
        %v1603 = vunpack.c.l.b16 %v435
        %v1604 = vunpack.c.h.b16 %v435
        %v1605 = vunpack.c.l.b16 %v436
        %v1606 = vunpack.c.h.b16 %v436
        %v1607 = vunpack.c.l.b16 %v437
        %v1608 = vunpack.c.h.b16 %v437
        %v1609 = vunpack.c.l.b16 %v438
        %v1610 = vunpack.c.h.b16 %v438
        %v1611 = vunpack.c.l.b16 %v439
        %v1612 = vunpack.c.h.b16 %v439
        %v1613 = vunpack.c.l.b16 %v440
        %v1614 = vunpack.c.h.b16 %v440
        %v1615 = vunpack.c.l.b16 %v441
        %v1616 = vunpack.c.h.b16 %v441
        %v1617 = vunpack.c.l.b16 %v442
        %v1618 = vunpack.c.h.b16 %v442
        %v1619 = vunpack.c.l.b16 %v443
        %v1620 = vunpack.c.h.b16 %v443
        %v1621 = vunpack.c.l.b16 %v444
        %v1622 = vunpack.c.h.b16 %v444
        %v1623 = vunpack.c.l.b16 %v445
        %v1624 = vunpack.c.h.b16 %v445
        %v1625 = vunpack.c.l.b16 %v446
        %v1626 = vunpack.c.h.b16 %v446
        %v1627 = vunpack.c.l.b16 %v447
        %v1628 = vunpack.c.h.b16 %v447
        %v1629 = vunpack.c.l.b16 %v448
        %v1630 = vunpack.c.h.b16 %v448
        %v1631 = vunpack.c.l.b16 %v449
        %v1632 = vunpack.c.h.b16 %v449
        %v1633 = vunpack.c.l.b16 %v450
        %v1634 = vunpack.c.h.b16 %v450
        %v1635 = vunpack.c.l.b16 %v451
        %v1636 = vunpack.c.h.b16 %v451
        %v1637 = vunpack.c.l.b16 %v452
        %v1638 = vunpack.c.h.b16 %v452
        %v1639 = vunpack.c.l.b16 %v453
        %v1640 = vunpack.c.h.b16 %v453
        %v1641 = vunpack.c.l.b16 %v454
        %v1642 = vunpack.c.h.b16 %v454
        %v1643 = vunpack.c.l.b16 %v455
        %v1644 = vunpack.c.h.b16 %v455
        %v1645 = vunpack.c.l.b16 %v456
        %v1646 = vunpack.c.h.b16 %v456
        %v1647 = vunpack.c.l.b16 %v457
        %v1648 = vunpack.c.h.b16 %v457
        %v1649 = vunpack.c.l.b16 %v458
        %v1650 = vunpack.c.h.b16 %v458
        %v1651 = vunpack.c.l.b16 %v459
        %v1652 = vunpack.c.h.b16 %v459
        %v1653 = vunpack.c.l.b16 %v460
        %v1654 = vunpack.c.h.b16 %v460
        %v1655 = vunpack.c.l.b16 %v461
        %v1656 = vunpack.c.h.b16 %v461
        %v1657 = vunpack.c.l.b16 %v462
        %v1658 = vunpack.c.h.b16 %v462
        %v1659 = vunpack.c.l.b16 %v463
        %v1660 = vunpack.c.h.b16 %v463
        %v1661 = vunpack.c.l.b16 %v464
        %v1662 = vunpack.c.h.b16 %v464
        %v1663 = vunpack.c.l.b16 %v465
        %v1664 = vunpack.c.h.b16 %v465
        %v1665 = vunpack.c.l.b16 %v466
        %v1666 = vunpack.c.h.b16 %v466
        %v1667 = vunpack.c.l.b16 %v467
        %v1668 = vunpack.c.h.b16 %v467
        %v1669 = vunpack.c.l.b16 %v468
        %v1670 = vunpack.c.h.b16 %v468
        %v1671 = vunpack.c.l.b16 %v469
        %v1672 = vunpack.c.h.b16 %v469
        %v1673 = vunpack.c.l.b16 %v470
        %v1674 = vunpack.c.h.b16 %v470
        %v1675 = vunpack.c.l.b16 %v471
        %v1676 = vunpack.c.h.b16 %v471
        %v1677 = vunpack.c.l.b16 %v472
        %v1678 = vunpack.c.h.b16 %v472
        %v1679 = vunpack.c.l.b16 %v473
        %v1680 = vunpack.c.h.b16 %v473
        %v1681 = vunpack.c.l.b16 %v474
        %v1682 = vunpack.c.h.b16 %v474
        %v1683 = vunpack.c.l.b16 %v475
        %v1684 = vunpack.c.h.b16 %v475
        %v1685 = vunpack.c.l.b16 %v476
        %v1686 = vunpack.c.h.b16 %v476
        %v1687 = vunpack.c.l.b16 %v477
        %v1688 = vunpack.c.h.b16 %v477
        %v1689 = vunpack.c.l.b16 %v478
        %v1690 = vunpack.c.h.b16 %v478
        %v1691 = vunpack.c.l.b16 %v479
        %v1692 = vunpack.c.h.b16 %v479
        %v1693 = vunpack.c.l.b16 %v480
        %v1694 = vunpack.c.h.b16 %v480
        %v1695 = vunpack.c.l.b16 %v481
        %v1696 = vunpack.c.h.b16 %v481
        %v1697 = vunpack.c.l.b16 %v482
        %v1698 = vunpack.c.h.b16 %v482
        %v1699 = vunpack.c.l.b16 %v483
        %v1700 = vunpack.c.h.b16 %v483
        %v1701 = vunpack.c.l.b16 %v484
        %v1702 = vunpack.c.h.b16 %v484
        %v1703 = vunpack.c.l.b16 %v485
        %v1704 = vunpack.c.h.b16 %v485
        %v1705 = vunpack.c.l.b16 %v486
        %v1706 = vunpack.c.h.b16 %v486
        %v1707 = vunpack.c.l.b16 %v487
        %v1708 = vunpack.c.h.b16 %v487
        %v1709 = vunpack.c.l.b16 %v488
        %v1710 = vunpack.c.h.b16 %v488
        %v1711 = vunpack.c.l.b16 %v489
        %v1712 = vunpack.c.h.b16 %v489
        %v1713 = vunpack.c.l.b16 %v490
        %v1714 = vunpack.c.h.b16 %v490
        %v1715 = vunpack.c.l.b16 %v491
        %v1716 = vunpack.c.h.b16 %v491
        %v1717 = vunpack.c.l.b16 %v492
        %v1718 = vunpack.c.h.b16 %v492
        %v1719 = vunpack.c.l.b16 %v493
        %v1720 = vunpack.c.h.b16 %v493
        %v1721 = vunpack.c.l.b16 %v494
        %v1722 = vunpack.c.h.b16 %v494
        %v1723 = vunpack.c.l.b16 %v495
        %v1724 = vunpack.c.h.b16 %v495
        %v1725 = vunpack.c.l.b16 %v496
        %v1726 = vunpack.c.h.b16 %v496
        %v1727 = vunpack.c.l.b16 %v497
        %v1728 = vunpack.c.h.b16 %v497
        %v1729 = vunpack.c.l.b16 %v498
        %v1730 = vunpack.c.h.b16 %v498
        %v1731 = vunpack.c.l.b16 %v499
        %v1732 = vunpack.c.h.b16 %v499
        %v1733 = vunpack.c.l.b16 %v500
        %v1734 = vunpack.c.h.b16 %v500
        %v1735 = vunpack.c.l.b16 %v501
        %v1736 = vunpack.c.h.b16 %v501
        %v1737 = vunpack.c.l.b16 %v502
        %v1738 = vunpack.c.h.b16 %v502
        %v1739 = vunpack.c.l.b16 %v503
        %v1740 = vunpack.c.h.b16 %v503
        %v1741 = vunpack.c.l.b16 %v504
        %v1742 = vunpack.c.h.b16 %v504
        %v1743 = vunpack.c.l.b16 %v505
        %v1744 = vunpack.c.h.b16 %v505
        %v1745 = vunpack.c.l.b16 %v506
        %v1746 = vunpack.c.h.b16 %v506
        %v1747 = vunpack.c.l.b16 %v507
        %v1748 = vunpack.c.h.b16 %v507
        %v1749 = vunpack.c.l.b16 %v508
        %v1750 = vunpack.c.h.b16 %v508
        %v1751 = vunpack.c.l.b16 %v509
        %v1752 = vunpack.c.h.b16 %v509
        %v1753 = vunpack.c.l.b16 %v510
        %v1754 = vunpack.c.h.b16 %v510
        %v1755 = vunpack.c.l.b16 %v511
        %v1756 = vunpack.c.h.b16 %v511
        %v1757 = vunpack.c.l.b16 %v512
        %v1758 = vunpack.c.h.b16 %v512
        %v1759 = vunpack.c.l.b16 %v513
        %v1760 = vunpack.c.h.b16 %v513
        %v1761 = vunpack.c.l.b16 %v514
        %v1762 = vunpack.c.h.b16 %v514
        %v1763 = vunpack.c.l.b16 %v515
        %v1764 = vunpack.c.h.b16 %v515
        %v1765 = vunpack.c.l.b16 %v516
        %v1766 = vunpack.c.h.b16 %v516
        %v1767 = vunpack.c.l.b16 %v517
        %v1768 = vunpack.c.h.b16 %v517
        %v1769 = vunpack.c.l.b16 %v518
        %v1770 = vunpack.c.h.b16 %v518
        %v1771 = vunpack.c.l.b16 %v519
        %v1772 = vunpack.c.h.b16 %v519
        %v1773 = vunpack.c.l.b16 %v520
        %v1774 = vunpack.c.h.b16 %v520
        %v1775 = vunpack.c.l.b16 %v521
        %v1776 = vunpack.c.h.b16 %v521
        %v1777 = vunpack.c.l.b16 %v522
        %v1778 = vunpack.c.h.b16 %v522
        %v1779 = vunpack.c.l.b16 %v523
        %v1780 = vunpack.c.h.b16 %v523
        %v1781 = vunpack.c.l.b16 %v524
        %v1782 = vunpack.c.h.b16 %v524
        %v1783 = vunpack.c.l.b16 %v525
        %v1784 = vunpack.c.h.b16 %v525
        %v1785 = vunpack.c.l.b16 %v526
        %v1786 = vunpack.c.h.b16 %v526
        %v1787 = vunpack.c.l.b16 %v527
        %v1788 = vunpack.c.h.b16 %v527
        %v1789 = vunpack.c.l.b16 %v528
        %v1790 = vunpack.c.h.b16 %v528
        %v1791 = vunpack.c.l.b16 %v529
        %v1792 = vunpack.c.h.b16 %v529
        %v1793 = vunpack.c.l.b16 %v530
        %v1794 = vunpack.c.h.b16 %v530
        %v1795 = vunpack.c.l.b16 %v531
        %v1796 = vunpack.c.h.b16 %v531
        %v1797 = vunpack.c.l.b16 %v532
        %v1798 = vunpack.c.h.b16 %v532
        %v1799 = vunpack.c.l.b16 %v533
        %v1800 = vunpack.c.h.b16 %v533
        %v1801 = vunpack.c.l.b16 %v534
        %v1802 = vunpack.c.h.b16 %v534
        %v1803 = vunpack.c.l.b16 %v535
        %v1804 = vunpack.c.h.b16 %v535
        %v1805 = vunpack.c.l.b16 %v536
        %v1806 = vunpack.c.h.b16 %v536
        %v1807 = vunpack.c.l.b16 %v537
        %v1808 = vunpack.c.h.b16 %v537
        %v1809 = vunpack.c.l.b16 %v538
        %v1810 = vunpack.c.h.b16 %v538
        %v1811 = vunpack.c.l.b16 %v539
        %v1812 = vunpack.c.h.b16 %v539
        %v1813 = vunpack.c.l.b16 %v540
        %v1814 = vunpack.c.h.b16 %v540
        %v1815 = vunpack.c.l.b16 %v541
        %v1816 = vunpack.c.h.b16 %v541
        %v1817 = vunpack.c.l.b16 %v542
        %v1818 = vunpack.c.h.b16 %v542
        %v1819 = vunpack.c.l.b16 %v543
        %v1820 = vunpack.c.h.b16 %v543
        %v1821 = vunpack.c.l.b16 %v544
        %v1822 = vunpack.c.h.b16 %v544
        %v1823 = vunpack.c.l.b16 %v545
        %v1824 = vunpack.c.h.b16 %v545
        %v1825 = vunpack.c.l.b16 %v546
        %v1826 = vunpack.c.h.b16 %v546
        %v1827 = vunpack.c.l.b16 %v547
        %v1828 = vunpack.c.h.b16 %v547
        %v1829 = vunpack.c.l.b16 %v548
        %v1830 = vunpack.c.h.b16 %v548
        %v1831 = vunpack.c.l.b16 %v549
        %v1832 = vunpack.c.h.b16 %v549
        %v1833 = vunpack.c.l.b16 %v550
        %v1834 = vunpack.c.h.b16 %v550
        %v1835 = vunpack.c.l.b16 %v551
        %v1836 = vunpack.c.h.b16 %v551
        %v1837 = vunpack.c.l.b16 %v552
        %v1838 = vunpack.c.h.b16 %v552
        %v1839 = vunpack.c.l.b16 %v553
        %v1840 = vunpack.c.h.b16 %v553
        %v1841 = vunpack.c.l.b16 %v554
        %v1842 = vunpack.c.h.b16 %v554
        %v1843 = vunpack.c.l.b16 %v555
        %v1844 = vunpack.c.h.b16 %v555
        %v1845 = vunpack.c.l.b16 %v556
        %v1846 = vunpack.c.h.b16 %v556
        %v1847 = vunpack.c.l.b16 %v557
        %v1848 = vunpack.c.h.b16 %v557
        %v1849 = vunpack.c.l.b16 %v558
        %v1850 = vunpack.c.h.b16 %v558
        %v1851 = vunpack.c.l.b16 %v559
        %v1852 = vunpack.c.h.b16 %v559
        %v1853 = vunpack.c.l.b16 %v560
        %v1854 = vunpack.c.h.b16 %v560
        %v1855 = vunpack.c.l.b16 %v561
        %v1856 = vunpack.c.h.b16 %v561
        %v1857 = vunpack.c.l.b16 %v562
        %v1858 = vunpack.c.h.b16 %v562
        %v1859 = vunpack.c.l.b16 %v563
        %v1860 = vunpack.c.h.b16 %v563
        %v1861 = vunpack.c.l.b16 %v564
        %v1862 = vunpack.c.h.b16 %v564
        %v1863 = vunpack.c.l.b16 %v565
        %v1864 = vunpack.c.h.b16 %v565
        %v1865 = vunpack.c.l.b16 %v566
        %v1866 = vunpack.c.h.b16 %v566
        %v1867 = vunpack.c.l.b16 %v567
        %v1868 = vunpack.c.h.b16 %v567
        %v1869 = vunpack.c.l.b16 %v568
        %v1870 = vunpack.c.h.b16 %v568
        %v1871 = vunpack.c.l.b16 %v569
        %v1872 = vunpack.c.h.b16 %v569
        %v1873 = vunpack.c.l.b16 %v570
        %v1874 = vunpack.c.h.b16 %v570
        %v1875 = vunpack.c.l.b16 %v571
        %v1876 = vunpack.c.h.b16 %v571
        %v1877 = vunpack.c.l.b16 %v572
        %v1878 = vunpack.c.h.b16 %v572
        %v1879 = vunpack.c.l.b16 %v573
        %v1880 = vunpack.c.h.b16 %v573
        %v1881 = vunpack.c.l.b16 %v574
        %v1882 = vunpack.c.h.b16 %v574
        %v1883 = vunpack.c.l.b16 %v575
        %v1884 = vunpack.c.h.b16 %v575
        %v1885 = vunpack.c.l.b16 %v576
        %v1886 = vunpack.c.h.b16 %v576
        %v1887 = vunpack.c.l.b16 %v577
        %v1888 = vunpack.c.h.b16 %v577
        %v1889 = vunpack.c.l.b16 %v578
        %v1890 = vunpack.c.h.b16 %v578
        %v1891 = vunpack.c.l.b16 %v579
        %v1892 = vunpack.c.h.b16 %v579
        %v1893 = vunpack.c.l.b16 %v580
        %v1894 = vunpack.c.h.b16 %v580
        %v1895 = vunpack.c.l.b16 %v581
        %v1896 = vunpack.c.h.b16 %v581
        %v1897 = vunpack.c.l.b16 %v582
        %v1898 = vunpack.c.h.b16 %v582
        %v1899 = vunpack.c.l.b16 %v583
        %v1900 = vunpack.c.h.b16 %v583
        %v1901 = vunpack.c.l.b16 %v584
        %v1902 = vunpack.c.h.b16 %v584
        %v1903 = vunpack.c.l.b16 %v585
        %v1904 = vunpack.c.h.b16 %v585
        %v1905 = vunpack.c.l.b16 %v586
        %v1906 = vunpack.c.h.b16 %v586
        %v1907 = vunpack.c.l.b16 %v587
        %v1908 = vunpack.c.h.b16 %v587
        %v1909 = vunpack.c.l.b16 %v588
        %v1910 = vunpack.c.h.b16 %v588
        %v1911 = vunpack.c.l.b16 %v589
        %v1912 = vunpack.c.h.b16 %v589
        %v1913 = vunpack.c.l.b16 %v590
        %v1914 = vunpack.c.h.b16 %v590
        %v1915 = vunpack.c.l.b16 %v591
        %v1916 = vunpack.c.h.b16 %v591
        %v1917 = vunpack.c.l.b16 %v592
        %v1918 = vunpack.c.h.b16 %v592
        %v1919 = vunpack.c.l.b16 %v593
        %v1920 = vunpack.c.h.b16 %v593
        %v1921 = vunpack.c.l.b16 %v594
        %v1922 = vunpack.c.h.b16 %v594
        %v1923 = vunpack.c.l.b16 %v595
        %v1924 = vunpack.c.h.b16 %v595
        %v1925 = vunpack.c.l.b16 %v596
        %v1926 = vunpack.c.h.b16 %v596
        %v1927 = vunpack.c.l.b16 %v597
        %v1928 = vunpack.c.h.b16 %v597
        %v1929 = vunpack.c.l.b16 %v598
        %v1930 = vunpack.c.h.b16 %v598
        %v1931 = vunpack.c.l.b16 %v599
        %v1932 = vunpack.c.h.b16 %v599
        %v1933 = vunpack.c.l.b16 %v600
        %v1934 = vunpack.c.h.b16 %v600
        %v1935 = vunpack.c.l.b16 %v601
        %v1936 = vunpack.c.h.b16 %v601
        %v1937 = vunpack.c.l.b16 %v602
        %v1938 = vunpack.c.h.b16 %v602
        %v1939 = vunpack.c.l.b16 %v603
        %v1940 = vunpack.c.h.b16 %v603
        %v1941 = vunpack.c.l.b16 %v604
        %v1942 = vunpack.c.h.b16 %v604
        %v1943 = vunpack.c.l.b16 %v605
        %v1944 = vunpack.c.h.b16 %v605
        %v1945 = vunpack.c.l.b16 %v606
        %v1946 = vunpack.c.h.b16 %v606
        %v1947 = vunpack.c.l.b16 %v607
        %v1948 = vunpack.c.h.b16 %v607
        %v1949 = vunpack.c.l.b16 %v608
        %v1950 = vunpack.c.h.b16 %v608
        %v1951 = vunpack.c.l.b16 %v609
        %v1952 = vunpack.c.h.b16 %v609
        %v1953 = vunpack.c.l.b16 %v610
        %v1954 = vunpack.c.h.b16 %v610
        %v1955 = vunpack.c.l.b16 %v611
        %v1956 = vunpack.c.h.b16 %v611
        %v1957 = vunpack.c.l.b16 %v612
        %v1958 = vunpack.c.h.b16 %v612
        %v1959 = vunpack.c.l.b16 %v613
        %v1960 = vunpack.c.h.b16 %v613
        %v1961 = vunpack.c.l.b16 %v614
        %v1962 = vunpack.c.h.b16 %v614
        %v1963 = vunpack.c.l.b16 %v615
        %v1964 = vunpack.c.h.b16 %v615
        %v1965 = vunpack.c.l.b16 %v616
        %v1966 = vunpack.c.h.b16 %v616
        %v1967 = vunpack.c.l.b16 %v617
        %v1968 = vunpack.c.h.b16 %v617
        %v1969 = vunpack.c.l.b16 %v618
        %v1970 = vunpack.c.h.b16 %v618
        %v1971 = vunpack.c.l.b16 %v619
        %v1972 = vunpack.c.h.b16 %v619
        %v1973 = vunpack.c.l.b16 %v620
        %v1974 = vunpack.c.h.b16 %v620
        %v1975 = vunpack.c.l.b16 %v621
        %v1976 = vunpack.c.h.b16 %v621
        %v1977 = vunpack.c.l.b16 %v622
        %v1978 = vunpack.c.h.b16 %v622
        %v1979 = vunpack.c.l.b16 %v623
        %v1980 = vunpack.c.h.b16 %v623
        %v1981 = vunpack.c.l.b16 %v624
        %v1982 = vunpack.c.h.b16 %v624
        %v1983 = vunpack.c.l.b16 %v625
        %v1984 = vunpack.c.h.b16 %v625
        %v1985 = vunpack.c.l.b16 %v626
        %v1986 = vunpack.c.h.b16 %v626
        %v1987 = vunpack.c.l.b16 %v627
        %v1988 = vunpack.c.h.b16 %v627
        %v1989 = vunpack.c.l.b16 %v628
        %v1990 = vunpack.c.h.b16 %v628
        %v1991 = vunpack.c.l.b16 %v629
        %v1992 = vunpack.c.h.b16 %v629
        %v1993 = vunpack.c.l.b16 %v630
        %v1994 = vunpack.c.h.b16 %v630
        %v1995 = vunpack.c.l.b16 %v631
        %v1996 = vunpack.c.h.b16 %v631
        %v1997 = vunpack.c.l.b16 %v632
        %v1998 = vunpack.c.h.b16 %v632
        %v1999 = vunpack.c.l.b16 %v633
        %v2000 = vunpack.c.h.b16 %v633
        %v2001 = vunpack.c.l.b16 %v634
        %v2002 = vunpack.c.h.b16 %v634
        %v2003 = vunpack.c.l.b16 %v635
        %v2004 = vunpack.c.h.b16 %v635
        %v2005 = vunpack.c.l.b16 %v636
        %v2006 = vunpack.c.h.b16 %v636
        %v2007 = vunpack.c.l.b16 %v637
        %v2008 = vunpack.c.h.b16 %v637
        %v2009 = vunpack.c.l.b16 %v638
        %v2010 = vunpack.c.h.b16 %v638
        %v2011 = vunpack.c.l.b16 %v639
        %v2012 = vunpack.c.h.b16 %v639
        %v2013 = vunpack.c.l.b16 %v640
        %v2014 = vunpack.c.h.b16 %v640
        %v2015 = vunpack.c.l.b16 %v641
        %v2016 = vunpack.c.h.b16 %v641
        %v2017 = vunpack.c.l.b16 %v642
        %v2018 = vunpack.c.h.b16 %v642
        %v2019 = vunpack.c.l.b16 %v643
        %v2020 = vunpack.c.h.b16 %v643
        %v2021 = vunpack.c.l.b16 %v644
        %v2022 = vunpack.c.h.b16 %v644
        %v2023 = vunpack.c.l.b16 %v645
        %v2024 = vunpack.c.h.b16 %v645
        %v2025 = vunpack.c.l.b16 %v646
        %v2026 = vunpack.c.h.b16 %v646
        %v2027 = vunpack.c.l.b16 %v647
        %v2028 = vunpack.c.h.b16 %v647
        %v2029 = vunpack.c.l.b16 %v648
        %v2030 = vunpack.c.h.b16 %v648
        %v2031 = vunpack.c.l.b16 %v649
        %v2032 = vunpack.c.h.b16 %v649
        %v2033 = vunpack.c.l.b16 %v650
        %v2034 = vunpack.c.h.b16 %v650
        %v2035 = vunpack.c.l.b16 %v651
        %v2036 = vunpack.c.h.b16 %v651
        %v2037 = vunpack.c.l.b16 %v652
        %v2038 = vunpack.c.h.b16 %v652
        %v2039 = vunpack.c.l.b16 %v653
        %v2040 = vunpack.c.h.b16 %v653
        %v2041 = vunpack.c.l.b16 %v654
        %v2042 = vunpack.c.h.b16 %v654
        %v2043 = vunpack.c.l.b16 %v655
        %v2044 = vunpack.c.h.b16 %v655
        %v2045 = vunpack.c.l.b16 %v656
        %v2046 = vunpack.c.h.b16 %v656
        %v2047 = vunpack.c.l.b16 %v657
        %v2048 = vunpack.c.h.b16 %v657
        %v2049 = vunpack.c.l.b16 %v658
        %v2050 = vunpack.c.h.b16 %v658
        %v2051 = vunpack.c.l.b16 %v659
        %v2052 = vunpack.c.h.b16 %v659
        %v2053 = vunpack.c.l.b16 %v660
        %v2054 = vunpack.c.h.b16 %v660
        %v2055 = vunpack.c.l.b16 %v661
        %v2056 = vunpack.c.h.b16 %v661
        %v2057 = vunpack.c.l.b16 %v662
        %v2058 = vunpack.c.h.b16 %v662
        %v2059 = vunpack.c.l.b16 %v663
        %v2060 = vunpack.c.h.b16 %v663
        %v2061 = vunpack.c.l.b16 %v664
        %v2062 = vunpack.c.h.b16 %v664
        %v2063 = vunpack.c.l.b16 %v665
        %v2064 = vunpack.c.h.b16 %v665
        %v2065 = vunpack.c.l.b16 %v666
        %v2066 = vunpack.c.h.b16 %v666
        %v2067 = vunpack.c.l.b16 %v667
        %v2068 = vunpack.c.h.b16 %v667
        %v2069 = vunpack.c.l.b16 %v668
        %v2070 = vunpack.c.h.b16 %v668
        %v2071 = vunpack.c.l.b16 %v669
        %v2072 = vunpack.c.h.b16 %v669
        %v2073 = vunpack.c.l.b16 %v670
        %v2074 = vunpack.c.h.b16 %v670
        %v2075 = vunpack.c.l.b16 %v671
        %v2076 = vunpack.c.h.b16 %v671
        %v2077 = vunpack.c.l.b16 %v672
        %v2078 = vunpack.c.h.b16 %v672
        %v2079 = vunpack.c.l.b16 %v673
        %v2080 = vunpack.c.h.b16 %v673
        %v2081 = vunpack.c.l.b16 %v674
        %v2082 = vunpack.c.h.b16 %v674
        %v2083 = vunpack.c.l.b16 %v675
        %v2084 = vunpack.c.h.b16 %v675
        %v2085 = vunpack.c.l.b16 %v676
        %v2086 = vunpack.c.h.b16 %v676
        %v2087 = vunpack.c.l.b16 %v677
        %v2088 = vunpack.c.h.b16 %v677
        %v2089 = vunpack.c.l.b16 %v678
        %v2090 = vunpack.c.h.b16 %v678
        %v2091 = vunpack.c.l.b16 %v679
        %v2092 = vunpack.c.h.b16 %v679
        %v2093 = vunpack.c.l.b16 %v680
        %v2094 = vunpack.c.h.b16 %v680
        %v2095 = vunpack.c.l.b16 %v681
        %v2096 = vunpack.c.h.b16 %v681
        %v2097 = vunpack.c.l.b16 %v682
        %v2098 = vunpack.c.h.b16 %v682
        %v2099 = vunpack.c.l.b16 %v683
        %v2100 = vunpack.c.h.b16 %v683
        %v2101 = vunpack.c.l.b16 %v684
        %v2102 = vunpack.c.h.b16 %v684
        %v2103 = vunpack.c.l.b16 %v685
        %v2104 = vunpack.c.h.b16 %v685
        %v2105 = vunpack.c.l.b16 %v686
        %v2106 = vunpack.c.h.b16 %v686
        %v2107 = vunpack.c.l.b16 %v687
        %v2108 = vunpack.c.h.b16 %v687
        %v2109 = vunpack.c.l.b16 %v688
        %v2110 = vunpack.c.h.b16 %v688
        %v2111 = vunpack.c.l.b16 %v689
        %v2112 = vunpack.c.h.b16 %v689
        %v2113 = vunpack.c.l.b16 %v690
        %v2114 = vunpack.c.h.b16 %v690
        %v2115 = vunpack.c.l.b16 %v691
        %v2116 = vunpack.c.h.b16 %v691
        %v2117 = vunpack.c.l.b16 %v692
        %v2118 = vunpack.c.h.b16 %v692
        %v2119 = vunpack.c.l.b16 %v693
        %v2120 = vunpack.c.h.b16 %v693
        %v2121 = vunpack.c.l.b16 %v694
        %v2122 = vunpack.c.h.b16 %v694
        %v2123 = vunpack.c.l.b16 %v695
        %v2124 = vunpack.c.h.b16 %v695
        %v2125 = vunpack.c.l.b16 %v696
        %v2126 = vunpack.c.h.b16 %v696
        %v2127 = vunpack.c.l.b16 %v697
        %v2128 = vunpack.c.h.b16 %v697
        %v2129 = vunpack.c.l.b16 %v698
        %v2130 = vunpack.c.h.b16 %v698
        %v2131 = vunpack.c.l.b16 %v699
        %v2132 = vunpack.c.h.b16 %v699
        %v2133 = vunpack.c.l.b16 %v700
        %v2134 = vunpack.c.h.b16 %v700
        %v2135 = vunpack.c.l.b16 %v701
        %v2136 = vunpack.c.h.b16 %v701
        %v2137 = vunpack.c.l.b16 %v702
        %v2138 = vunpack.c.h.b16 %v702
        %v2139 = vunpack.c.l.b16 %v703
        %v2140 = vunpack.c.h.b16 %v703
        %v2141 = vunpack.c.l.b16 %v704
        %v2142 = vunpack.c.h.b16 %v704
        %v2143 = vunpack.c.l.b16 %v705
        %v2144 = vunpack.c.h.b16 %v705
        %v2145 = vunpack.c.l.b16 %v706
        %v2146 = vunpack.c.h.b16 %v706
        %v2147 = vunpack.c.l.b16 %v707
        %v2148 = vunpack.c.h.b16 %v707
        %v2149 = vunpack.c.l.b16 %v708
        %v2150 = vunpack.c.h.b16 %v708
        %v2151 = vunpack.c.l.b16 %v709
        %v2152 = vunpack.c.h.b16 %v709
        %v2153 = vunpack.c.l.b16 %v710
        %v2154 = vunpack.c.h.b16 %v710
        %v2155 = vunpack.c.l.b16 %v711
        %v2156 = vunpack.c.h.b16 %v711
        %v2157 = vunpack.c.l.b16 %v712
        %v2158 = vunpack.c.h.b16 %v712
        %v2159 = vunpack.c.l.b16 %v713
        %v2160 = vunpack.c.h.b16 %v713
        %v2161 = vunpack.c.l.b16 %v714
        %v2162 = vunpack.c.h.b16 %v714
        %v2163 = vunpack.c.l.b16 %v715
        %v2164 = vunpack.c.h.b16 %v715
        %v2165 = vunpack.c.l.b16 %v716
        %v2166 = vunpack.c.h.b16 %v716
        %v2167 = vunpack.c.l.b16 %v717
        %v2168 = vunpack.c.h.b16 %v717
        %v2169 = vunpack.c.l.b16 %v718
        %v2170 = vunpack.c.h.b16 %v718
        %v2171 = vunpack.c.l.b16 %v719
        %v2172 = vunpack.c.h.b16 %v719
        %v2173 = vunpack.c.l.b16 %v720
        %v2174 = vunpack.c.h.b16 %v720
        %v2175 = vunpack.c.l.b16 %v721
        %v2176 = vunpack.c.h.b16 %v721
        %v2177 = vunpack.c.l.b16 %v722
        %v2178 = vunpack.c.h.b16 %v722
        %v2179 = vpack.c.b16 %v1287, %v1283
        %v2180 = vpack.c.b16 %v1288, %v1284
        %v2181 = vpack.c.b16 %v1289, %v1285
        %v2182 = vpack.c.b16 %v1290, %v1286
        %v2183 = vpack.c.b16 %v1295, %v1291
        %v2184 = vpack.c.b16 %v1296, %v1292
        %v2185 = vpack.c.b16 %v1297, %v1293
        %v2186 = vpack.c.b16 %v1298, %v1294
        %v2187 = vpack.c.b16 %v1303, %v1299
        %v2188 = vpack.c.b16 %v1304, %v1300
        %v2189 = vpack.c.b16 %v1305, %v1301
        %v2190 = vpack.c.b16 %v1306, %v1302
        %v2191 = vpack.c.b16 %v1311, %v1307
        %v2192 = vpack.c.b16 %v1312, %v1308
        %v2193 = vpack.c.b16 %v1313, %v1309
        %v2194 = vpack.c.b16 %v1314, %v1310
        %v2195 = vpack.c.b16 %v1319, %v1315
        %v2196 = vpack.c.b16 %v1320, %v1316
        %v2197 = vpack.c.b16 %v1321, %v1317
        %v2198 = vpack.c.b16 %v1322, %v1318
        %v2199 = vpack.c.b16 %v1327, %v1323
        %v2200 = vpack.c.b16 %v1328, %v1324
        %v2201 = vpack.c.b16 %v1329, %v1325
        %v2202 = vpack.c.b16 %v1330, %v1326
        %v2203 = vpack.c.b16 %v1335, %v1331
        %v2204 = vpack.c.b16 %v1336, %v1332
        %v2205 = vpack.c.b16 %v1337, %v1333
        %v2206 = vpack.c.b16 %v1338, %v1334
        %v2207 = vpack.c.b16 %v1343, %v1339
        %v2208 = vpack.c.b16 %v1344, %v1340
        %v2209 = vpack.c.b16 %v1345, %v1341
        %v2210 = vpack.c.b16 %v1346, %v1342
        %v2211 = vpack.c.b16 %v1351, %v1347
        %v2212 = vpack.c.b16 %v1352, %v1348
        %v2213 = vpack.c.b16 %v1353, %v1349
        %v2214 = vpack.c.b16 %v1354, %v1350
        %v2215 = vpack.c.b16 %v1359, %v1355
        %v2216 = vpack.c.b16 %v1360, %v1356
        %v2217 = vpack.c.b16 %v1361, %v1357
        %v2218 = vpack.c.b16 %v1362, %v1358
        %v2219 = vpack.c.b16 %v1367, %v1363
        %v2220 = vpack.c.b16 %v1368, %v1364
        %v2221 = vpack.c.b16 %v1369, %v1365
        %v2222 = vpack.c.b16 %v1370, %v1366
        %v2223 = vpack.c.b16 %v1375, %v1371
        %v2224 = vpack.c.b16 %v1376, %v1372
        %v2225 = vpack.c.b16 %v1377, %v1373
        %v2226 = vpack.c.b16 %v1378, %v1374
        %v2227 = vpack.c.b16 %v1383, %v1379
        %v2228 = vpack.c.b16 %v1384, %v1380
        %v2229 = vpack.c.b16 %v1385, %v1381
        %v2230 = vpack.c.b16 %v1386, %v1382
        %v2231 = vpack.c.b16 %v1391, %v1387
        %v2232 = vpack.c.b16 %v1392, %v1388
        %v2233 = vpack.c.b16 %v1393, %v1389
        %v2234 = vpack.c.b16 %v1394, %v1390
        %v2235 = vpack.c.b16 %v1399, %v1395
        %v2236 = vpack.c.b16 %v1400, %v1396
        %v2237 = vpack.c.b16 %v1401, %v1397
        %v2238 = vpack.c.b16 %v1402, %v1398
        %v2239 = vpack.c.b16 %v1407, %v1403
        %v2240 = vpack.c.b16 %v1408, %v1404
        %v2241 = vpack.c.b16 %v1409, %v1405
        %v2242 = vpack.c.b16 %v1410, %v1406
        %v2243 = vpack.c.b16 %v1415, %v1411
        %v2244 = vpack.c.b16 %v1416, %v1412
        %v2245 = vpack.c.b16 %v1417, %v1413
        %v2246 = vpack.c.b16 %v1418, %v1414
        %v2247 = vpack.c.b16 %v1423, %v1419
        %v2248 = vpack.c.b16 %v1424, %v1420
        %v2249 = vpack.c.b16 %v1425, %v1421
        %v2250 = vpack.c.b16 %v1426, %v1422
        %v2251 = vpack.c.b16 %v1431, %v1427
        %v2252 = vpack.c.b16 %v1432, %v1428
        %v2253 = vpack.c.b16 %v1433, %v1429
        %v2254 = vpack.c.b16 %v1434, %v1430
        %v2255 = vpack.c.b16 %v1439, %v1435
        %v2256 = vpack.c.b16 %v1440, %v1436
        %v2257 = vpack.c.b16 %v1441, %v1437
        %v2258 = vpack.c.b16 %v1442, %v1438
        %v2259 = vpack.c.b16 %v1447, %v1443
        %v2260 = vpack.c.b16 %v1448, %v1444
        %v2261 = vpack.c.b16 %v1449, %v1445
        %v2262 = vpack.c.b16 %v1450, %v1446
        %v2263 = vpack.c.b16 %v1455, %v1451
        %v2264 = vpack.c.b16 %v1456, %v1452
        %v2265 = vpack.c.b16 %v1457, %v1453
        %v2266 = vpack.c.b16 %v1458, %v1454
        %v2267 = vpack.c.b16 %v1463, %v1459
        %v2268 = vpack.c.b16 %v1464, %v1460
        %v2269 = vpack.c.b16 %v1465, %v1461
        %v2270 = vpack.c.b16 %v1466, %v1462
        %v2271 = vpack.c.b16 %v1471, %v1467
        %v2272 = vpack.c.b16 %v1472, %v1468
        %v2273 = vpack.c.b16 %v1473, %v1469
        %v2274 = vpack.c.b16 %v1474, %v1470
        %v2275 = vpack.c.b16 %v1479, %v1475
        %v2276 = vpack.c.b16 %v1480, %v1476
        %v2277 = vpack.c.b16 %v1481, %v1477
        %v2278 = vpack.c.b16 %v1482, %v1478
        %v2279 = vpack.c.b16 %v1487, %v1483
        %v2280 = vpack.c.b16 %v1488, %v1484
        %v2281 = vpack.c.b16 %v1489, %v1485
        %v2282 = vpack.c.b16 %v1490, %v1486
        %v2283 = vpack.c.b16 %v1495, %v1491
        %v2284 = vpack.c.b16 %v1496, %v1492
        %v2285 = vpack.c.b16 %v1497, %v1493
        %v2286 = vpack.c.b16 %v1498, %v1494
        %v2287 = vpack.c.b16 %v1503, %v1499
        %v2288 = vpack.c.b16 %v1504, %v1500
        %v2289 = vpack.c.b16 %v1505, %v1501
        %v2290 = vpack.c.b16 %v1506, %v1502
        %v2291 = vpack.c.b16 %v1511, %v1507
        %v2292 = vpack.c.b16 %v1512, %v1508
        %v2293 = vpack.c.b16 %v1513, %v1509
        %v2294 = vpack.c.b16 %v1514, %v1510
        %v2295 = vpack.c.b16 %v1519, %v1515
        %v2296 = vpack.c.b16 %v1520, %v1516
        %v2297 = vpack.c.b16 %v1521, %v1517
        %v2298 = vpack.c.b16 %v1522, %v1518
        %v2299 = vpack.c.b16 %v1527, %v1523
        %v2300 = vpack.c.b16 %v1528, %v1524
        %v2301 = vpack.c.b16 %v1529, %v1525
        %v2302 = vpack.c.b16 %v1530, %v1526
        %v2303 = vpack.c.b16 %v1535, %v1531
        %v2304 = vpack.c.b16 %v1536, %v1532
        %v2305 = vpack.c.b16 %v1537, %v1533
        %v2306 = vpack.c.b16 %v1538, %v1534
        %v2307 = vpack.c.b16 %v1543, %v1539
        %v2308 = vpack.c.b16 %v1544, %v1540
        %v2309 = vpack.c.b16 %v1545, %v1541
        %v2310 = vpack.c.b16 %v1546, %v1542
        %v2311 = vpack.c.b16 %v1551, %v1547
        %v2312 = vpack.c.b16 %v1552, %v1548
        %v2313 = vpack.c.b16 %v1553, %v1549
        %v2314 = vpack.c.b16 %v1554, %v1550
        %v2315 = vpack.c.b16 %v1559, %v1555
        %v2316 = vpack.c.b16 %v1560, %v1556
        %v2317 = vpack.c.b16 %v1561, %v1557
        %v2318 = vpack.c.b16 %v1562, %v1558
        %v2319 = vpack.c.b16 %v1567, %v1563
        %v2320 = vpack.c.b16 %v1568, %v1564
        %v2321 = vpack.c.b16 %v1569, %v1565
        %v2322 = vpack.c.b16 %v1570, %v1566
        %v2323 = vpack.c.b16 %v1575, %v1571
        %v2324 = vpack.c.b16 %v1576, %v1572
        %v2325 = vpack.c.b16 %v1577, %v1573
        %v2326 = vpack.c.b16 %v1578, %v1574
        %v2327 = vpack.c.b16 %v1583, %v1579
        %v2328 = vpack.c.b16 %v1584, %v1580
        %v2329 = vpack.c.b16 %v1585, %v1581
        %v2330 = vpack.c.b16 %v1586, %v1582
        %v2331 = vpack.c.b16 %v1591, %v1587
        %v2332 = vpack.c.b16 %v1592, %v1588
        %v2333 = vpack.c.b16 %v1593, %v1589
        %v2334 = vpack.c.b16 %v1594, %v1590
        %v2335 = vpack.c.b16 %v1599, %v1595
        %v2336 = vpack.c.b16 %v1600, %v1596
        %v2337 = vpack.c.b16 %v1601, %v1597
        %v2338 = vpack.c.b16 %v1602, %v1598
        %v2339 = vpack.c.b16 %v1607, %v1603
        %v2340 = vpack.c.b16 %v1608, %v1604
        %v2341 = vpack.c.b16 %v1609, %v1605
        %v2342 = vpack.c.b16 %v1610, %v1606
        %v2343 = vpack.c.b16 %v1615, %v1611
        %v2344 = vpack.c.b16 %v1616, %v1612
        %v2345 = vpack.c.b16 %v1617, %v1613
        %v2346 = vpack.c.b16 %v1618, %v1614
        %v2347 = vpack.c.b16 %v1623, %v1619
        %v2348 = vpack.c.b16 %v1624, %v1620
        %v2349 = vpack.c.b16 %v1625, %v1621
        %v2350 = vpack.c.b16 %v1626, %v1622
        %v2351 = vpack.c.b16 %v1631, %v1627
        %v2352 = vpack.c.b16 %v1632, %v1628
        %v2353 = vpack.c.b16 %v1633, %v1629
        %v2354 = vpack.c.b16 %v1634, %v1630
        %v2355 = vpack.c.b16 %v1639, %v1635
        %v2356 = vpack.c.b16 %v1640, %v1636
        %v2357 = vpack.c.b16 %v1641, %v1637
        %v2358 = vpack.c.b16 %v1642, %v1638
        %v2359 = vpack.c.b16 %v1647, %v1643
        %v2360 = vpack.c.b16 %v1648, %v1644
        %v2361 = vpack.c.b16 %v1649, %v1645
        %v2362 = vpack.c.b16 %v1650, %v1646
        %v2363 = vpack.c.b16 %v1655, %v1651
        %v2364 = vpack.c.b16 %v1656, %v1652
        %v2365 = vpack.c.b16 %v1657, %v1653
        %v2366 = vpack.c.b16 %v1658, %v1654
        %v2367 = vpack.c.b16 %v1663, %v1659
        %v2368 = vpack.c.b16 %v1664, %v1660
        %v2369 = vpack.c.b16 %v1665, %v1661
        %v2370 = vpack.c.b16 %v1666, %v1662
        %v2371 = vpack.c.b16 %v1671, %v1667
        %v2372 = vpack.c.b16 %v1672, %v1668
        %v2373 = vpack.c.b16 %v1673, %v1669
        %v2374 = vpack.c.b16 %v1674, %v1670
        %v2375 = vpack.c.b16 %v1679, %v1675
        %v2376 = vpack.c.b16 %v1680, %v1676
        %v2377 = vpack.c.b16 %v1681, %v1677
        %v2378 = vpack.c.b16 %v1682, %v1678
        %v2379 = vpack.c.b16 %v1687, %v1683
        %v2380 = vpack.c.b16 %v1688, %v1684
        %v2381 = vpack.c.b16 %v1689, %v1685
        %v2382 = vpack.c.b16 %v1690, %v1686
        %v2383 = vpack.c.b16 %v1695, %v1691
        %v2384 = vpack.c.b16 %v1696, %v1692
        %v2385 = vpack.c.b16 %v1697, %v1693
        %v2386 = vpack.c.b16 %v1698, %v1694
        %v2387 = vpack.c.b16 %v1703, %v1699
        %v2388 = vpack.c.b16 %v1704, %v1700
        %v2389 = vpack.c.b16 %v1705, %v1701
        %v2390 = vpack.c.b16 %v1706, %v1702
        %v2391 = vpack.c.b16 %v1711, %v1707
        %v2392 = vpack.c.b16 %v1712, %v1708
        %v2393 = vpack.c.b16 %v1713, %v1709
        %v2394 = vpack.c.b16 %v1714, %v1710
        %v2395 = vpack.c.b16 %v1719, %v1715
        %v2396 = vpack.c.b16 %v1720, %v1716
        %v2397 = vpack.c.b16 %v1721, %v1717
        %v2398 = vpack.c.b16 %v1722, %v1718
        %v2399 = vpack.c.b16 %v1727, %v1723
        %v2400 = vpack.c.b16 %v1728, %v1724
        %v2401 = vpack.c.b16 %v1729, %v1725
        %v2402 = vpack.c.b16 %v1730, %v1726
        %v2403 = vpack.c.b16 %v1735, %v1731
        %v2404 = vpack.c.b16 %v1736, %v1732
        %v2405 = vpack.c.b16 %v1737, %v1733
        %v2406 = vpack.c.b16 %v1738, %v1734
        %v2407 = vpack.c.b16 %v1743, %v1739
        %v2408 = vpack.c.b16 %v1744, %v1740
        %v2409 = vpack.c.b16 %v1745, %v1741
        %v2410 = vpack.c.b16 %v1746, %v1742
        %v2411 = vpack.c.b16 %v1751, %v1747
        %v2412 = vpack.c.b16 %v1752, %v1748
        %v2413 = vpack.c.b16 %v1753, %v1749
        %v2414 = vpack.c.b16 %v1754, %v1750
        %v2415 = vpack.c.b16 %v1759, %v1755
        %v2416 = vpack.c.b16 %v1760, %v1756
        %v2417 = vpack.c.b16 %v1761, %v1757
        %v2418 = vpack.c.b16 %v1762, %v1758
        %v2419 = vpack.c.b16 %v1767, %v1763
        %v2420 = vpack.c.b16 %v1768, %v1764
        %v2421 = vpack.c.b16 %v1769, %v1765
        %v2422 = vpack.c.b16 %v1770, %v1766
        %v2423 = vpack.c.b16 %v1775, %v1771
        %v2424 = vpack.c.b16 %v1776, %v1772
        %v2425 = vpack.c.b16 %v1777, %v1773
        %v2426 = vpack.c.b16 %v1778, %v1774
        %v2427 = vpack.c.b16 %v1783, %v1779
        %v2428 = vpack.c.b16 %v1784, %v1780
        %v2429 = vpack.c.b16 %v1785, %v1781
        %v2430 = vpack.c.b16 %v1786, %v1782
        %v2431 = vpack.c.b16 %v1791, %v1787
        %v2432 = vpack.c.b16 %v1792, %v1788
        %v2433 = vpack.c.b16 %v1793, %v1789
        %v2434 = vpack.c.b16 %v1794, %v1790
        %v2435 = vpack.c.b16 %v1799, %v1795
        %v2436 = vpack.c.b16 %v1800, %v1796
        %v2437 = vpack.c.b16 %v1801, %v1797
        %v2438 = vpack.c.b16 %v1802, %v1798
        %v2439 = vpack.c.b16 %v1807, %v1803
        %v2440 = vpack.c.b16 %v1808, %v1804
        %v2441 = vpack.c.b16 %v1809, %v1805
        %v2442 = vpack.c.b16 %v1810, %v1806
        %v2443 = vpack.c.b16 %v1815, %v1811
        %v2444 = vpack.c.b16 %v1816, %v1812
        %v2445 = vpack.c.b16 %v1817, %v1813
        %v2446 = vpack.c.b16 %v1818, %v1814
        %v2447 = vpack.c.b16 %v1823, %v1819
        %v2448 = vpack.c.b16 %v1824, %v1820
        %v2449 = vpack.c.b16 %v1825, %v1821
        %v2450 = vpack.c.b16 %v1826, %v1822
        %v2451 = vpack.c.b16 %v1831, %v1827
        %v2452 = vpack.c.b16 %v1832, %v1828
        %v2453 = vpack.c.b16 %v1833, %v1829
        %v2454 = vpack.c.b16 %v1834, %v1830
        %v2455 = vpack.c.b16 %v1839, %v1835
        %v2456 = vpack.c.b16 %v1840, %v1836
        %v2457 = vpack.c.b16 %v1841, %v1837
        %v2458 = vpack.c.b16 %v1842, %v1838
        %v2459 = vpack.c.b16 %v1847, %v1843
        %v2460 = vpack.c.b16 %v1848, %v1844
        %v2461 = vpack.c.b16 %v1849, %v1845
        %v2462 = vpack.c.b16 %v1850, %v1846
        %v2463 = vpack.c.b16 %v1855, %v1851
        %v2464 = vpack.c.b16 %v1856, %v1852
        %v2465 = vpack.c.b16 %v1857, %v1853
        %v2466 = vpack.c.b16 %v1858, %v1854
        %v2467 = vpack.c.b16 %v1863, %v1859
        %v2468 = vpack.c.b16 %v1864, %v1860
        %v2469 = vpack.c.b16 %v1865, %v1861
        %v2470 = vpack.c.b16 %v1866, %v1862
        %v2471 = vpack.c.b16 %v1871, %v1867
        %v2472 = vpack.c.b16 %v1872, %v1868
        %v2473 = vpack.c.b16 %v1873, %v1869
        %v2474 = vpack.c.b16 %v1874, %v1870
        %v2475 = vpack.c.b16 %v1879, %v1875
        %v2476 = vpack.c.b16 %v1880, %v1876
        %v2477 = vpack.c.b16 %v1881, %v1877
        %v2478 = vpack.c.b16 %v1882, %v1878
        %v2479 = vpack.c.b16 %v1887, %v1883
        %v2480 = vpack.c.b16 %v1888, %v1884
        %v2481 = vpack.c.b16 %v1889, %v1885
        %v2482 = vpack.c.b16 %v1890, %v1886
        %v2483 = vpack.c.b16 %v1895, %v1891
        %v2484 = vpack.c.b16 %v1896, %v1892
        %v2485 = vpack.c.b16 %v1897, %v1893
        %v2486 = vpack.c.b16 %v1898, %v1894
        %v2487 = vpack.c.b16 %v1903, %v1899
        %v2488 = vpack.c.b16 %v1904, %v1900
        %v2489 = vpack.c.b16 %v1905, %v1901
        %v2490 = vpack.c.b16 %v1906, %v1902
        %v2491 = vpack.c.b16 %v1911, %v1907
        %v2492 = vpack.c.b16 %v1912, %v1908
        %v2493 = vpack.c.b16 %v1913, %v1909
        %v2494 = vpack.c.b16 %v1914, %v1910
        %v2495 = vpack.c.b16 %v1919, %v1915
        %v2496 = vpack.c.b16 %v1920, %v1916
        %v2497 = vpack.c.b16 %v1921, %v1917
        %v2498 = vpack.c.b16 %v1922, %v1918
        %v2499 = vpack.c.b16 %v1927, %v1923
        %v2500 = vpack.c.b16 %v1928, %v1924
        %v2501 = vpack.c.b16 %v1929, %v1925
        %v2502 = vpack.c.b16 %v1930, %v1926
        %v2503 = vpack.c.b16 %v1935, %v1931
        %v2504 = vpack.c.b16 %v1936, %v1932
        %v2505 = vpack.c.b16 %v1937, %v1933
        %v2506 = vpack.c.b16 %v1938, %v1934
        %v2507 = vpack.c.b16 %v1943, %v1939
        %v2508 = vpack.c.b16 %v1944, %v1940
        %v2509 = vpack.c.b16 %v1945, %v1941
        %v2510 = vpack.c.b16 %v1946, %v1942
        %v2511 = vpack.c.b16 %v1951, %v1947
        %v2512 = vpack.c.b16 %v1952, %v1948
        %v2513 = vpack.c.b16 %v1953, %v1949
        %v2514 = vpack.c.b16 %v1954, %v1950
        %v2515 = vpack.c.b16 %v1959, %v1955
        %v2516 = vpack.c.b16 %v1960, %v1956
        %v2517 = vpack.c.b16 %v1961, %v1957
        %v2518 = vpack.c.b16 %v1962, %v1958
        %v2519 = vpack.c.b16 %v1967, %v1963
        %v2520 = vpack.c.b16 %v1968, %v1964
        %v2521 = vpack.c.b16 %v1969, %v1965
        %v2522 = vpack.c.b16 %v1970, %v1966
        %v2523 = vpack.c.b16 %v1975, %v1971
        %v2524 = vpack.c.b16 %v1976, %v1972
        %v2525 = vpack.c.b16 %v1977, %v1973
        %v2526 = vpack.c.b16 %v1978, %v1974
        %v2527 = vpack.c.b16 %v1983, %v1979
        %v2528 = vpack.c.b16 %v1984, %v1980
        %v2529 = vpack.c.b16 %v1985, %v1981
        %v2530 = vpack.c.b16 %v1986, %v1982
        %v2531 = vpack.c.b16 %v1991, %v1987
        %v2532 = vpack.c.b16 %v1992, %v1988
        %v2533 = vpack.c.b16 %v1993, %v1989
        %v2534 = vpack.c.b16 %v1994, %v1990
        %v2535 = vpack.c.b16 %v1999, %v1995
        %v2536 = vpack.c.b16 %v2000, %v1996
        %v2537 = vpack.c.b16 %v2001, %v1997
        %v2538 = vpack.c.b16 %v2002, %v1998
        %v2539 = vpack.c.b16 %v2007, %v2003
        %v2540 = vpack.c.b16 %v2008, %v2004
        %v2541 = vpack.c.b16 %v2009, %v2005
        %v2542 = vpack.c.b16 %v2010, %v2006
        %v2543 = vpack.c.b16 %v2015, %v2011
        %v2544 = vpack.c.b16 %v2016, %v2012
        %v2545 = vpack.c.b16 %v2017, %v2013
        %v2546 = vpack.c.b16 %v2018, %v2014
        %v2547 = vpack.c.b16 %v2023, %v2019
        %v2548 = vpack.c.b16 %v2024, %v2020
        %v2549 = vpack.c.b16 %v2025, %v2021
        %v2550 = vpack.c.b16 %v2026, %v2022
        %v2551 = vpack.c.b16 %v2031, %v2027
        %v2552 = vpack.c.b16 %v2032, %v2028
        %v2553 = vpack.c.b16 %v2033, %v2029
        %v2554 = vpack.c.b16 %v2034, %v2030
        %v2555 = vpack.c.b16 %v2039, %v2035
        %v2556 = vpack.c.b16 %v2040, %v2036
        %v2557 = vpack.c.b16 %v2041, %v2037
        %v2558 = vpack.c.b16 %v2042, %v2038
        %v2559 = vpack.c.b16 %v2047, %v2043
        %v2560 = vpack.c.b16 %v2048, %v2044
        %v2561 = vpack.c.b16 %v2049, %v2045
        %v2562 = vpack.c.b16 %v2050, %v2046
        %v2563 = vpack.c.b16 %v2055, %v2051
        %v2564 = vpack.c.b16 %v2056, %v2052
        %v2565 = vpack.c.b16 %v2057, %v2053
        %v2566 = vpack.c.b16 %v2058, %v2054
        %v2567 = vpack.c.b16 %v2063, %v2059
        %v2568 = vpack.c.b16 %v2064, %v2060
        %v2569 = vpack.c.b16 %v2065, %v2061
        %v2570 = vpack.c.b16 %v2066, %v2062
        %v2571 = vpack.c.b16 %v2071, %v2067
        %v2572 = vpack.c.b16 %v2072, %v2068
        %v2573 = vpack.c.b16 %v2073, %v2069
        %v2574 = vpack.c.b16 %v2074, %v2070
        %v2575 = vpack.c.b16 %v2079, %v2075
        %v2576 = vpack.c.b16 %v2080, %v2076
        %v2577 = vpack.c.b16 %v2081, %v2077
        %v2578 = vpack.c.b16 %v2082, %v2078
        %v2579 = vpack.c.b16 %v2087, %v2083
        %v2580 = vpack.c.b16 %v2088, %v2084
        %v2581 = vpack.c.b16 %v2089, %v2085
        %v2582 = vpack.c.b16 %v2090, %v2086
        %v2583 = vpack.c.b16 %v2095, %v2091
        %v2584 = vpack.c.b16 %v2096, %v2092
        %v2585 = vpack.c.b16 %v2097, %v2093
        %v2586 = vpack.c.b16 %v2098, %v2094
        %v2587 = vpack.c.b16 %v2103, %v2099
        %v2588 = vpack.c.b16 %v2104, %v2100
        %v2589 = vpack.c.b16 %v2105, %v2101
        %v2590 = vpack.c.b16 %v2106, %v2102
        %v2591 = vpack.c.b16 %v2111, %v2107
        %v2592 = vpack.c.b16 %v2112, %v2108
        %v2593 = vpack.c.b16 %v2113, %v2109
        %v2594 = vpack.c.b16 %v2114, %v2110
        %v2595 = vpack.c.b16 %v2119, %v2115
        %v2596 = vpack.c.b16 %v2120, %v2116
        %v2597 = vpack.c.b16 %v2121, %v2117
        %v2598 = vpack.c.b16 %v2122, %v2118
        %v2599 = vpack.c.b16 %v2127, %v2123
        %v2600 = vpack.c.b16 %v2128, %v2124
        %v2601 = vpack.c.b16 %v2129, %v2125
        %v2602 = vpack.c.b16 %v2130, %v2126
        %v2603 = vpack.c.b16 %v2135, %v2131
        %v2604 = vpack.c.b16 %v2136, %v2132
        %v2605 = vpack.c.b16 %v2137, %v2133
        %v2606 = vpack.c.b16 %v2138, %v2134
        %v2607 = vpack.c.b16 %v2143, %v2139
        %v2608 = vpack.c.b16 %v2144, %v2140
        %v2609 = vpack.c.b16 %v2145, %v2141
        %v2610 = vpack.c.b16 %v2146, %v2142
        %v2611 = vpack.c.b16 %v2151, %v2147
        %v2612 = vpack.c.b16 %v2152, %v2148
        %v2613 = vpack.c.b16 %v2153, %v2149
        %v2614 = vpack.c.b16 %v2154, %v2150
        %v2615 = vpack.c.b16 %v2159, %v2155
        %v2616 = vpack.c.b16 %v2160, %v2156
        %v2617 = vpack.c.b16 %v2161, %v2157
        %v2618 = vpack.c.b16 %v2162, %v2158
        %v2619 = vpack.c.b16 %v2167, %v2163
        %v2620 = vpack.c.b16 %v2168, %v2164
        %v2621 = vpack.c.b16 %v2169, %v2165
        %v2622 = vpack.c.b16 %v2170, %v2166
        %v2623 = vpack.c.b16 %v2175, %v2171
        %v2624 = vpack.c.b16 %v2176, %v2172
        %v2625 = vpack.c.b16 %v2177, %v2173
        %v2626 = vpack.c.b16 %v2178, %v2174
        %3075 = vmatprep.subr.bf16.mxu0 %v2180
        %3076 = vmatpush1.bf16.msra.mxu0 %v2179
        %3077 = vmatprep.subr.bf16.mxu0 %v2184
        %3078 = vmatpush1.bf16.msra.mxu0 %v2183
        %3079 = vmatprep.subr.bf16.mxu0 %v2188
        %3080 = vmatpush1.bf16.msra.mxu0 %v2187
        %3081 = vmatprep.subr.bf16.mxu0 %v2192
        %3082 = vmatpush1.bf16.msra.mxu0 %v2191
        %3083 = vmatprep.subr.bf16.mxu0 %v2196
        %3084 = vmatpush1.bf16.msra.mxu0 %v2195
        %3085 = vmatprep.subr.bf16.mxu0 %v2200
        %3086 = vmatpush1.bf16.msra.mxu0 %v2199
        %3087 = vmatprep.subr.bf16.mxu0 %v2204
        %3088 = vmatpush1.bf16.msra.mxu0 %v2203
        %3089 = vmatprep.subr.bf16.mxu0 %v2208
        %3090 = vmatpush1.bf16.msra.mxu0 %v2207
        %3091 = vmatprep.subr.bf16.mxu0 %v2212
        %3092 = vmatpush1.bf16.msra.mxu0 %v2211
        %3093 = vmatprep.subr.bf16.mxu0 %v2216
        %3094 = vmatpush1.bf16.msra.mxu0 %v2215
        %3095 = vmatprep.subr.bf16.mxu0 %v2220
        %3096 = vmatpush1.bf16.msra.mxu0 %v2219
        %3097 = vmatprep.subr.bf16.mxu0 %v2224
        %3098 = vmatpush1.bf16.msra.mxu0 %v2223
        %3099 = vmatprep.subr.bf16.mxu0 %v2228
        %3100 = vmatpush1.bf16.msra.mxu0 %v2227
        %3101 = vmatprep.subr.bf16.mxu0 %v2232
        %3102 = vmatpush1.bf16.msra.mxu0 %v2231
        %3103 = vmatprep.subr.bf16.mxu0 %v2236
        %3104 = vmatpush1.bf16.msra.mxu0 %v2235
        %3105 = vmatprep.subr.bf16.mxu0 %v2240
        %3106 = vmatpush1.bf16.msra.mxu0 %v2239
        %3107 = vmatprep.mubr.bf16.mxu0 %v762
        %3108 = vmatmul.mubr.bf16.gmra.mrb[0].mxu0 %v748
        %v3109 = vpop.f32.mrb[0].mxu0
        %v3110 = vadd.f32 0.0, %v3109
        %v3111 = vpop.f32.mrb[0].mxu0
        %v3112 = vadd.f32 0.0, %v3111
        %v3113 = vpop.f32.mrb[0].mxu0
        %v3114 = vpop.f32.mrb[0].mxu0
        %3115 = vdwg.mxu0
        %3116 = vmatprep.subr.bf16.mxu0 %v2244
        %3117 = vmatpush1.bf16.msra.mxu0 %v2243
        %3118 = vmatprep.subr.bf16.mxu0 %v2248
        %3119 = vmatpush1.bf16.msra.mxu0 %v2247
        %3120 = vmatprep.subr.bf16.mxu0 %v2252
        %3121 = vmatpush1.bf16.msra.mxu0 %v2251
        %3122 = vmatprep.subr.bf16.mxu0 %v2256
        %3123 = vmatpush1.bf16.msra.mxu0 %v2255
        %3124 = vmatprep.subr.bf16.mxu0 %v2260
        %3125 = vmatpush1.bf16.msra.mxu0 %v2259
        %3126 = vmatprep.subr.bf16.mxu0 %v2264
        %3127 = vmatpush1.bf16.msra.mxu0 %v2263
        %3128 = vmatprep.subr.bf16.mxu0 %v2268
        %3129 = vmatpush1.bf16.msra.mxu0 %v2267
        %3130 = vmatprep.subr.bf16.mxu0 %v2272
        %3131 = vmatpush1.bf16.msra.mxu0 %v2271
        %3132 = vmatprep.subr.bf16.mxu0 %v2276
        %3133 = vmatpush1.bf16.msra.mxu0 %v2275
        %3134 = vmatprep.subr.bf16.mxu0 %v2280
        %3135 = vmatpush1.bf16.msra.mxu0 %v2279
        %3136 = vmatprep.subr.bf16.mxu0 %v2284
        %3137 = vmatpush1.bf16.msra.mxu0 %v2283
        %3138 = vmatprep.subr.bf16.mxu0 %v2288
        %3139 = vmatpush1.bf16.msra.mxu0 %v2287
        %3140 = vmatprep.subr.bf16.mxu0 %v2292
        %3141 = vmatpush1.bf16.msra.mxu0 %v2291
        %3142 = vmatprep.subr.bf16.mxu0 %v2296
        %3143 = vmatpush1.bf16.msra.mxu0 %v2295
        %3144 = vmatprep.subr.bf16.mxu0 %v2300
        %3145 = vmatpush1.bf16.msra.mxu0 %v2299
        %3146 = vmatprep.subr.bf16.mxu0 %v2304
        %3147 = vmatpush1.bf16.msra.mxu0 %v2303
        %3148 = vmatprep.mubr.bf16.mxu0 %v772
        %3149 = vmatmul.mubr.bf16.gmra.mrb[0].mxu0 %v770
        %v3150 = vpop.f32.mrb[0].mxu0
        %v3151 = vadd.f32 %v3110, %v3150
        %v3152 = vpop.f32.mrb[0].mxu0
        %v3153 = vadd.f32 %v3112, %v3152
        %v3154 = vpop.f32.mrb[0].mxu0
        %v3155 = vpop.f32.mrb[0].mxu0
        %3156 = vdwg.mxu0
        %3157 = vmatprep.subr.bf16.mxu0 %v2308
        %3158 = vmatpush1.bf16.msra.mxu0 %v2307
        %3159 = vmatprep.subr.bf16.mxu0 %v2312
        %3160 = vmatpush1.bf16.msra.mxu0 %v2311
        %3161 = vmatprep.subr.bf16.mxu0 %v2316
        %3162 = vmatpush1.bf16.msra.mxu0 %v2315
        %3163 = vmatprep.subr.bf16.mxu0 %v2320
        %3164 = vmatpush1.bf16.msra.mxu0 %v2319
        %3165 = vmatprep.subr.bf16.mxu0 %v2324
        %3166 = vmatpush1.bf16.msra.mxu0 %v2323
        %3167 = vmatprep.subr.bf16.mxu0 %v2328
        %3168 = vmatpush1.bf16.msra.mxu0 %v2327
        %3169 = vmatprep.subr.bf16.mxu0 %v2332
        %3170 = vmatpush1.bf16.msra.mxu0 %v2331
        %3171 = vmatprep.subr.bf16.mxu0 %v2336
        %3172 = vmatpush1.bf16.msra.mxu0 %v2335
        %3173 = vmatprep.subr.bf16.mxu0 %v2340
        %3174 = vmatpush1.bf16.msra.mxu0 %v2339
        %3175 = vmatprep.subr.bf16.mxu0 %v2344
        %3176 = vmatpush1.bf16.msra.mxu0 %v2343
        %3177 = vmatprep.subr.bf16.mxu0 %v2348
        %3178 = vmatpush1.bf16.msra.mxu0 %v2347
        %3179 = vmatprep.subr.bf16.mxu0 %v2352
        %3180 = vmatpush1.bf16.msra.mxu0 %v2351
        %3181 = vmatprep.subr.bf16.mxu0 %v2356
        %3182 = vmatpush1.bf16.msra.mxu0 %v2355
        %3183 = vmatprep.subr.bf16.mxu0 %v2360
        %3184 = vmatpush1.bf16.msra.mxu0 %v2359
        %3185 = vmatprep.subr.bf16.mxu0 %v2364
        %3186 = vmatpush1.bf16.msra.mxu0 %v2363
        %3187 = vmatprep.subr.bf16.mxu0 %v2368
        %3188 = vmatpush1.bf16.msra.mxu0 %v2367
        %3189 = vmatprep.mubr.bf16.mxu0 %v769
        %3190 = vmatmul.mubr.bf16.gmra.mrb[0].mxu0 %v755
        %v3191 = vpop.f32.mrb[0].mxu0
        %v3192 = vadd.f32 %v3151, %v3191
        %v3193 = vpop.f32.mrb[0].mxu0
        %v3194 = vadd.f32 %v3153, %v3193
        %v3195 = vpop.f32.mrb[0].mxu0
        %v3196 = vpop.f32.mrb[0].mxu0
        %3197 = vdwg.mxu0
        %3198 = vmatprep.subr.bf16.mxu0 %v2372
        %3199 = vmatpush1.bf16.msra.mxu0 %v2371
        %3200 = vmatprep.subr.bf16.mxu0 %v2376
        %3201 = vmatpush1.bf16.msra.mxu0 %v2375
        %3202 = vmatprep.subr.bf16.mxu0 %v2380
        %3203 = vmatpush1.bf16.msra.mxu0 %v2379
        %3204 = vmatprep.subr.bf16.mxu0 %v2384
        %3205 = vmatpush1.bf16.msra.mxu0 %v2383
        %3206 = vmatprep.subr.bf16.mxu0 %v2388
        %3207 = vmatpush1.bf16.msra.mxu0 %v2387
        %3208 = vmatprep.subr.bf16.mxu0 %v2392
        %3209 = vmatpush1.bf16.msra.mxu0 %v2391
        %3210 = vmatprep.subr.bf16.mxu0 %v2396
        %3211 = vmatpush1.bf16.msra.mxu0 %v2395
        %3212 = vmatprep.subr.bf16.mxu0 %v2400
        %3213 = vmatpush1.bf16.msra.mxu0 %v2399
        %3214 = vmatprep.subr.bf16.mxu0 %v2404
        %3215 = vmatpush1.bf16.msra.mxu0 %v2403
        %3216 = vmatprep.subr.bf16.mxu0 %v2408
        %3217 = vmatpush1.bf16.msra.mxu0 %v2407
        %3218 = vmatprep.subr.bf16.mxu0 %v2412
        %3219 = vmatpush1.bf16.msra.mxu0 %v2411
        %3220 = vmatprep.subr.bf16.mxu0 %v2416
        %3221 = vmatpush1.bf16.msra.mxu0 %v2415
        %3222 = vmatprep.subr.bf16.mxu0 %v2420
        %3223 = vmatpush1.bf16.msra.mxu0 %v2419
        %3224 = vmatprep.subr.bf16.mxu0 %v2424
        %3225 = vmatpush1.bf16.msra.mxu0 %v2423
        %3226 = vmatprep.subr.bf16.mxu0 %v2428
        %3227 = vmatpush1.bf16.msra.mxu0 %v2427
        %3228 = vmatprep.subr.bf16.mxu0 %v2432
        %3229 = vmatpush1.bf16.msra.mxu0 %v2431
        %3230 = vmatprep.mubr.bf16.mxu0 %v773
        %3231 = vmatmul.mubr.bf16.gmra.mrb[0].mxu0 %v771
        %v3232 = vpop.f32.mrb[0].mxu0
        %v3233 = vadd.f32 %v3192, %v3232
        %v3234 = vpop.f32.mrb[0].mxu0
        %v3235 = vadd.f32 %v3194, %v3234
        %v3236 = vpop.f32.mrb[0].mxu0
        %v3237 = vpop.f32.mrb[0].mxu0
        %3238 = vdwg.mxu0
        %3239 = vmatprep.subr.bf16.mxu0 %v2436
        %3240 = vmatpush1.bf16.msra.mxu0 %v2435
        %3241 = vmatprep.subr.bf16.mxu0 %v2440
        %3242 = vmatpush1.bf16.msra.mxu0 %v2439
        %3243 = vmatprep.subr.bf16.mxu0 %v2444
        %3244 = vmatpush1.bf16.msra.mxu0 %v2443
        %3245 = vmatprep.subr.bf16.mxu0 %v2448
        %3246 = vmatpush1.bf16.msra.mxu0 %v2447
        %3247 = vmatprep.subr.bf16.mxu0 %v2452
        %3248 = vmatpush1.bf16.msra.mxu0 %v2451
        %3249 = vmatprep.subr.bf16.mxu0 %v2456
        %3250 = vmatpush1.bf16.msra.mxu0 %v2455
        %3251 = vmatprep.subr.bf16.mxu0 %v2460
        %3252 = vmatpush1.bf16.msra.mxu0 %v2459
        %3253 = vmatprep.subr.bf16.mxu0 %v2464
        %3254 = vmatpush1.bf16.msra.mxu0 %v2463
        %3255 = vmatprep.subr.bf16.mxu0 %v2468
        %3256 = vmatpush1.bf16.msra.mxu0 %v2467
        %3257 = vmatprep.subr.bf16.mxu0 %v2472
        %3258 = vmatpush1.bf16.msra.mxu0 %v2471
        %3259 = vmatprep.subr.bf16.mxu0 %v2476
        %3260 = vmatpush1.bf16.msra.mxu0 %v2475
        %3261 = vmatprep.subr.bf16.mxu0 %v2480
        %3262 = vmatpush1.bf16.msra.mxu0 %v2479
        %3263 = vmatprep.subr.bf16.mxu0 %v2484
        %3264 = vmatpush1.bf16.msra.mxu0 %v2483
        %3265 = vmatprep.subr.bf16.mxu0 %v2488
        %3266 = vmatpush1.bf16.msra.mxu0 %v2487
        %3267 = vmatprep.subr.bf16.mxu0 %v2492
        %3268 = vmatpush1.bf16.msra.mxu0 %v2491
        %3269 = vmatprep.subr.bf16.mxu0 %v2496
        %3270 = vmatpush1.bf16.msra.mxu0 %v2495
        %3271 = vmatprep.mubr.bf16.mxu0 %v811
        %3272 = vmatmul.mubr.bf16.gmra.mrb[0].mxu0 %v797
        %v3273 = vpop.f32.mrb[0].mxu0
        %v3274 = vadd.f32 %v3233, %v3273
        %v3275 = vpop.f32.mrb[0].mxu0
        %v3276 = vadd.f32 %v3235, %v3275
        %v3277 = vpop.f32.mrb[0].mxu0
        %v3278 = vpop.f32.mrb[0].mxu0
        %3279 = vdwg.mxu0
        %3280 = vmatprep.subr.bf16.mxu0 %v2500
        %3281 = vmatpush1.bf16.msra.mxu0 %v2499
        %3282 = vmatprep.subr.bf16.mxu0 %v2504
        %3283 = vmatpush1.bf16.msra.mxu0 %v2503
        %3284 = vmatprep.subr.bf16.mxu0 %v2508
        %3285 = vmatpush1.bf16.msra.mxu0 %v2507
        %3286 = vmatprep.subr.bf16.mxu0 %v2512
        %3287 = vmatpush1.bf16.msra.mxu0 %v2511
        %3288 = vmatprep.subr.bf16.mxu0 %v2516
        %3289 = vmatpush1.bf16.msra.mxu0 %v2515
        %3290 = vmatprep.subr.bf16.mxu0 %v2520
        %3291 = vmatpush1.bf16.msra.mxu0 %v2519
        %3292 = vmatprep.subr.bf16.mxu0 %v2524
        %3293 = vmatpush1.bf16.msra.mxu0 %v2523
        %3294 = vmatprep.subr.bf16.mxu0 %v2528
        %3295 = vmatpush1.bf16.msra.mxu0 %v2527
        %3296 = vmatprep.subr.bf16.mxu0 %v2532
        %3297 = vmatpush1.bf16.msra.mxu0 %v2531
        %3298 = vmatprep.subr.bf16.mxu0 %v2536
        %3299 = vmatpush1.bf16.msra.mxu0 %v2535
        %3300 = vmatprep.subr.bf16.mxu0 %v2540
        %3301 = vmatpush1.bf16.msra.mxu0 %v2539
        %3302 = vmatprep.subr.bf16.mxu0 %v2544
        %3303 = vmatpush1.bf16.msra.mxu0 %v2543
        %3304 = vmatprep.subr.bf16.mxu0 %v2548
        %3305 = vmatpush1.bf16.msra.mxu0 %v2547
        %3306 = vmatprep.subr.bf16.mxu0 %v2552
        %3307 = vmatpush1.bf16.msra.mxu0 %v2551
        %3308 = vmatprep.subr.bf16.mxu0 %v2556
        %3309 = vmatpush1.bf16.msra.mxu0 %v2555
        %3310 = vmatprep.subr.bf16.mxu0 %v2560
        %3311 = vmatpush1.bf16.msra.mxu0 %v2559
        %3312 = vmatprep.mubr.bf16.mxu0 %v820
        %3313 = vmatmul.mubr.bf16.gmra.mrb[0].mxu0 %v819
        %v3314 = vpop.f32.mrb[0].mxu0
        %v3315 = vadd.f32 %v3274, %v3314
        %v3316 = vpop.f32.mrb[0].mxu0
        %v3317 = vadd.f32 %v3276, %v3316
        %v3318 = vpop.f32.mrb[0].mxu0
        %v3319 = vpop.f32.mrb[0].mxu0
        %3320 = vdwg.mxu0
        %3321 = vmatprep.subr.bf16.mxu0 %v2564
        %3322 = vmatpush1.bf16.msra.mxu0 %v2563
        %3323 = vmatprep.subr.bf16.mxu0 %v2568
        %3324 = vmatpush1.bf16.msra.mxu0 %v2567
        %3325 = vmatprep.subr.bf16.mxu0 %v2572
        %3326 = vmatpush1.bf16.msra.mxu0 %v2571
        %3327 = vmatprep.subr.bf16.mxu0 %v2576
        %3328 = vmatpush1.bf16.msra.mxu0 %v2575
        %3329 = vmatprep.subr.bf16.mxu0 %v2580
        %3330 = vmatpush1.bf16.msra.mxu0 %v2579
        %3331 = vmatprep.subr.bf16.mxu0 %v2584
        %3332 = vmatpush1.bf16.msra.mxu0 %v2583
        %3333 = vmatprep.subr.bf16.mxu0 %v2588
        %3334 = vmatpush1.bf16.msra.mxu0 %v2587
        %3335 = vmatprep.subr.bf16.mxu0 %v2592
        %3336 = vmatpush1.bf16.msra.mxu0 %v2591
        %3337 = vmatprep.subr.bf16.mxu0 %v2596
        %3338 = vmatpush1.bf16.msra.mxu0 %v2595
        %3339 = vmatprep.subr.bf16.mxu0 %v2600
        %3340 = vmatpush1.bf16.msra.mxu0 %v2599
        %3341 = vmatprep.subr.bf16.mxu0 %v2604
        %3342 = vmatpush1.bf16.msra.mxu0 %v2603
        %3343 = vmatprep.subr.bf16.mxu0 %v2608
        %3344 = vmatpush1.bf16.msra.mxu0 %v2607
        %3345 = vmatprep.subr.bf16.mxu0 %v2612
        %3346 = vmatpush1.bf16.msra.mxu0 %v2611
        %3347 = vmatprep.subr.bf16.mxu0 %v2616
        %3348 = vmatpush1.bf16.msra.mxu0 %v2615
        %3349 = vmatprep.subr.bf16.mxu0 %v2620
        %3350 = vmatpush1.bf16.msra.mxu0 %v2619
        %3351 = vmatprep.subr.bf16.mxu0 %v2624
        %3352 = vmatpush1.bf16.msra.mxu0 %v2623
        %3353 = vmatprep.mubr.bf16.mxu0 %v818
        %3354 = vmatmul.mubr.bf16.gmra.mrb[0].mxu0 %v804
        %v3355 = vpop.f32.mrb[0].mxu0
        %v3356 = vadd.f32 %v3315, %v3355
        %v3357 = vpop.f32.mrb[0].mxu0
        %v3358 = vadd.f32 %v3317, %v3357
        %v3359 = vpop.f32.mrb[0].mxu0
        %v3360 = vpop.f32.mrb[0].mxu0
        %3361 = vdwg.mxu0
        %3362 = vmatprep.subr.bf16.mxu0 %v2182
        %3363 = vmatpush1.bf16.msra.mxu0 %v2181
        %3364 = vmatprep.subr.bf16.mxu0 %v2186
        %3365 = vmatpush1.bf16.msra.mxu0 %v2185
        %3366 = vmatprep.subr.bf16.mxu0 %v2190
        %3367 = vmatpush1.bf16.msra.mxu0 %v2189
        %3368 = vmatprep.subr.bf16.mxu0 %v2194
        %3369 = vmatpush1.bf16.msra.mxu0 %v2193
        %3370 = vmatprep.subr.bf16.mxu0 %v2198
        %3371 = vmatpush1.bf16.msra.mxu0 %v2197
        %3372 = vmatprep.subr.bf16.mxu0 %v2202
        %3373 = vmatpush1.bf16.msra.mxu0 %v2201
        %3374 = vmatprep.subr.bf16.mxu0 %v2206
        %3375 = vmatpush1.bf16.msra.mxu0 %v2205
        %3376 = vmatprep.subr.bf16.mxu0 %v2210
        %3377 = vmatpush1.bf16.msra.mxu0 %v2209
        %3378 = vmatprep.subr.bf16.mxu0 %v2214
        %3379 = vmatpush1.bf16.msra.mxu0 %v2213
        %3380 = vmatprep.subr.bf16.mxu0 %v2218
        %3381 = vmatpush1.bf16.msra.mxu0 %v2217
        %3382 = vmatprep.subr.bf16.mxu0 %v2222
        %3383 = vmatpush1.bf16.msra.mxu0 %v2221
        %3384 = vmatprep.subr.bf16.mxu0 %v2226
        %3385 = vmatpush1.bf16.msra.mxu0 %v2225
        %3386 = vmatprep.subr.bf16.mxu0 %v2230
        %3387 = vmatpush1.bf16.msra.mxu0 %v2229
        %3388 = vmatprep.subr.bf16.mxu0 %v2234
        %3389 = vmatpush1.bf16.msra.mxu0 %v2233
        %3390 = vmatprep.subr.bf16.mxu0 %v2238
        %3391 = vmatpush1.bf16.msra.mxu0 %v2237
        %3392 = vmatprep.subr.bf16.mxu0 %v2242
        %3393 = vmatpush1.bf16.msra.mxu0 %v2241
        %3394 = vmatprep.mubr.bf16.mxu0 %v762
        %3395 = vmatmul.mubr.bf16.gmra.mrb[0].mxu0 %v748
        %v3396 = vpop.f32.mrb[0].mxu0
        %v3397 = vadd.f32 0.0, %v3396
        %v3398 = vpop.f32.mrb[0].mxu0
        %v3399 = vadd.f32 0.0, %v3398
        %v3400 = vpop.f32.mrb[0].mxu0
        %v3401 = vpop.f32.mrb[0].mxu0
        %3402 = vdwg.mxu0
        %3403 = vmatprep.subr.bf16.mxu0 %v2246
        %3404 = vmatpush1.bf16.msra.mxu0 %v2245
        %3405 = vmatprep.subr.bf16.mxu0 %v2250
        %3406 = vmatpush1.bf16.msra.mxu0 %v2249
        %3407 = vmatprep.subr.bf16.mxu0 %v2254
        %3408 = vmatpush1.bf16.msra.mxu0 %v2253
        %3409 = vmatprep.subr.bf16.mxu0 %v2258
        %3410 = vmatpush1.bf16.msra.mxu0 %v2257
        %3411 = vmatprep.subr.bf16.mxu0 %v2262
        %3412 = vmatpush1.bf16.msra.mxu0 %v2261
        %3413 = vmatprep.subr.bf16.mxu0 %v2266
        %3414 = vmatpush1.bf16.msra.mxu0 %v2265
        %3415 = vmatprep.subr.bf16.mxu0 %v2270
        %3416 = vmatpush1.bf16.msra.mxu0 %v2269
        %3417 = vmatprep.subr.bf16.mxu0 %v2274
        %3418 = vmatpush1.bf16.msra.mxu0 %v2273
        %3419 = vmatprep.subr.bf16.mxu0 %v2278
        %3420 = vmatpush1.bf16.msra.mxu0 %v2277
        %3421 = vmatprep.subr.bf16.mxu0 %v2282
        %3422 = vmatpush1.bf16.msra.mxu0 %v2281
        %3423 = vmatprep.subr.bf16.mxu0 %v2286
        %3424 = vmatpush1.bf16.msra.mxu0 %v2285
        %3425 = vmatprep.subr.bf16.mxu0 %v2290
        %3426 = vmatpush1.bf16.msra.mxu0 %v2289
        %3427 = vmatprep.subr.bf16.mxu0 %v2294
        %3428 = vmatpush1.bf16.msra.mxu0 %v2293
        %3429 = vmatprep.subr.bf16.mxu0 %v2298
        %3430 = vmatpush1.bf16.msra.mxu0 %v2297
        %3431 = vmatprep.subr.bf16.mxu0 %v2302
        %3432 = vmatpush1.bf16.msra.mxu0 %v2301
        %3433 = vmatprep.subr.bf16.mxu0 %v2306
        %3434 = vmatpush1.bf16.msra.mxu0 %v2305
        %3435 = vmatprep.mubr.bf16.mxu0 %v772
        %3436 = vmatmul.mubr.bf16.gmra.mrb[0].mxu0 %v770
        %v3437 = vpop.f32.mrb[0].mxu0
        %v3438 = vadd.f32 %v3397, %v3437
        %v3439 = vpop.f32.mrb[0].mxu0
        %v3440 = vadd.f32 %v3399, %v3439
        %v3441 = vpop.f32.mrb[0].mxu0
        %v3442 = vpop.f32.mrb[0].mxu0
        %3443 = vdwg.mxu0
        %3444 = vmatprep.subr.bf16.mxu0 %v2310
        %3445 = vmatpush1.bf16.msra.mxu0 %v2309
        %3446 = vmatprep.subr.bf16.mxu0 %v2314
        %3447 = vmatpush1.bf16.msra.mxu0 %v2313
        %3448 = vmatprep.subr.bf16.mxu0 %v2318
        %3449 = vmatpush1.bf16.msra.mxu0 %v2317
        %3450 = vmatprep.subr.bf16.mxu0 %v2322
        %3451 = vmatpush1.bf16.msra.mxu0 %v2321
        %3452 = vmatprep.subr.bf16.mxu0 %v2326
        %3453 = vmatpush1.bf16.msra.mxu0 %v2325
        %3454 = vmatprep.subr.bf16.mxu0 %v2330
        %3455 = vmatpush1.bf16.msra.mxu0 %v2329
        %3456 = vmatprep.subr.bf16.mxu0 %v2334
        %3457 = vmatpush1.bf16.msra.mxu0 %v2333
        %3458 = vmatprep.subr.bf16.mxu0 %v2338
        %3459 = vmatpush1.bf16.msra.mxu0 %v2337
        %3460 = vmatprep.subr.bf16.mxu0 %v2342
        %3461 = vmatpush1.bf16.msra.mxu0 %v2341
        %3462 = vmatprep.subr.bf16.mxu0 %v2346
        %3463 = vmatpush1.bf16.msra.mxu0 %v2345
        %3464 = vmatprep.subr.bf16.mxu0 %v2350
        %3465 = vmatpush1.bf16.msra.mxu0 %v2349
        %3466 = vmatprep.subr.bf16.mxu0 %v2354
        %3467 = vmatpush1.bf16.msra.mxu0 %v2353
        %3468 = vmatprep.subr.bf16.mxu0 %v2358
        %3469 = vmatpush1.bf16.msra.mxu0 %v2357
        %3470 = vmatprep.subr.bf16.mxu0 %v2362
        %3471 = vmatpush1.bf16.msra.mxu0 %v2361
        %3472 = vmatprep.subr.bf16.mxu0 %v2366
        %3473 = vmatpush1.bf16.msra.mxu0 %v2365
        %3474 = vmatprep.subr.bf16.mxu0 %v2370
        %3475 = vmatpush1.bf16.msra.mxu0 %v2369
        %3476 = vmatprep.mubr.bf16.mxu0 %v769
        %3477 = vmatmul.mubr.bf16.gmra.mrb[0].mxu0 %v755
        %v3478 = vpop.f32.mrb[0].mxu0
        %v3479 = vadd.f32 %v3438, %v3478
        %v3480 = vpop.f32.mrb[0].mxu0
        %v3481 = vadd.f32 %v3440, %v3480
        %v3482 = vpop.f32.mrb[0].mxu0
        %v3483 = vpop.f32.mrb[0].mxu0
        %3484 = vdwg.mxu0
        %3485 = vmatprep.subr.bf16.mxu0 %v2374
        %3486 = vmatpush1.bf16.msra.mxu0 %v2373
        %3487 = vmatprep.subr.bf16.mxu0 %v2378
        %3488 = vmatpush1.bf16.msra.mxu0 %v2377
        %3489 = vmatprep.subr.bf16.mxu0 %v2382
        %3490 = vmatpush1.bf16.msra.mxu0 %v2381
        %3491 = vmatprep.subr.bf16.mxu0 %v2386
        %3492 = vmatpush1.bf16.msra.mxu0 %v2385
        %3493 = vmatprep.subr.bf16.mxu0 %v2390
        %3494 = vmatpush1.bf16.msra.mxu0 %v2389
        %3495 = vmatprep.subr.bf16.mxu0 %v2394
        %3496 = vmatpush1.bf16.msra.mxu0 %v2393
        %3497 = vmatprep.subr.bf16.mxu0 %v2398
        %3498 = vmatpush1.bf16.msra.mxu0 %v2397
        %3499 = vmatprep.subr.bf16.mxu0 %v2402
        %3500 = vmatpush1.bf16.msra.mxu0 %v2401
        %3501 = vmatprep.subr.bf16.mxu0 %v2406
        %3502 = vmatpush1.bf16.msra.mxu0 %v2405
        %3503 = vmatprep.subr.bf16.mxu0 %v2410
        %3504 = vmatpush1.bf16.msra.mxu0 %v2409
        %3505 = vmatprep.subr.bf16.mxu0 %v2414
        %3506 = vmatpush1.bf16.msra.mxu0 %v2413
        %3507 = vmatprep.subr.bf16.mxu0 %v2418
        %3508 = vmatpush1.bf16.msra.mxu0 %v2417
        %3509 = vmatprep.subr.bf16.mxu0 %v2422
        %3510 = vmatpush1.bf16.msra.mxu0 %v2421
        %3511 = vmatprep.subr.bf16.mxu0 %v2426
        %3512 = vmatpush1.bf16.msra.mxu0 %v2425
        %3513 = vmatprep.subr.bf16.mxu0 %v2430
        %3514 = vmatpush1.bf16.msra.mxu0 %v2429
        %3515 = vmatprep.subr.bf16.mxu0 %v2434
        %3516 = vmatpush1.bf16.msra.mxu0 %v2433
        %3517 = vmatprep.mubr.bf16.mxu0 %v773
        %3518 = vmatmul.mubr.bf16.gmra.mrb[0].mxu0 %v771
        %v3519 = vpop.f32.mrb[0].mxu0
        %v3520 = vadd.f32 %v3479, %v3519
        %v3521 = vpop.f32.mrb[0].mxu0
        %v3522 = vadd.f32 %v3481, %v3521
        %v3523 = vpop.f32.mrb[0].mxu0
        %v3524 = vpop.f32.mrb[0].mxu0
        %3525 = vdwg.mxu0
        %3526 = vmatprep.subr.bf16.mxu0 %v2438
        %3527 = vmatpush1.bf16.msra.mxu0 %v2437
        %3528 = vmatprep.subr.bf16.mxu0 %v2442
        %3529 = vmatpush1.bf16.msra.mxu0 %v2441
        %3530 = vmatprep.subr.bf16.mxu0 %v2446
        %3531 = vmatpush1.bf16.msra.mxu0 %v2445
        %3532 = vmatprep.subr.bf16.mxu0 %v2450
        %3533 = vmatpush1.bf16.msra.mxu0 %v2449
        %3534 = vmatprep.subr.bf16.mxu0 %v2454
        %3535 = vmatpush1.bf16.msra.mxu0 %v2453
        %3536 = vmatprep.subr.bf16.mxu0 %v2458
        %3537 = vmatpush1.bf16.msra.mxu0 %v2457
        %3538 = vmatprep.subr.bf16.mxu0 %v2462
        %3539 = vmatpush1.bf16.msra.mxu0 %v2461
        %3540 = vmatprep.subr.bf16.mxu0 %v2466
        %3541 = vmatpush1.bf16.msra.mxu0 %v2465
        %3542 = vmatprep.subr.bf16.mxu0 %v2470
        %3543 = vmatpush1.bf16.msra.mxu0 %v2469
        %3544 = vmatprep.subr.bf16.mxu0 %v2474
        %3545 = vmatpush1.bf16.msra.mxu0 %v2473
        %3546 = vmatprep.subr.bf16.mxu0 %v2478
        %3547 = vmatpush1.bf16.msra.mxu0 %v2477
        %3548 = vmatprep.subr.bf16.mxu0 %v2482
        %3549 = vmatpush1.bf16.msra.mxu0 %v2481
        %3550 = vmatprep.subr.bf16.mxu0 %v2486
        %3551 = vmatpush1.bf16.msra.mxu0 %v2485
        %3552 = vmatprep.subr.bf16.mxu0 %v2490
        %3553 = vmatpush1.bf16.msra.mxu0 %v2489
        %3554 = vmatprep.subr.bf16.mxu0 %v2494
        %3555 = vmatpush1.bf16.msra.mxu0 %v2493
        %3556 = vmatprep.subr.bf16.mxu0 %v2498
        %3557 = vmatpush1.bf16.msra.mxu0 %v2497
        %3558 = vmatprep.mubr.bf16.mxu0 %v811
        %3559 = vmatmul.mubr.bf16.gmra.mrb[0].mxu0 %v797
        %v3560 = vpop.f32.mrb[0].mxu0
        %v3561 = vadd.f32 %v3520, %v3560
        %v3562 = vpop.f32.mrb[0].mxu0
        %v3563 = vadd.f32 %v3522, %v3562
        %v3564 = vpop.f32.mrb[0].mxu0
        %v3565 = vpop.f32.mrb[0].mxu0
        %3566 = vdwg.mxu0
        %3567 = vmatprep.subr.bf16.mxu0 %v2502
        %3568 = vmatpush1.bf16.msra.mxu0 %v2501
        %3569 = vmatprep.subr.bf16.mxu0 %v2506
        %3570 = vmatpush1.bf16.msra.mxu0 %v2505
        %3571 = vmatprep.subr.bf16.mxu0 %v2510
        %3572 = vmatpush1.bf16.msra.mxu0 %v2509
        %3573 = vmatprep.subr.bf16.mxu0 %v2514
        %3574 = vmatpush1.bf16.msra.mxu0 %v2513
        %3575 = vmatprep.subr.bf16.mxu0 %v2518
        %3576 = vmatpush1.bf16.msra.mxu0 %v2517
        %3577 = vmatprep.subr.bf16.mxu0 %v2522
        %3578 = vmatpush1.bf16.msra.mxu0 %v2521
        %3579 = vmatprep.subr.bf16.mxu0 %v2526
        %3580 = vmatpush1.bf16.msra.mxu0 %v2525
        %3581 = vmatprep.subr.bf16.mxu0 %v2530
        %3582 = vmatpush1.bf16.msra.mxu0 %v2529
        %3583 = vmatprep.subr.bf16.mxu0 %v2534
        %3584 = vmatpush1.bf16.msra.mxu0 %v2533
        %3585 = vmatprep.subr.bf16.mxu0 %v2538
        %3586 = vmatpush1.bf16.msra.mxu0 %v2537
        %3587 = vmatprep.subr.bf16.mxu0 %v2542
        %3588 = vmatpush1.bf16.msra.mxu0 %v2541
        %3589 = vmatprep.subr.bf16.mxu0 %v2546
        %3590 = vmatpush1.bf16.msra.mxu0 %v2545
        %3591 = vmatprep.subr.bf16.mxu0 %v2550
        %3592 = vmatpush1.bf16.msra.mxu0 %v2549
        %3593 = vmatprep.subr.bf16.mxu0 %v2554
        %3594 = vmatpush1.bf16.msra.mxu0 %v2553
        %3595 = vmatprep.subr.bf16.mxu0 %v2558
        %3596 = vmatpush1.bf16.msra.mxu0 %v2557
        %3597 = vmatprep.subr.bf16.mxu0 %v2562
        %3598 = vmatpush1.bf16.msra.mxu0 %v2561
        %3599 = vmatprep.mubr.bf16.mxu0 %v820
        %3600 = vmatmul.mubr.bf16.gmra.mrb[0].mxu0 %v819
        %v3601 = vpop.f32.mrb[0].mxu0
        %v3602 = vadd.f32 %v3561, %v3601
        %v3603 = vpop.f32.mrb[0].mxu0
        %v3604 = vadd.f32 %v3563, %v3603
        %v3605 = vpop.f32.mrb[0].mxu0
        %v3606 = vpop.f32.mrb[0].mxu0
        %3607 = vdwg.mxu0
        %3608 = vmatprep.subr.bf16.mxu0 %v2566
        %3609 = vmatpush1.bf16.msra.mxu0 %v2565
        %3610 = vmatprep.subr.bf16.mxu0 %v2570
        %3611 = vmatpush1.bf16.msra.mxu0 %v2569
        %3612 = vmatprep.subr.bf16.mxu0 %v2574
        %3613 = vmatpush1.bf16.msra.mxu0 %v2573
        %3614 = vmatprep.subr.bf16.mxu0 %v2578
        %3615 = vmatpush1.bf16.msra.mxu0 %v2577
        %3616 = vmatprep.subr.bf16.mxu0 %v2582
        %3617 = vmatpush1.bf16.msra.mxu0 %v2581
        %3618 = vmatprep.subr.bf16.mxu0 %v2586
        %3619 = vmatpush1.bf16.msra.mxu0 %v2585
        %3620 = vmatprep.subr.bf16.mxu0 %v2590
        %3621 = vmatpush1.bf16.msra.mxu0 %v2589
        %3622 = vmatprep.subr.bf16.mxu0 %v2594
        %3623 = vmatpush1.bf16.msra.mxu0 %v2593
        %3624 = vmatprep.subr.bf16.mxu0 %v2598
        %3625 = vmatpush1.bf16.msra.mxu0 %v2597
        %3626 = vmatprep.subr.bf16.mxu0 %v2602
        %3627 = vmatpush1.bf16.msra.mxu0 %v2601
        %3628 = vmatprep.subr.bf16.mxu0 %v2606
        %3629 = vmatpush1.bf16.msra.mxu0 %v2605
        %3630 = vmatprep.subr.bf16.mxu0 %v2610
        %3631 = vmatpush1.bf16.msra.mxu0 %v2609
        %3632 = vmatprep.subr.bf16.mxu0 %v2614
        %3633 = vmatpush1.bf16.msra.mxu0 %v2613
        %3634 = vmatprep.subr.bf16.mxu0 %v2618
        %3635 = vmatpush1.bf16.msra.mxu0 %v2617
        %3636 = vmatprep.subr.bf16.mxu0 %v2622
        %3637 = vmatpush1.bf16.msra.mxu0 %v2621
        %3638 = vmatprep.subr.bf16.mxu0 %v2626
        %3639 = vmatpush1.bf16.msra.mxu0 %v2625
        %3640 = vmatprep.mubr.bf16.mxu0 %v818
        %3641 = vmatmul.mubr.bf16.gmra.mrb[0].mxu0 %v804
        %v3642 = vpop.f32.mrb[0].mxu0
        %v3643 = vadd.f32 %v3602, %v3642
        %v3644 = vpop.f32.mrb[0].mxu0
        %v3645 = vadd.f32 %v3604, %v3644
        %v3646 = vpop.f32.mrb[0].mxu0
        %v3647 = vpop.f32.mrb[0].mxu0
        %3648 = vdwg.mxu0
        %v3653 = vcombine.low %v3356, %v3358
        %v3654 = vcombine.low %v3643, %v3645
        %v3656 = vunpack.c.l.s4 1983009808
        %v3657 = vunpack.c.0.s8 %v3656
        %v3658 = vlaneseq
        %v3659 = vshrl.u32 %v3658, 7
        %v3660 = vsub.s32 %v3657, %v3659
        %v3661 = vrot.slane %v3653, %v3660
        %v3663 = vunpack.c.l.s4 1983009808
        %v3664 = vunpack.c.0.s8 %v3663
        %v3665 = vlaneseq
        %v3666 = vshrl.u32 %v3665, 7
        %v3667 = vsub.s32 %v3664, %v3666
        %v3668 = vrot.slane %v3654, %v3667
        %v3669 = vcombine.low %v3661, %v3668
        %v3671 = vadd.f32 %v272, %v3669
        %3672 = vst [vmem:[#allocation2] sm:$0xff] %v3671
        %p3673 = scmp.eq.s32.totalorder %s22, 1
        // Predicated region
        $region45: #{dqn_forward.7} parent=39 // pred_check
          %p3674 = pneg %p3673
        $region46: #{dqn_forward.7} parent=39 // pred_check_branch
          %3676 = sbr.rel (%p3674) target = $region48
        $region47: #{dqn_forward.7} parent=39 // pred_region
          %v3677 = vld [vmem:[#allocation2] sm:$0xff]
          %v3678 = vld [vmem:[%s2] sm:$0xf]
          %v3680 = vlaneseq
          %v3681 = vshrl.u32 %v3680, 7
          %v3682 = vsub.s32 0, %v3681
          %v3683 = vrot.slane %v3678, %v3682
          %v3684 = vlaneseq
          %v3685 = vshrl.u32 %v3684, 7
          %v3686 = vsub.s32 1, %v3685
          %v3687 = vrot.slane %v3678, %v3686
          %v3688 = vlaneseq
          %v3689 = vshrl.u32 %v3688, 7
          %v3690 = vsub.s32 2, %v3689
          %v3691 = vrot.slane %v3678, %v3690
          %v3692 = vlaneseq
          %v3693 = vshrl.u32 %v3692, 7
          %v3694 = vsub.s32 3, %v3693
          %v3695 = vrot.slane %v3678, %v3694
          %v3696 = vcombine.low %v3683, %v3687
          %v3697 = vcombine.low %v3691, %v3695
          %v3699 = vunpack.c.l.s4 1983009808
          %v3700 = vunpack.c.0.s8 %v3699
          %v3701 = vlaneseq
          %v3702 = vshrl.u32 %v3701, 7
          %v3703 = vsub.s32 %v3700, %v3702
          %v3704 = vrot.slane %v3696, %v3703
          %v3706 = vunpack.c.l.s4 1983009808
          %v3707 = vunpack.c.0.s8 %v3706
          %v3708 = vlaneseq
          %v3709 = vshrl.u32 %v3708, 7
          %v3710 = vsub.s32 %v3707, %v3709
          %v3711 = vrot.slane %v3697, %v3710
          %v3712 = vcombine.low %v3704, %v3711
          %v3714 = vadd.f32 %v3677, %v3712
          %vm3715 = vcmp.ge.f32.partialorder %v3714, 0.0
          %v3716 = vmul.f32 %v3714, 0.01
          %v3717 = vsel %vm3715, %v3714, %v3716
          %v3719 = vcombine.high %v3717, %v3717
          %v3721 = vunpack.c.l.s4 1983009808
          %v3722 = vunpack.c.0.s8 %v3721
          %v3723 = vlaneseq
          %v3724 = vshrl.u32 %v3723, 7
          %v3725 = vsub.s32 %v3722, %v3724
          %v3726 = vrot.slane %v3717, %v3725
          %v3728 = vunpack.c.l.s4 1983009808
          %v3729 = vunpack.c.0.s8 %v3728
          %v3730 = vlaneseq
          %v3731 = vshrl.u32 %v3730, 7
          %v3732 = vsub.s32 %v3729, %v3731
          %v3733 = vrot.slane %v3719, %v3732
          %v3734 = vcombine.high %v3726, %v3726
          %v3735 = vcombine.high %v3733, %v3733
          %v3740 = vpack.c.bf16 %v3726, %v3726
          %v3741 = vpack.c.bf16 %v3734, %v3734
          %v3742 = vpack.c.bf16 %v3733, %v3733
          %v3743 = vpack.c.bf16 %v3735, %v3735
          %v3744 = vld [vmem:[%s3] sm:$0xf]
          %v3745 = vld [vmem:[%s3 + $0x4] sm:$0xf]
          %v3746 = vld [vmem:[%s3 + $0x8] sm:$0xf]
          %v3747 = vld [vmem:[%s3 + $0xc] sm:$0xf]
          %v3748 = vld [vmem:[%s3 + $0x10] sm:$0xf]
          %v3749 = vld [vmem:[%s3 + $0x14] sm:$0xf]
          %v3750 = vld [vmem:[%s3 + $0x18] sm:$0xf]
          %v3751 = vld [vmem:[%s3 + $0x1c] sm:$0xf]
          %v3752 = vld [vmem:[%s3 + $0x20] sm:$0xf]
          %v3753 = vld [vmem:[%s3 + $0x24] sm:$0xf]
          %v3754 = vld [vmem:[%s3 + $0x28] sm:$0xf]
          %v3755 = vld [vmem:[%s3 + $0x2c] sm:$0xf]
          %v3756 = vld [vmem:[%s3 + $0x30] sm:$0xf]
          %v3757 = vld [vmem:[%s3 + $0x34] sm:$0xf]
          %v3758 = vld [vmem:[%s3 + $0x38] sm:$0xf]
          %v3759 = vld [vmem:[%s3 + $0x3c] sm:$0xf]
          %v3760 = vld [vmem:[%s3 + $0x40] sm:$0xf]
          %v3761 = vld [vmem:[%s3 + $0x44] sm:$0xf]
          %v3762 = vld [vmem:[%s3 + $0x48] sm:$0xf]
          %v3763 = vld [vmem:[%s3 + $0x4c] sm:$0xf]
          %v3764 = vld [vmem:[%s3 + $0x50] sm:$0xf]
          %v3765 = vld [vmem:[%s3 + $0x54] sm:$0xf]
          %v3766 = vld [vmem:[%s3 + $0x58] sm:$0xf]
          %v3767 = vld [vmem:[%s3 + $0x5c] sm:$0xf]
          %v3768 = vld [vmem:[%s3 + $0x60] sm:$0xf]
          %v3769 = vld [vmem:[%s3 + $0x64] sm:$0xf]
          %v3770 = vld [vmem:[%s3 + $0x68] sm:$0xf]
          %v3771 = vld [vmem:[%s3 + $0x6c] sm:$0xf]
          %v3772 = vld [vmem:[%s3 + $0x70] sm:$0xf]
          %v3773 = vld [vmem:[%s3 + $0x74] sm:$0xf]
          %v3774 = vld [vmem:[%s3 + $0x78] sm:$0xf]
          %v3775 = vld [vmem:[%s3 + $0x7c] sm:$0xf]
          %v3776 = vld [vmem:[%s3 + $0x80] sm:$0xf]
          %v3777 = vld [vmem:[%s3 + $0x84] sm:$0xf]
          %v3778 = vld [vmem:[%s3 + $0x88] sm:$0xf]
          %v3779 = vld [vmem:[%s3 + $0x8c] sm:$0xf]
          %v3780 = vld [vmem:[%s3 + $0x90] sm:$0xf]
          %v3781 = vld [vmem:[%s3 + $0x94] sm:$0xf]
          %v3782 = vld [vmem:[%s3 + $0x98] sm:$0xf]
          %v3783 = vld [vmem:[%s3 + $0x9c] sm:$0xf]
          %v3784 = vld [vmem:[%s3 + $0xa0] sm:$0xf]
          %v3785 = vld [vmem:[%s3 + $0xa4] sm:$0xf]
          %v3786 = vld [vmem:[%s3 + $0xa8] sm:$0xf]
          %v3787 = vld [vmem:[%s3 + $0xac] sm:$0xf]
          %v3788 = vld [vmem:[%s3 + $0xb0] sm:$0xf]
          %v3789 = vld [vmem:[%s3 + $0xb4] sm:$0xf]
          %v3790 = vld [vmem:[%s3 + $0xb8] sm:$0xf]
          %v3791 = vld [vmem:[%s3 + $0xbc] sm:$0xf]
          %v3792 = vld [vmem:[%s3 + $0xc0] sm:$0xf]
          %v3793 = vld [vmem:[%s3 + $0xc4] sm:$0xf]
          %v3794 = vld [vmem:[%s3 + $0xc8] sm:$0xf]
          %v3795 = vld [vmem:[%s3 + $0xcc] sm:$0xf]
          %v3796 = vld [vmem:[%s3 + $0xd0] sm:$0xf]
          %v3797 = vld [vmem:[%s3 + $0xd4] sm:$0xf]
          %v3798 = vld [vmem:[%s3 + $0xd8] sm:$0xf]
          %v3799 = vld [vmem:[%s3 + $0xdc] sm:$0xf]
          %v3800 = vld [vmem:[%s3 + $0xe0] sm:$0xf]
          %v3801 = vld [vmem:[%s3 + $0xe4] sm:$0xf]
          %v3802 = vld [vmem:[%s3 + $0xe8] sm:$0xf]
          %v3803 = vld [vmem:[%s3 + $0xec] sm:$0xf]
          %v3804 = vld [vmem:[%s3 + $0xf0] sm:$0xf]
          %v3805 = vld [vmem:[%s3 + $0xf4] sm:$0xf]
          %v3806 = vld [vmem:[%s3 + $0xf8] sm:$0xf]
          %v3807 = vld [vmem:[%s3 + $0xfc] sm:$0xf]
          %v3808 = vld [vmem:[%s4] sm:$0x1]
          %v3810 = vlaneseq
          %v3811 = vshrl.u32 %v3810, 7
          %v3812 = vsub.s32 0, %v3811
          %v3813 = vrot.slane %v3808, %v3812
          %v3879 = vunpack.c.l.b16 %v3744
          %v3880 = vunpack.c.l.b16 %v3745
          %v3881 = vunpack.c.l.b16 %v3746
          %v3882 = vunpack.c.l.b16 %v3747
          %v3883 = vunpack.c.l.b16 %v3748
          %v3884 = vunpack.c.l.b16 %v3749
          %v3885 = vunpack.c.l.b16 %v3750
          %v3886 = vunpack.c.l.b16 %v3751
          %v3887 = vunpack.c.l.b16 %v3752
          %v3888 = vunpack.c.l.b16 %v3753
          %v3889 = vunpack.c.l.b16 %v3754
          %v3890 = vunpack.c.l.b16 %v3755
          %v3891 = vunpack.c.l.b16 %v3756
          %v3892 = vunpack.c.l.b16 %v3757
          %v3893 = vunpack.c.l.b16 %v3758
          %v3894 = vunpack.c.l.b16 %v3759
          %v3895 = vunpack.c.l.b16 %v3760
          %v3896 = vunpack.c.l.b16 %v3761
          %v3897 = vunpack.c.l.b16 %v3762
          %v3898 = vunpack.c.l.b16 %v3763
          %v3899 = vunpack.c.l.b16 %v3764
          %v3900 = vunpack.c.l.b16 %v3765
          %v3901 = vunpack.c.l.b16 %v3766
          %v3902 = vunpack.c.l.b16 %v3767
          %v3903 = vunpack.c.l.b16 %v3768
          %v3904 = vunpack.c.l.b16 %v3769
          %v3905 = vunpack.c.l.b16 %v3770
          %v3906 = vunpack.c.l.b16 %v3771
          %v3907 = vunpack.c.l.b16 %v3772
          %v3908 = vunpack.c.l.b16 %v3773
          %v3909 = vunpack.c.l.b16 %v3774
          %v3910 = vunpack.c.l.b16 %v3775
          %v3911 = vunpack.c.l.b16 %v3776
          %v3912 = vunpack.c.l.b16 %v3777
          %v3913 = vunpack.c.l.b16 %v3778
          %v3914 = vunpack.c.l.b16 %v3779
          %v3915 = vunpack.c.l.b16 %v3780
          %v3916 = vunpack.c.l.b16 %v3781
          %v3917 = vunpack.c.l.b16 %v3782
          %v3918 = vunpack.c.l.b16 %v3783
          %v3919 = vunpack.c.l.b16 %v3784
          %v3920 = vunpack.c.l.b16 %v3785
          %v3921 = vunpack.c.l.b16 %v3786
          %v3922 = vunpack.c.l.b16 %v3787
          %v3923 = vunpack.c.l.b16 %v3788
          %v3924 = vunpack.c.l.b16 %v3789
          %v3925 = vunpack.c.l.b16 %v3790
          %v3926 = vunpack.c.l.b16 %v3791
          %v3927 = vunpack.c.l.b16 %v3792
          %v3928 = vunpack.c.l.b16 %v3793
          %v3929 = vunpack.c.l.b16 %v3794
          %v3930 = vunpack.c.l.b16 %v3795
          %v3931 = vunpack.c.l.b16 %v3796
          %v3932 = vunpack.c.l.b16 %v3797
          %v3933 = vunpack.c.l.b16 %v3798
          %v3934 = vunpack.c.l.b16 %v3799
          %v3935 = vunpack.c.l.b16 %v3800
          %v3936 = vunpack.c.l.b16 %v3801
          %v3937 = vunpack.c.l.b16 %v3802
          %v3938 = vunpack.c.l.b16 %v3803
          %v3939 = vunpack.c.l.b16 %v3804
          %v3940 = vunpack.c.l.b16 %v3805
          %v3941 = vunpack.c.l.b16 %v3806
          %v3942 = vunpack.c.l.b16 %v3807
          %v3943 = vpack.c.b16 %v3880, %v3879
          %v3944 = vpack.c.b16 %v3882, %v3881
          %v3945 = vpack.c.b16 %v3884, %v3883
          %v3946 = vpack.c.b16 %v3886, %v3885
          %v3947 = vpack.c.b16 %v3888, %v3887
          %v3948 = vpack.c.b16 %v3890, %v3889
          %v3949 = vpack.c.b16 %v3892, %v3891
          %v3950 = vpack.c.b16 %v3894, %v3893
          %v3951 = vpack.c.b16 %v3896, %v3895
          %v3952 = vpack.c.b16 %v3898, %v3897
          %v3953 = vpack.c.b16 %v3900, %v3899
          %v3954 = vpack.c.b16 %v3902, %v3901
          %v3955 = vpack.c.b16 %v3904, %v3903
          %v3956 = vpack.c.b16 %v3906, %v3905
          %v3957 = vpack.c.b16 %v3908, %v3907
          %v3958 = vpack.c.b16 %v3910, %v3909
          %v3959 = vpack.c.b16 %v3912, %v3911
          %v3960 = vpack.c.b16 %v3914, %v3913
          %v3961 = vpack.c.b16 %v3916, %v3915
          %v3962 = vpack.c.b16 %v3918, %v3917
          %v3963 = vpack.c.b16 %v3920, %v3919
          %v3964 = vpack.c.b16 %v3922, %v3921
          %v3965 = vpack.c.b16 %v3924, %v3923
          %v3966 = vpack.c.b16 %v3926, %v3925
          %v3967 = vpack.c.b16 %v3928, %v3927
          %v3968 = vpack.c.b16 %v3930, %v3929
          %v3969 = vpack.c.b16 %v3932, %v3931
          %v3970 = vpack.c.b16 %v3934, %v3933
          %v3971 = vpack.c.b16 %v3936, %v3935
          %v3972 = vpack.c.b16 %v3938, %v3937
          %v3973 = vpack.c.b16 %v3940, %v3939
          %v3974 = vpack.c.b16 %v3942, %v3941
          %4007 = vmatprep.subr.bf16.mxu0 0
          %4008 = vmatpush1.bf16.msra.mxu0 %v3943
          %4009 = vmatprep.subr.bf16.mxu0 0
          %4010 = vmatpush1.bf16.msra.mxu0 %v3944
          %4011 = vmatprep.subr.bf16.mxu0 0
          %4012 = vmatpush1.bf16.msra.mxu0 %v3945
          %4013 = vmatprep.subr.bf16.mxu0 0
          %4014 = vmatpush1.bf16.msra.mxu0 %v3946
          %4015 = vmatprep.subr.bf16.mxu0 0
          %4016 = vmatpush1.bf16.msra.mxu0 %v3947
          %4017 = vmatprep.subr.bf16.mxu0 0
          %4018 = vmatpush1.bf16.msra.mxu0 %v3948
          %4019 = vmatprep.subr.bf16.mxu0 0
          %4020 = vmatpush1.bf16.msra.mxu0 %v3949
          %4021 = vmatprep.subr.bf16.mxu0 0
          %4022 = vmatpush1.bf16.msra.mxu0 %v3950
          %4023 = vmatprep.subr.bf16.mxu0 0
          %4024 = vmatpush1.bf16.msra.mxu0 %v3951
          %4025 = vmatprep.subr.bf16.mxu0 0
          %4026 = vmatpush1.bf16.msra.mxu0 %v3952
          %4027 = vmatprep.subr.bf16.mxu0 0
          %4028 = vmatpush1.bf16.msra.mxu0 %v3953
          %4029 = vmatprep.subr.bf16.mxu0 0
          %4030 = vmatpush1.bf16.msra.mxu0 %v3954
          %4031 = vmatprep.subr.bf16.mxu0 0
          %4032 = vmatpush1.bf16.msra.mxu0 %v3955
          %4033 = vmatprep.subr.bf16.mxu0 0
          %4034 = vmatpush1.bf16.msra.mxu0 %v3956
          %4035 = vmatprep.subr.bf16.mxu0 0
          %4036 = vmatpush1.bf16.msra.mxu0 %v3957
          %4037 = vmatprep.subr.bf16.mxu0 0
          %4038 = vmatpush1.bf16.msra.mxu0 %v3958
          %4039 = vmatprep.mubr.bf16.mxu0 %v3741
          %4040 = vmatmul.mubr.bf16.gmra.mrb[0].mxu0 %v3740
          %v4041 = vpop.f32.mrb[0].mxu0
          %v4042 = vadd.f32 %v3813, %v4041
          %v4043 = vpop.f32.mrb[0].mxu0
          %v4044 = vpop.f32.mrb[0].mxu0
          %v4045 = vpop.f32.mrb[0].mxu0
          %4046 = vdwg.mxu0
          %4047 = vmatprep.subr.bf16.mxu0 0
          %4048 = vmatpush1.bf16.msra.mxu0 %v3959
          %4049 = vmatprep.subr.bf16.mxu0 0
          %4050 = vmatpush1.bf16.msra.mxu0 %v3960
          %4051 = vmatprep.subr.bf16.mxu0 0
          %4052 = vmatpush1.bf16.msra.mxu0 %v3961
          %4053 = vmatprep.subr.bf16.mxu0 0
          %4054 = vmatpush1.bf16.msra.mxu0 %v3962
          %4055 = vmatprep.subr.bf16.mxu0 0
          %4056 = vmatpush1.bf16.msra.mxu0 %v3963
          %4057 = vmatprep.subr.bf16.mxu0 0
          %4058 = vmatpush1.bf16.msra.mxu0 %v3964
          %4059 = vmatprep.subr.bf16.mxu0 0
          %4060 = vmatpush1.bf16.msra.mxu0 %v3965
          %4061 = vmatprep.subr.bf16.mxu0 0
          %4062 = vmatpush1.bf16.msra.mxu0 %v3966
          %4063 = vmatprep.subr.bf16.mxu0 0
          %4064 = vmatpush1.bf16.msra.mxu0 %v3967
          %4065 = vmatprep.subr.bf16.mxu0 0
          %4066 = vmatpush1.bf16.msra.mxu0 %v3968
          %4067 = vmatprep.subr.bf16.mxu0 0
          %4068 = vmatpush1.bf16.msra.mxu0 %v3969
          %4069 = vmatprep.subr.bf16.mxu0 0
          %4070 = vmatpush1.bf16.msra.mxu0 %v3970
          %4071 = vmatprep.subr.bf16.mxu0 0
          %4072 = vmatpush1.bf16.msra.mxu0 %v3971
          %4073 = vmatprep.subr.bf16.mxu0 0
          %4074 = vmatpush1.bf16.msra.mxu0 %v3972
          %4075 = vmatprep.subr.bf16.mxu0 0
          %4076 = vmatpush1.bf16.msra.mxu0 %v3973
          %4077 = vmatprep.subr.bf16.mxu0 0
          %4078 = vmatpush1.bf16.msra.mxu0 %v3974
          %4079 = vmatprep.mubr.bf16.mxu0 %v3743
          %4080 = vmatmul.mubr.bf16.gmra.mrb[0].mxu0 %v3742
          %v4081 = vpop.f32.mrb[0].mxu0
          %v4082 = vadd.f32 %v4042, %v4081
          %v4083 = vpop.f32.mrb[0].mxu0
          %v4084 = vpop.f32.mrb[0].mxu0
          %v4085 = vpop.f32.mrb[0].mxu0
          %4086 = vdwg.mxu0
          %4087 = vst [vmem:[#allocation3] sm:$0x3] %v4082
        $region48: #{dqn_forward.7} parent=39 // pred_fallthru
          _
        // Predicated region
        $region49: #{dqn_forward.7} parent=39 // pred_check
          %p4088 = pneg %p164
        $region50: #{dqn_forward.7} parent=39 // pred_check_branch
          %4090 = sbr.rel (%p4088) target = $region52
        $region51: #{dqn_forward.7} parent=39 // pred_region
          %s4092 = ssub.s32 32, 32
          %4093 = vsyncadd [#allocation4], %s4092
          %s4094 = smul.addr %s21, 32
          %s4095 = scalar_lea.hbm %s5, %s4094
          %s4097 = sshll.u32 [#allocation3], 4
          %s4098 = int_to_ptr.vmem [resolvable:$true] %s4097
          %4100 = dma.vmem_to_hbm [thread:$0]  %s4098, 32, %s4095, [#allocation4]
        $region52: #{dqn_forward.7} parent=39 // pred_fallthru
          _
        // Predicated region
        $region53: #{dqn_forward.7} parent=39 // pred_check
          %p4101 = pneg %p164
        $region54: #{dqn_forward.7} parent=39 // pred_check_branch
          %4103 = sbr.rel (%p4101) target = $region56
        $region55: #{dqn_forward.7} parent=39 // pred_region
          %4104 = dma.done [#allocation4], 32
        $region56: #{dqn_forward.7} parent=39 // pred_fallthru
          _
      $region40: #{dqn_forward.7} parent=5 // pred_fallthru
        _
      %p4105 = scmp.le.s32.totalorder 2, %s12
      // Predicated region
      $region57: #{dqn_forward.7} parent=5 // pred_check
        %p4106 = pneg %p4105
      $region58: #{dqn_forward.7} parent=5 // pred_check_branch
        %4108 = sbr.rel (%p4106) target = $region60
      $region59: #{dqn_forward.7} parent=5 // pred_region
        %s4109 = ssub.s32 %s12, 2
      $region60: #{dqn_forward.7} parent=5 // pred_fallthru
        _
    $region6: #{dqn_forward.7} parent=1 // loop_footer
      %s16 = sadd.s32 1, %s12
    $region7: #{dqn_forward.7} parent=1 // loop_footer_branch
      %11 = sbr.rel target = $region3
    $region8: #{dqn_forward.7} parent=1 // loop_exit
      _
    %4110 = vsyncpa [#allocation4], 1
    %s4111 = scalar_lea.sflag [#allocation4], 1
    %4112 = vsyncpa %s4111, 1

</llo_original>
